<compile_context>
chip_gen: v7x
topology: tpu7x:2x2x1
jax: 0.10.0
libtpu: 0.0.40
codegen_flags: <defaults>
</compile_context>

<pallas_src>
import functools
import math

import jax
import jax.numpy as jnp
from jax import lax
from jax.experimental import pallas as pl
from jax.experimental.pallas import tpu as pltpu


def _round_up(x, m):
    return ((x + m - 1) // m) * m


def slstm_kernel(seq_len, x_ref, wih_ref, whh_ref, b_ref, y_ref,
                 h_ref, c_ref, gat_ref):
    """One (batch-group, time-chunk) grid step of the multi-layer LSTM + skip.

    x_ref  : [TT, BT, Dp] f32   input chunk (time-major, padded)
    wih_ref: [L, Dp, 4Dp] bf16  input->gates weights (gate order i|f|g|o per Dp block)
    whh_ref: [L, Dp, 4Dp] bf16  hidden->gates weights
    b_ref  : [L, 1, 4Dp]  f32   combined bias (b_ih + b_hh)
    y_ref  : [TT, BT, Dp] f32   output chunk (lstm + skip)
    h_ref  : [L, BT, Dp]  f32   persistent hidden state (scratch)
    c_ref  : [L, BT, Dp]  f32   persistent cell state   (scratch)
    gat_ref: [TT*BT, 4Dp] f32   hoisted layer-0 input projection (+bias)
    """
    TT, BT, Dp = x_ref.shape
    L = wih_ref.shape[0]

    # Zero initial hidden/cell state at the first time-chunk of each batch group
    # (PyTorch default when no state is passed).
    @pl.when(pl.program_id(1) == 0)
    def _():
        h_ref[...] = jnp.zeros_like(h_ref)
        c_ref[...] = jnp.zeros_like(c_ref)

    # Layer-0 input projection (+bias) for the whole chunk: one MXU-shaped GEMM.
    # x_flat is consumed here only (not carried across the sequential loop).
    x_flat = x_ref[...].reshape(TT * BT, Dp)        # layout-preserving (BT % 8 == 0)
    gat_ref[...] = (
        jnp.dot(x_flat.astype(jnp.bfloat16), wih_ref[0],
                preferred_element_type=jnp.float32)
        + b_ref[0])

    # Valid (non-padded) timesteps in this chunk -> trims the tail chunk.
    n_valid = jnp.minimum(TT, seq_len - pl.program_id(1) * TT)

    def sig(v):  # sigmoid(x) = 0.5*tanh(0.5*x)+0.5 : one EUP op (no exp+divide)
        return 0.5 * jnp.tanh(0.5 * v) + 0.5

    def lstm_cell(l, g_in, h_prev, c_prev):
        gates = g_in + jnp.dot(h_prev.astype(jnp.bfloat16), whh_ref[l],
                               preferred_element_type=jnp.float32)   # [BT, 4Dp] f32
        i_g = sig(gates[:, 0 * Dp:1 * Dp])                           # lane-aligned
        f_g = sig(gates[:, 1 * Dp:2 * Dp])
        g_g = jnp.tanh(gates[:, 2 * Dp:3 * Dp])
        o_g = sig(gates[:, 3 * Dp:4 * Dp])
        c_new = f_g * c_prev + i_g * g_g
        h_new = o_g * jnp.tanh(c_new)
        return h_new, c_new

    # Layer wavefront: iteration s runs layer l on timestep t = s - l.  Every layer
    # reads the PRE-update carries, so all L per-step GEMMs in one iteration are
    # independent and can be in flight simultaneously on the MXU.
    def body(s, carry):
        hs, cs = carry
        new_h, new_c = [], []
        for l in range(L):                          # L is small & static -> unrolled
            t = s - l
            t_c = jnp.clip(t, 0, TT - 1)            # clamp for safe (masked) access
            if l == 0:
                row = pl.multiple_of(t_c * BT, BT)
                g_in = gat_ref[pl.ds(row, BT), :]   # hoisted projection (+bias)
            else:
                # per-step input projection from the previous layer's h (pre-update)
                g_in = (jnp.dot(hs[l - 1].astype(jnp.bfloat16), wih_ref[l],
                                preferred_element_type=jnp.float32)
                        + b_ref[l])
            h_new, c_new = lstm_cell(l, g_in, hs[l], cs[l])
            if l == L - 1:
                # skip=True: y_t = lstm(x)_t + x_t, stored per step ([BT, Dp] is
                # lane-dense).  Fill-phase garbage stores (t < 0, clamped to row 0)
                # are overwritten at s == L-1; rows >= n_valid are never written
                # and are sliced off by the wrapper.
                y_ref[t_c] = h_new + x_ref[t_c]
            m = ((t >= 0) & (t < n_valid)).astype(jnp.float32)
            new_h.append(m * h_new + (1.0 - m) * hs[l])
            new_c.append(m * c_new + (1.0 - m) * cs[l])
        return tuple(new_h), tuple(new_c)

    init = (tuple(h_ref[l] for l in range(L)),
            tuple(c_ref[l] for l in range(L)))
    hs_f, cs_f = lax.fori_loop(0, n_valid + (L - 1), body, init)

    for l in range(L):
        h_ref[l] = hs_f[l]
        c_ref[l] = cs_f[l]


def _pad_gate_weights(w, D, Dp):
    """[L, D, 4D] -> [L, Dp, 4Dp], keeping each gate in its own Dp-lane block."""
    L = w.shape[0]
    w4 = w.reshape(L, D, 4, D)
    out = jnp.zeros((L, Dp, 4, Dp), w.dtype).at[:, :D, :, :D].set(w4)
    return out.reshape(L, Dp, 4 * Dp)


def _pad_gate_bias(b, D, Dp):
    """[L, 1, 4D] -> [L, 1, 4Dp]."""
    L = b.shape[0]
    b4 = b.reshape(L, 4, D)
    out = jnp.zeros((L, 4, Dp), b.dtype).at[:, :, :D].set(b4)
    return out.reshape(L, 1, 4 * Dp)


def _pallas_slstm(x_p, wih_p, whh_p, b_p, *, T, TT, BT, Dp, L, NB, NT,
                  vmem_limit, resident_weights):
    Tp, Bp = x_p.shape[0], x_p.shape[1]

    if resident_weights:
        # Whole arrays resident in VMEM once (constant across the grid) -> no
        # wasted second pipeline buffer for weights/bias.
        wih_spec = pl.BlockSpec(memory_space=pltpu.MemorySpace.VMEM)
        whh_spec = pl.BlockSpec(memory_space=pltpu.MemorySpace.VMEM)
        b_spec = pl.BlockSpec(memory_space=pltpu.MemorySpace.VMEM)
    else:
        # Fallback: constant-index blocked specs (default pipelining).
        wih_spec = pl.BlockSpec((L, Dp, 4 * Dp), lambda b, t: (0, 0, 0))
        whh_spec = pl.BlockSpec((L, Dp, 4 * Dp), lambda b, t: (0, 0, 0))
        b_spec = pl.BlockSpec((L, 1, 4 * Dp), lambda b, t: (0, 0, 0))

    return pl.pallas_call(
        functools.partial(slstm_kernel, T),
        out_shape=jax.ShapeDtypeStruct((Tp, Bp, Dp), jnp.float32),
        grid_spec=pltpu.PrefetchScalarGridSpec(
            num_scalar_prefetch=0,
            grid=(NB, NT),
            in_specs=[
                pl.BlockSpec((TT, BT, Dp), lambda b, t: (t, b, 0)),   # x chunk
                wih_spec, whh_spec, b_spec,
            ],
            out_specs=pl.BlockSpec((TT, BT, Dp), lambda b, t: (t, b, 0)),  # y chunk
            scratch_shapes=[
                pltpu.VMEM((L, BT, Dp), jnp.float32),        # h state (persists over t)
                pltpu.VMEM((L, BT, Dp), jnp.float32),        # c state (persists over t)
                pltpu.VMEM((TT * BT, 4 * Dp), jnp.float32),  # layer-0 input projection
            ],
        ),
        compiler_params=pltpu.CompilerParams(
            dimension_semantics=("parallel", "arbitrary"),   # batch ||, time sequential
            vmem_limit_bytes=vmem_limit,
        ),
    )(x_p, wih_p, whh_p, b_p)


def slstm_forward(x, w_ih, w_hh, bias):
    """x: [B, D, T] conv layout. w_ih/w_hh: [L, D, 4D], bias: [L, 1, 4D]. Returns [B, D, T]."""
    B, D, T = x.shape
    L = w_ih.shape[0]

    Dp = _round_up(D, 128)                     # lane-aligned features
    BT = min(_round_up(B, 8), 32)              # batch tile: >8 when B permits, vreg-safe cap
    Bp = _round_up(B, BT)
    NB = Bp // BT                              # NB >= 2 also feeds v7x megacore

    # Time chunk: as large as the gat scratch budget allows (v7x 64 MiB VMEM safe).
    GAT_BUDGET = 8 * 1024 * 1024
    TT = max(1, min(256, T))
    while TT > 8 and TT * BT * 4 * Dp * 4 > GAT_BUDGET:
        TT = (TT + 1) // 2
    Tp = _round_up(T, TT)
    NT = Tp // TT

    # Relayout to time-major + zero-pad. Padded lanes stay exactly zero through the
    # recurrence (zero-padded weights AND bias); padded timesteps are never iterated
    # (tail clamp); padded batch rows are sliced off below.
    x_tm = jnp.transpose(x, (2, 0, 1)).astype(jnp.float32)          # [T, B, D]
    x_p = jnp.pad(x_tm, ((0, Tp - T), (0, Bp - B), (0, Dp - D)))    # [Tp, Bp, Dp]

    wih_p = _pad_gate_weights(w_ih, D, Dp).astype(jnp.bfloat16)     # [L, Dp, 4Dp]
    whh_p = _pad_gate_weights(w_hh, D, Dp).astype(jnp.bfloat16)     # [L, Dp, 4Dp]
    b_p = _pad_gate_bias(bias, D, Dp).astype(jnp.float32)           # [L, 1, 4Dp]

    # VMEM budget estimate (x/y double-buffered, weights worst-case double-buffered,
    # scratch) -> scoped limit; 32 MiB floor (real raise only on v5e's 16 MiB default).
    est = (2 * 2 * TT * BT * Dp * 4                                  # x + y blocks
           + 2 * 2 * L * Dp * 4 * Dp * 2 + L * 4 * Dp * 4            # weights + bias
           + 2 * L * BT * Dp * 4 + TT * BT * 4 * Dp * 4)             # h/c + gat scratch
    vmem_limit = int(max(32 * 1024 * 1024, min(96 * 1024 * 1024, est + (8 << 20))))

    call = functools.partial(
        _pallas_slstm, x_p, wih_p, whh_p, b_p,
        T=T, TT=TT, BT=BT, Dp=Dp, L=L, NB=NB, NT=NT, vmem_limit=vmem_limit)
    try:
        y_p = call(resident_weights=True)
    except Exception:
        # Conservative fallback if single-buffered resident weight specs are rejected.
        y_p = call(resident_weights=False)

    # Strip padding and return to conv layout [B, D, T].
    return jnp.transpose(y_p[:T, :B, :D], (1, 2, 0))


def slstm_reference(x, w_ih, w_hh, bias):
    """Pure-JAX f32 reference of SLSTM forward (same math as torch nn.LSTM + skip)."""
    B, D, T = x.shape
    L = w_ih.shape[0]
    seq = jnp.transpose(x, (2, 0, 1)).astype(jnp.float32)            # [T, B, D]
    for l in range(L):
        h = jnp.zeros((B, D), jnp.float32)
        c = jnp.zeros((B, D), jnp.float32)
        outs = []
        for t in range(T):
            g = seq[t] @ w_ih[l] + h @ w_hh[l] + bias[l]             # [B, 4D]
            i = jax.nn.sigmoid(g[:, 0 * D:1 * D])
            f = jax.nn.sigmoid(g[:, 1 * D:2 * D])
            gg = jnp.tanh(g[:, 2 * D:3 * D])
            o = jax.nn.sigmoid(g[:, 3 * D:4 * D])
            c = f * c + i * gg
            h = o * jnp.tanh(c)
            outs.append(h)
        seq = jnp.stack(outs, 0)
    return jnp.transpose(seq, (1, 2, 0)) + x


def init_slstm_params(key, dimension, num_layers=2):
    """Deterministic synthetic params matching nn.LSTM(dimension, dimension, num_layers).

    PyTorch stores weight_ih_l{k}: [4H, in], weight_hh_l{k}: [4H, H], biases [4H],
    gate order i|f|g|o, init U(-1/sqrt(H), 1/sqrt(H)). We pre-transpose weights to
    [H, 4H] and fold b_ih + b_hh into one bias per layer.
    """
    H = dimension
    std = 1.0 / math.sqrt(H)
    keys = jax.random.split(key, 4 * num_layers)

    w_ih, w_hh, bias = [], [], []
    for l in range(num_layers):
        k0, k1, k2, k3 = keys[4 * l:4 * l + 4]
        wih = jax.random.uniform(k0, (4 * H, H), jnp.float32, -std, std)
        whh = jax.random.uniform(k1, (4 * H, H), jnp.float32, -std, std)
        bih = jax.random.uniform(k2, (4 * H,), jnp.float32, -std, std)
        bhh = jax.random.uniform(k3, (4 * H,), jnp.float32, -std, std)
        w_ih.append(wih.T)                      # [H, 4H]
        w_hh.append(whh.T)                      # [H, 4H]
        bias.append((bih + bhh)[None, :])       # [1, 4H]

    return (jnp.stack(w_ih, 0),                 # [L, H, 4H]
            jnp.stack(w_hh, 0),                 # [L, H, 4H]
            jnp.stack(bias, 0))                 # [L, 1, 4H]


if __name__ == "__main__":
    B, D, T = 2, 32, 8        # batch, channels (= LSTM hidden), sequence length
    L = 2                     # num_layers

    key = jax.random.PRNGKey(0)
    kx, kp = jax.random.split(key)

    x = jax.random.normal(kx, (B, D, T), jnp.float32)       # conv layout [B, C, T]
    w_ih, w_hh, bias = init_slstm_params(kp, D, num_layers=L)

    y = jax.block_until_ready(slstm_forward(x, w_ih, w_hh, bias))

    assert y.shape == (B, D, T) and y.dtype == jnp.float32
    assert bool(jnp.all(jnp.isfinite(y)))

    # Validate against a pure-JAX f32 reference (kernel uses bf16 matmul operands).
    y_ref = slstm_reference(x, w_ih, w_hh, bias)
    err = float(jnp.max(jnp.abs(y - y_ref)))
    assert err < 5e-2, f"max abs error vs reference: {err}"

    print("KERNEL_OK")
</pallas_src>

<mosaic_0001>
module attributes {stable_mosaic.version = 11 : i64} {
  func.func @slstm_kernel(%arg0: i32, %arg1: i32, %arg2: memref<8x8x128xf32, #tpu.memory_space<vmem>>, %arg3: memref<2x128x512xbf16, #tpu.memory_space<vmem>>, %arg4: memref<2x128x512xbf16, #tpu.memory_space<vmem>>, %arg5: memref<2x1x512xf32, #tpu.memory_space<vmem>>, %arg6: memref<8x8x128xf32, #tpu.memory_space<vmem>>, %arg7: memref<2x8x128xf32, #tpu.memory_space<vmem>>, %arg8: memref<2x8x128xf32, #tpu.memory_space<vmem>>, %arg9: memref<64x512xf32, #tpu.memory_space<vmem>>) attributes {dimension_semantics = [#tpu.dimension_semantics<parallel>, #tpu.dimension_semantics<arbitrary>], iteration_bounds = array<i64: 1, 1>, scalar_prefetch = 0 : i64, scratch_operands = 3 : i64, tpu.core_type = #tpu.core_type<tc>, window_params = [{transform_indices = @transform_0, window_bounds = array<i64: 8, 8, 128>}, {pipeline_mode = #tpu.pipeline_mode<synchronous>, transform_indices = @transform_1, window_bounds = array<i64: 2, 128, 512>}, {pipeline_mode = #tpu.pipeline_mode<synchronous>, transform_indices = @transform_2, window_bounds = array<i64: 2, 128, 512>}, {pipeline_mode = #tpu.pipeline_mode<synchronous>, transform_indices = @transform_3, window_bounds = array<i64: 2, 1, 512>}, {transform_indices = @transform_4, window_bounds = array<i64: 8, 8, 128>}]} {
    %c0_i32 = arith.constant 0 : i32
    %0 = arith.cmpi eq, %arg1, %c0_i32 : i32
    %1 = arith.extui %0 : i1 to i32
    %c0_i32_0 = arith.constant 0 : i32
    %2 = arith.cmpi ne, %1, %c0_i32_0 : i32
    scf.if %2 {
      %cst_38 = arith.constant 0.000000e+00 : f32
      %41 = vector.broadcast %cst_38 : f32 to vector<2x8x128xf32>
      %c0_39 = arith.constant 0 : index
      %c0_40 = arith.constant 0 : index
      %c0_41 = arith.constant 0 : index
      %42 = vector.load %arg7[%c0_39, %c0_40, %c0_41] : memref<2x8x128xf32, #tpu.memory_space<vmem>>, vector<2x8x128xf32>
      tpu.vector_store %arg7[%c0_39, %c0_40, %c0_41], %41 {strides = array<i32>} : memref<2x8x128xf32, #tpu.memory_space<vmem>>, vector<2x8x128xf32>,
      %cst_42 = arith.constant 0.000000e+00 : f32
      %43 = vector.broadcast %cst_42 : f32 to vector<2x8x128xf32>
      %c0_43 = arith.constant 0 : index
      %c0_44 = arith.constant 0 : index
      %c0_45 = arith.constant 0 : index
      %44 = vector.load %arg8[%c0_43, %c0_44, %c0_45] : memref<2x8x128xf32, #tpu.memory_space<vmem>>, vector<2x8x128xf32>
      tpu.vector_store %arg8[%c0_43, %c0_44, %c0_45], %43 {strides = array<i32>} : memref<2x8x128xf32, #tpu.memory_space<vmem>>, vector<2x8x128xf32>,
    } else {
    }
    %c0 = arith.constant 0 : index
    %c0_1 = arith.constant 0 : index
    %c0_2 = arith.constant 0 : index
    %3 = vector.load %arg2[%c0, %c0_1, %c0_2] : memref<8x8x128xf32, #tpu.memory_space<vmem>>, vector<8x8x128xf32>
    %4 = vector.shape_cast %3 : vector<8x8x128xf32> to vector<64x128xf32>
    %5 = arith.truncf %4 : vector<64x128xf32> to vector<64x128xbf16>
    %c0_3 = arith.constant 0 : index
    %c0_4 = arith.constant 0 : index
    %c0_5 = arith.constant 0 : index
    %6 = vector.load %arg3[%c0_3, %c0_4, %c0_5] : memref<2x128x512xbf16, #tpu.memory_space<vmem>>, vector<1x128x512xbf16>
    %7 = vector.shape_cast %6 : vector<1x128x512xbf16> to vector<128x512xbf16>
    %cst = arith.constant dense<0.000000e+00> : vector<64x512xf32>
    %8 = tpu.matmul %5, %7, %cst {dimension_numbers = #tpu.dot_dimension_numbers<[1], [0], [0], [1], [0, 0, 1, 1], [], []>} : vector<64x128xbf16>, vector<128x512xbf16>, vector<64x512xf32> -> vector<64x512xf32>
    %c0_6 = arith.constant 0 : index
    %c0_7 = arith.constant 0 : index
    %c0_8 = arith.constant 0 : index
    %9 = vector.load %arg5[%c0_6, %c0_7, %c0_8] : memref<2x1x512xf32, #tpu.memory_space<vmem>>, vector<1x1x512xf32>
    %10 = vector.shape_cast %9 : vector<1x1x512xf32> to vector<1x512xf32>
    %11 = vector.broadcast %10 : vector<1x512xf32> to vector<64x512xf32>
    %12 = arith.addf %8, %11 : vector<64x512xf32>
    %c0_9 = arith.constant 0 : index
    %c0_10 = arith.constant 0 : index
    %13 = vector.load %arg9[%c0_9, %c0_10] : memref<64x512xf32, #tpu.memory_space<vmem>>, vector<64x512xf32>
    tpu.vector_store %arg9[%c0_9, %c0_10], %12 {strides = array<i32>} : memref<64x512xf32, #tpu.memory_space<vmem>>, vector<64x512xf32>,
    %c8_i32 = arith.constant 8 : i32
    %14 = arith.muli %arg1, %c8_i32 : i32
    %c8_i32_11 = arith.constant 8 : i32
    %15 = arith.subi %c8_i32_11, %14 : i32
    %c8_i32_12 = arith.constant 8 : i32
    %16 = arith.minsi %c8_i32_12, %15 : i32
    %c0_13 = arith.constant 0 : index
    %c0_14 = arith.constant 0 : index
    %c0_15 = arith.constant 0 : index
    %17 = vector.load %arg7[%c0_13, %c0_14, %c0_15] : memref<2x8x128xf32, #tpu.memory_space<vmem>>, vector<1x8x128xf32>
    %18 = vector.shape_cast %17 : vector<1x8x128xf32> to vector<8x128xf32>
    %c1 = arith.constant 1 : index
    %c0_16 = arith.constant 0 : index
    %c0_17 = arith.constant 0 : index
    %19 = vector.load %arg7[%c1, %c0_16, %c0_17] : memref<2x8x128xf32, #tpu.memory_space<vmem>>, vector<1x8x128xf32>
    %20 = vector.shape_cast %19 : vector<1x8x128xf32> to vector<8x128xf32>
    %c0_18 = arith.constant 0 : index
    %c0_19 = arith.constant 0 : index
    %c0_20 = arith.constant 0 : index
    %21 = vector.load %arg8[%c0_18, %c0_19, %c0_20] : memref<2x8x128xf32, #tpu.memory_space<vmem>>, vector<1x8x128xf32>
    %22 = vector.shape_cast %21 : vector<1x8x128xf32> to vector<8x128xf32>
    %c1_21 = arith.constant 1 : index
    %c0_22 = arith.constant 0 : index
    %c0_23 = arith.constant 0 : index
    %23 = vector.load %arg8[%c1_21, %c0_22, %c0_23] : memref<2x8x128xf32, #tpu.memory_space<vmem>>, vector<1x8x128xf32>
    %24 = vector.shape_cast %23 : vector<1x8x128xf32> to vector<8x128xf32>
    %c1_i32 = arith.constant 1 : i32
    %25 = arith.addi %16, %c1_i32 : i32
    %c0_i32_24 = arith.constant 0 : i32
    %26 = arith.subi %25, %c0_i32_24 : i32
    %27 = arith.addi %c0_i32_24, %26 : i32
    %c1_i32_25 = arith.constant 1 : i32
    %28:4 = scf.for %arg10 = %c0_i32_24 to %27 step %c1_i32_25 iter_args(%arg11 = %18, %arg12 = %20, %arg13 = %22, %arg14 = %24) -> (vector<8x128xf32>, vector<8x128xf32>, vector<8x128xf32>, vector<8x128xf32>)  : i32 {
      %c0_i32_38 = arith.constant 0 : i32
      %41 = arith.subi %arg10, %c0_i32_38 : i32
      %c0_i32_39 = arith.constant 0 : i32
      %c7_i32 = arith.constant 7 : i32
      %42 = arith.maxsi %c0_i32_39, %41 : i32
      %43 = arith.minsi %c7_i32, %42 : i32
      %c8_i32_40 = arith.constant 8 : i32
      %44 = arith.muli %43, %c8_i32_40 : i32
      %45 = tpu.assume_multiple %44, 8 : i32
      %46 = arith.index_cast %45 : i32 to index
      %c0_41 = arith.constant 0 : index
      %47 = vector.load %arg9[%46, %c0_41] : memref<64x512xf32, #tpu.memory_space<vmem>>, vector<8x512xf32>
      %48 = arith.truncf %arg11 : vector<8x128xf32> to vector<8x128xbf16>
      %c0_42 = arith.constant 0 : index
      %c0_43 = arith.constant 0 : index
      %c0_44 = arith.constant 0 : index
      %49 = vector.load %arg4[%c0_42, %c0_43, %c0_44] : memref<2x128x512xbf16, #tpu.memory_space<vmem>>, vector<1x128x512xbf16>
      %50 = vector.shape_cast %49 : vector<1x128x512xbf16> to vector<128x512xbf16>
      %cst_45 = arith.constant dense<0.000000e+00> : vector<8x512xf32>
      %51 = tpu.matmul %48, %50, %cst_45 {dimension_numbers = #tpu.dot_dimension_numbers<[1], [0], [0], [1], [0, 0, 1, 1], [], []>} : vector<8x128xbf16>, vector<128x512xbf16>, vector<8x512xf32> -> vector<8x512xf32>
      %52 = arith.addf %47, %51 : vector<8x512xf32>
      %53 = vector.extract_strided_slice %52 {offsets = [0, 0], sizes = [8, 128], strides = [1, 1]} : vector<8x512xf32> to vector<8x128xf32>
      %cst_46 = arith.constant 5.000000e-01 : f32
      %54 = vector.broadcast %cst_46 : f32 to vector<8x128xf32>
      %55 = arith.mulf %54, %53 : vector<8x128xf32>
      %56 = math.tanh %55 : vector<8x128xf32>
      %cst_47 = arith.constant 5.000000e-01 : f32
      %57 = vector.broadcast %cst_47 : f32 to vector<8x128xf32>
      %58 = arith.mulf %57, %56 : vector<8x128xf32>
      %cst_48 = arith.constant 5.000000e-01 : f32
      %59 = vector.broadcast %cst_48 : f32 to vector<8x128xf32>
      %60 = arith.addf %58, %59 : vector<8x128xf32>
      %61 = vector.extract_strided_slice %52 {offsets = [0, 128], sizes = [8, 128], strides = [1, 1]} : vector<8x512xf32> to vector<8x128xf32>
      %cst_49 = arith.constant 5.000000e-01 : f32
      %62 = vector.broadcast %cst_49 : f32 to vector<8x128xf32>
      %63 = arith.mulf %62, %61 : vector<8x128xf32>
      %64 = math.tanh %63 : vector<8x128xf32>
      %cst_50 = arith.constant 5.000000e-01 : f32
      %65 = vector.broadcast %cst_50 : f32 to vector<8x128xf32>
      %66 = arith.mulf %65, %64 : vector<8x128xf32>
      %cst_51 = arith.constant 5.000000e-01 : f32
      %67 = vector.broadcast %cst_51 : f32 to vector<8x128xf32>
      %68 = arith.addf %66, %67 : vector<8x128xf32>
      %69 = vector.extract_strided_slice %52 {offsets = [0, 256], sizes = [8, 128], strides = [1, 1]} : vector<8x512xf32> to vector<8x128xf32>
      %70 = math.tanh %69 : vector<8x128xf32>
      %71 = vector.extract_strided_slice %52 {offsets = [0, 384], sizes = [8, 128], strides = [1, 1]} : vector<8x512xf32> to vector<8x128xf32>
      %cst_52 = arith.constant 5.000000e-01 : f32
      %72 = vector.broadcast %cst_52 : f32 to vector<8x128xf32>
      %73 = arith.mulf %72, %71 : vector<8x128xf32>
      %74 = math.tanh %73 : vector<8x128xf32>
      %cst_53 = arith.constant 5.000000e-01 : f32
      %75 = vector.broadcast %cst_53 : f32 to vector<8x128xf32>
      %76 = arith.mulf %75, %74 : vector<8x128xf32>
      %cst_54 = arith.constant 5.000000e-01 : f32
      %77 = vector.broadcast %cst_54 : f32 to vector<8x128xf32>
      %78 = arith.addf %76, %77 : vector<8x128xf32>
      %79 = arith.mulf %68, %arg13 : vector<8x128xf32>
      %80 = arith.mulf %60, %70 : vector<8x128xf32>
      %81 = arith.addf %79, %80 : vector<8x128xf32>
      %82 = math.tanh %81 : vector<8x128xf32>
      %83 = arith.mulf %78, %82 : vector<8x128xf32>
      %c0_i32_55 = arith.constant 0 : i32
      %84 = arith.cmpi sge, %41, %c0_i32_55 : i32
      %85 = arith.cmpi slt, %41, %16 : i32
      %86 = arith.andi %84, %85 : i1
      %87 = arith.extui %86 : i1 to i32
      %88 = arith.sitofp %87 : i32 to f32
      %89 = vector.broadcast %88 : f32 to vector<8x128xf32>
      %90 = arith.mulf %89, %83 : vector<8x128xf32>
      %cst_56 = arith.constant 1.000000e+00 : f32
      %91 = arith.subf %cst_56, %88 : f32
      %92 = vector.broadcast %91 : f32 to vector<8x128xf32>
      %93 = arith.mulf %92, %arg11 : vector<8x128xf32>
      %94 = arith.addf %90, %93 : vector<8x128xf32>
      %95 = vector.broadcast %88 : f32 to vector<8x128xf32>
      %96 = arith.mulf %95, %81 : vector<8x128xf32>
      %cst_57 = arith.constant 1.000000e+00 : f32
      %97 = arith.subf %cst_57, %88 : f32
      %98 = vector.broadcast %97 : f32 to vector<8x128xf32>
      %99 = arith.mulf %98, %arg13 : vector<8x128xf32>
      %100 = arith.addf %96, %99 : vector<8x128xf32>
      %c1_i32_58 = arith.constant 1 : i32
      %101 = arith.subi %arg10, %c1_i32_58 : i32
      %c0_i32_59 = arith.constant 0 : i32
      %c7_i32_60 = arith.constant 7 : i32
      %102 = arith.maxsi %c0_i32_59, %101 : i32
      %103 = arith.minsi %c7_i32_60, %102 : i32
      %104 = arith.truncf %arg11 : vector<8x128xf32> to vector<8x128xbf16>
      %c1_61 = arith.constant 1 : index
      %c0_62 = arith.constant 0 : index
      %c0_63 = arith.constant 0 : index
      %105 = vector.load %arg3[%c1_61, %c0_62, %c0_63] : memref<2x128x512xbf16, #tpu.memory_space<vmem>>, vector<1x128x512xbf16>
      %106 = vector.shape_cast %105 : vector<1x128x512xbf16> to vector<128x512xbf16>
      %cst_64 = arith.constant dense<0.000000e+00> : vector<8x512xf32>
      %107 = tpu.matmul %104, %106, %cst_64 {dimension_numbers = #tpu.dot_dimension_numbers<[1], [0], [0], [1], [0, 0, 1, 1], [], []>} : vector<8x128xbf16>, vector<128x512xbf16>, vector<8x512xf32> -> vector<8x512xf32>
      %c1_65 = arith.constant 1 : index
      %c0_66 = arith.constant 0 : index
      %c0_67 = arith.constant 0 : index
      %108 = vector.load %arg5[%c1_65, %c0_66, %c0_67] : memref<2x1x512xf32, #tpu.memory_space<vmem>>, vector<1x1x512xf32>
      %109 = vector.shape_cast %108 : vector<1x1x512xf32> to vector<1x512xf32>
      %110 = vector.broadcast %109 : vector<1x512xf32> to vector<8x512xf32>
      %111 = arith.addf %107, %110 : vector<8x512xf32>
      %112 = arith.truncf %arg12 : vector<8x128xf32> to vector<8x128xbf16>
      %c1_68 = arith.constant 1 : index
      %c0_69 = arith.constant 0 : index
      %c0_70 = arith.constant 0 : index
      %113 = vector.load %arg4[%c1_68, %c0_69, %c0_70] : memref<2x128x512xbf16, #tpu.memory_space<vmem>>, vector<1x128x512xbf16>
      %114 = vector.shape_cast %113 : vector<1x128x512xbf16> to vector<128x512xbf16>
      %cst_71 = arith.constant dense<0.000000e+00> : vector<8x512xf32>
      %115 = tpu.matmul %112, %114, %cst_71 {dimension_numbers = #tpu.dot_dimension_numbers<[1], [0], [0], [1], [0, 0, 1, 1], [], []>} : vector<8x128xbf16>, vector<128x512xbf16>, vector<8x512xf32> -> vector<8x512xf32>
      %116 = arith.addf %111, %115 : vector<8x512xf32>
      %117 = vector.extract_strided_slice %116 {offsets = [0, 0], sizes = [8, 128], strides = [1, 1]} : vector<8x512xf32> to vector<8x128xf32>
      %cst_72 = arith.constant 5.000000e-01 : f32
      %118 = vector.broadcast %cst_72 : f32 to vector<8x128xf32>
      %119 = arith.mulf %118, %117 : vector<8x128xf32>
      %120 = math.tanh %119 : vector<8x128xf32>
      %cst_73 = arith.constant 5.000000e-01 : f32
      %121 = vector.broadcast %cst_73 : f32 to vector<8x128xf32>
      %122 = arith.mulf %121, %120 : vector<8x128xf32>
      %cst_74 = arith.constant 5.000000e-01 : f32
      %123 = vector.broadcast %cst_74 : f32 to vector<8x128xf32>
      %124 = arith.addf %122, %123 : vector<8x128xf32>
      %125 = vector.extract_strided_slice %116 {offsets = [0, 128], sizes = [8, 128], strides = [1, 1]} : vector<8x512xf32> to vector<8x128xf32>
      %cst_75 = arith.constant 5.000000e-01 : f32
      %126 = vector.broadcast %cst_75 : f32 to vector<8x128xf32>
      %127 = arith.mulf %126, %125 : vector<8x128xf32>
      %128 = math.tanh %127 : vector<8x128xf32>
      %cst_76 = arith.constant 5.000000e-01 : f32
      %129 = vector.broadcast %cst_76 : f32 to vector<8x128xf32>
      %130 = arith.mulf %129, %128 : vector<8x128xf32>
      %cst_77 = arith.constant 5.000000e-01 : f32
      %131 = vector.broadcast %cst_77 : f32 to vector<8x128xf32>
      %132 = arith.addf %130, %131 : vector<8x128xf32>
      %133 = vector.extract_strided_slice %116 {offsets = [0, 256], sizes = [8, 128], strides = [1, 1]} : vector<8x512xf32> to vector<8x128xf32>
      %134 = math.tanh %133 : vector<8x128xf32>
      %135 = vector.extract_strided_slice %116 {offsets = [0, 384], sizes = [8, 128], strides = [1, 1]} : vector<8x512xf32> to vector<8x128xf32>
      %cst_78 = arith.constant 5.000000e-01 : f32
      %136 = vector.broadcast %cst_78 : f32 to vector<8x128xf32>
      %137 = arith.mulf %136, %135 : vector<8x128xf32>
      %138 = math.tanh %137 : vector<8x128xf32>
      %cst_79 = arith.constant 5.000000e-01 : f32
      %139 = vector.broadcast %cst_79 : f32 to vector<8x128xf32>
      %140 = arith.mulf %139, %138 : vector<8x128xf32>
      %cst_80 = arith.constant 5.000000e-01 : f32
      %141 = vector.broadcast %cst_80 : f32 to vector<8x128xf32>
      %142 = arith.addf %140, %141 : vector<8x128xf32>
      %143 = arith.mulf %132, %arg14 : vector<8x128xf32>
      %144 = arith.mulf %124, %134 : vector<8x128xf32>
      %145 = arith.addf %143, %144 : vector<8x128xf32>
      %146 = math.tanh %145 : vector<8x128xf32>
      %147 = arith.mulf %142, %146 : vector<8x128xf32>
      %148 = arith.index_cast %103 : i32 to index
      %c0_81 = arith.constant 0 : index
      %c0_82 = arith.constant 0 : index
      %149 = vector.load %arg2[%148, %c0_81, %c0_82] : memref<8x8x128xf32, #tpu.memory_space<vmem>>, vector<1x8x128xf32>
      %150 = vector.shape_cast %149 : vector<1x8x128xf32> to vector<8x128xf32>
      %151 = arith.addf %147, %150 : vector<8x128xf32>
      %152 = arith.index_cast %103 : i32 to index
      %c0_83 = arith.constant 0 : index
      %c0_84 = arith.constant 0 : index
      %153 = vector.load %arg6[%152, %c0_83, %c0_84] : memref<8x8x128xf32, #tpu.memory_space<vmem>>, vector<1x8x128xf32>
      %154 = vector.shape_cast %153 : vector<1x8x128xf32> to vector<8x128xf32>
      %155 = vector.shape_cast %151 : vector<8x128xf32> to vector<1x8x128xf32>
      tpu.vector_store %arg6[%152, %c0_83, %c0_84], %155 {strides = array<i32>} : memref<8x8x128xf32, #tpu.memory_space<vmem>>, vector<1x8x128xf32>,
      %c0_i32_85 = arith.constant 0 : i32
      %156 = arith.cmpi sge, %101, %c0_i32_85 : i32
      %157 = arith.cmpi slt, %101, %16 : i32
      %158 = arith.andi %156, %157 : i1
      %159 = arith.extui %158 : i1 to i32
      %160 = arith.sitofp %159 : i32 to f32
      %161 = vector.broadcast %160 : f32 to vector<8x128xf32>
      %162 = arith.mulf %161, %147 : vector<8x128xf32>
      %cst_86 = arith.constant 1.000000e+00 : f32
      %163 = arith.subf %cst_86, %160 : f32
      %164 = vector.broadcast %163 : f32 to vector<8x128xf32>
      %165 = arith.mulf %164, %arg12 : vector<8x128xf32>
      %166 = arith.addf %162, %165 : vector<8x128xf32>
      %167 = vector.broadcast %160 : f32 to vector<8x128xf32>
      %168 = arith.mulf %167, %145 : vector<8x128xf32>
      %cst_87 = arith.constant 1.000000e+00 : f32
      %169 = arith.subf %cst_87, %160 : f32
      %170 = vector.broadcast %169 : f32 to vector<8x128xf32>
      %171 = arith.mulf %170, %arg14 : vector<8x128xf32>
      %172 = arith.addf %168, %171 : vector<8x128xf32>
      scf.yield %94, %166, %100, %172 : vector<8x128xf32>, vector<8x128xf32>, vector<8x128xf32>, vector<8x128xf32>
    }
    %c0_26 = arith.constant 0 : index
    %c0_27 = arith.constant 0 : index
    %c0_28 = arith.constant 0 : index
    %29 = vector.load %arg7[%c0_26, %c0_27, %c0_28] : memref<2x8x128xf32, #tpu.memory_space<vmem>>, vector<1x8x128xf32>
    %30 = vector.shape_cast %29 : vector<1x8x128xf32> to vector<8x128xf32>
    %31 = vector.shape_cast %28#0 : vector<8x128xf32> to vector<1x8x128xf32>
    tpu.vector_store %arg7[%c0_26, %c0_27, %c0_28], %31 {strides = array<i32>} : memref<2x8x128xf32, #tpu.memory_space<vmem>>, vector<1x8x128xf32>,
    %c0_29 = arith.constant 0 : index
    %c0_30 = arith.constant 0 : index
    %c0_31 = arith.constant 0 : index
    %32 = vector.load %arg8[%c0_29, %c0_30, %c0_31] : memref<2x8x128xf32, #tpu.memory_space<vmem>>, vector<1x8x128xf32>
    %33 = vector.shape_cast %32 : vector<1x8x128xf32> to vector<8x128xf32>
    %34 = vector.shape_cast %28#2 : vector<8x128xf32> to vector<1x8x128xf32>
    tpu.vector_store %arg8[%c0_29, %c0_30, %c0_31], %34 {strides = array<i32>} : memref<2x8x128xf32, #tpu.memory_space<vmem>>, vector<1x8x128xf32>,
    %c1_32 = arith.constant 1 : index
    %c0_33 = arith.constant 0 : index
    %c0_34 = arith.constant 0 : index
    %35 = vector.load %arg7[%c1_32, %c0_33, %c0_34] : memref<2x8x128xf32, #tpu.memory_space<vmem>>, vector<1x8x128xf32>
    %36 = vector.shape_cast %35 : vector<1x8x128xf32> to vector<8x128xf32>
    %37 = vector.shape_cast %28#1 : vector<8x128xf32> to vector<1x8x128xf32>
    tpu.vector_store %arg7[%c1_32, %c0_33, %c0_34], %37 {strides = array<i32>} : memref<2x8x128xf32, #tpu.memory_space<vmem>>, vector<1x8x128xf32>,
    %c1_35 = arith.constant 1 : index
    %c0_36 = arith.constant 0 : index
    %c0_37 = arith.constant 0 : index
    %38 = vector.load %arg8[%c1_35, %c0_36, %c0_37] : memref<2x8x128xf32, #tpu.memory_space<vmem>>, vector<1x8x128xf32>
    %39 = vector.shape_cast %38 : vector<1x8x128xf32> to vector<8x128xf32>
    %40 = vector.shape_cast %28#3 : vector<8x128xf32> to vector<1x8x128xf32>
    tpu.vector_store %arg8[%c1_35, %c0_36, %c0_37], %40 {strides = array<i32>} : memref<2x8x128xf32, #tpu.memory_space<vmem>>, vector<1x8x128xf32>,
    return
  }
  func.func @transform_0(%arg0: i32, %arg1: i32) -> (i32, i32, i32) {
    %c0_i32 = arith.constant 0 : i32
    %c0_i32_0 = arith.constant 0 : i32
    return %arg1, %arg0, %c0_i32 : i32, i32, i32
  }
  func.func @transform_1(%arg0: i32, %arg1: i32) -> (i32, i32, i32) {
    %c0_i32 = arith.constant 0 : i32
    %c0_i32_0 = arith.constant 0 : i32
    %c0_i32_1 = arith.constant 0 : i32
    %c0_i32_2 = arith.constant 0 : i32
    return %c0_i32, %c0_i32_0, %c0_i32_1 : i32, i32, i32
  }
  func.func @transform_2(%arg0: i32, %arg1: i32) -> (i32, i32, i32) {
    %c0_i32 = arith.constant 0 : i32
    %c0_i32_0 = arith.constant 0 : i32
    %c0_i32_1 = arith.constant 0 : i32
    %c0_i32_2 = arith.constant 0 : i32
    return %c0_i32, %c0_i32_0, %c0_i32_1 : i32, i32, i32
  }
  func.func @transform_3(%arg0: i32, %arg1: i32) -> (i32, i32, i32) {
    %c0_i32 = arith.constant 0 : i32
    %c0_i32_0 = arith.constant 0 : i32
    %c0_i32_1 = arith.constant 0 : i32
    %c0_i32_2 = arith.constant 0 : i32
    return %c0_i32, %c0_i32_0, %c0_i32_1 : i32, i32, i32
  }
  func.func @transform_4(%arg0: i32, %arg1: i32) -> (i32, i32, i32) {
    %c0_i32 = arith.constant 0 : i32
    %c0_i32_0 = arith.constant 0 : i32
    return %arg1, %arg0, %c0_i32 : i32, i32, i32
  }
}

module attributes {stable_mosaic.version = 11 : i64} {
  func.func @slstm_kernel(%arg0: i32, %arg1: i32, %arg2: memref<8x8x128xf32, #tpu.memory_space<vmem>>, %arg3: memref<2x128x512xbf16, #tpu.memory_space<vmem>>, %arg4: memref<2x128x512xbf16, #tpu.memory_space<vmem>>, %arg5: memref<2x1x512xf32, #tpu.memory_space<vmem>>, %arg6: memref<8x8x128xf32, #tpu.memory_space<vmem>>, %arg7: memref<2x8x128xf32, #tpu.memory_space<vmem>>, %arg8: memref<2x8x128xf32, #tpu.memory_space<vmem>>, %arg9: memref<64x512xf32, #tpu.memory_space<vmem>>) attributes {dimension_semantics = [#tpu.dimension_semantics<parallel>, #tpu.dimension_semantics<arbitrary>], iteration_bounds = array<i64: 1, 1>, scalar_prefetch = 0 : i64, scratch_operands = 3 : i64, tpu.core_type = #tpu.core_type<tc>, window_params = [{transform_indices = @transform_0, window_bounds = array<i64: 8, 8, 128>}, {pipeline_mode = #tpu.pipeline_mode<synchronous>, transform_indices = @transform_1, window_bounds = array<i64: 2, 128, 512>}, {pipeline_mode = #tpu.pipeline_mode<synchronous>, transform_indices = @transform_2, window_bounds = array<i64: 2, 128, 512>}, {pipeline_mode = #tpu.pipeline_mode<synchronous>, transform_indices = @transform_3, window_bounds = array<i64: 2, 1, 512>}, {transform_indices = @transform_4, window_bounds = array<i64: 8, 8, 128>}]} {
    %c0_i32 = arith.constant 0 : i32
    %0 = arith.cmpi eq, %arg1, %c0_i32 : i32
    %1 = arith.extui %0 : i1 to i32
    %c0_i32_0 = arith.constant 0 : i32
    %2 = arith.cmpi ne, %1, %c0_i32_0 : i32
    scf.if %2 {
      %cst_38 = arith.constant 0.000000e+00 : f32
      %41 = vector.broadcast %cst_38 : f32 to vector<2x8x128xf32>
      %c0_39 = arith.constant 0 : index
      %c0_40 = arith.constant 0 : index
      %c0_41 = arith.constant 0 : index
      %42 = vector.load %arg7[%c0_39, %c0_40, %c0_41] : memref<2x8x128xf32, #tpu.memory_space<vmem>>, vector<2x8x128xf32>
      tpu.vector_store %arg7[%c0_39, %c0_40, %c0_41], %41 {strides = array<i32>} : memref<2x8x128xf32, #tpu.memory_space<vmem>>, vector<2x8x128xf32>,
      %cst_42 = arith.constant 0.000000e+00 : f32
      %43 = vector.broadcast %cst_42 : f32 to vector<2x8x128xf32>
      %c0_43 = arith.constant 0 : index
      %c0_44 = arith.constant 0 : index
      %c0_45 = arith.constant 0 : index
      %44 = vector.load %arg8[%c0_43, %c0_44, %c0_45] : memref<2x8x128xf32, #tpu.memory_space<vmem>>, vector<2x8x128xf32>
      tpu.vector_store %arg8[%c0_43, %c0_44, %c0_45], %43 {strides = array<i32>} : memref<2x8x128xf32, #tpu.memory_space<vmem>>, vector<2x8x128xf32>,
    } else {
    }
    %c0 = arith.constant 0 : index
    %c0_1 = arith.constant 0 : index
    %c0_2 = arith.constant 0 : index
    %3 = vector.load %arg2[%c0, %c0_1, %c0_2] : memref<8x8x128xf32, #tpu.memory_space<vmem>>, vector<8x8x128xf32>
    %4 = vector.shape_cast %3 : vector<8x8x128xf32> to vector<64x128xf32>
    %5 = arith.truncf %4 : vector<64x128xf32> to vector<64x128xbf16>
    %c0_3 = arith.constant 0 : index
    %c0_4 = arith.constant 0 : index
    %c0_5 = arith.constant 0 : index
    %6 = vector.load %arg3[%c0_3, %c0_4, %c0_5] : memref<2x128x512xbf16, #tpu.memory_space<vmem>>, vector<1x128x512xbf16>
    %7 = vector.shape_cast %6 : vector<1x128x512xbf16> to vector<128x512xbf16>
    %cst = arith.constant dense<0.000000e+00> : vector<64x512xf32>
    %8 = tpu.matmul %5, %7, %cst {dimension_numbers = #tpu.dot_dimension_numbers<[1], [0], [0], [1], [0, 0, 1, 1], [], []>} : vector<64x128xbf16>, vector<128x512xbf16>, vector<64x512xf32> -> vector<64x512xf32>
    %c0_6 = arith.constant 0 : index
    %c0_7 = arith.constant 0 : index
    %c0_8 = arith.constant 0 : index
    %9 = vector.load %arg5[%c0_6, %c0_7, %c0_8] : memref<2x1x512xf32, #tpu.memory_space<vmem>>, vector<1x1x512xf32>
    %10 = vector.shape_cast %9 : vector<1x1x512xf32> to vector<1x512xf32>
    %11 = vector.broadcast %10 : vector<1x512xf32> to vector<64x512xf32>
    %12 = arith.addf %8, %11 : vector<64x512xf32>
    %c0_9 = arith.constant 0 : index
    %c0_10 = arith.constant 0 : index
    %13 = vector.load %arg9[%c0_9, %c0_10] : memref<64x512xf32, #tpu.memory_space<vmem>>, vector<64x512xf32>
    tpu.vector_store %arg9[%c0_9, %c0_10], %12 {strides = array<i32>} : memref<64x512xf32, #tpu.memory_space<vmem>>, vector<64x512xf32>,
    %c8_i32 = arith.constant 8 : i32
    %14 = arith.muli %arg1, %c8_i32 : i32
    %c8_i32_11 = arith.constant 8 : i32
    %15 = arith.subi %c8_i32_11, %14 : i32
    %c8_i32_12 = arith.constant 8 : i32
    %16 = arith.minsi %c8_i32_12, %15 : i32
    %c0_13 = arith.constant 0 : index
    %c0_14 = arith.constant 0 : index
    %c0_15 = arith.constant 0 : index
    %17 = vector.load %arg7[%c0_13, %c0_14, %c0_15] : memref<2x8x128xf32, #tpu.memory_space<vmem>>, vector<1x8x128xf32>
    %18 = vector.shape_cast %17 : vector<1x8x128xf32> to vector<8x128xf32>
    %c1 = arith.constant 1 : index
    %c0_16 = arith.constant 0 : index
    %c0_17 = arith.constant 0 : index
    %19 = vector.load %arg7[%c1, %c0_16, %c0_17] : memref<2x8x128xf32, #tpu.memory_space<vmem>>, vector<1x8x128xf32>
    %20 = vector.shape_cast %19 : vector<1x8x128xf32> to vector<8x128xf32>
    %c0_18 = arith.constant 0 : index
    %c0_19 = arith.constant 0 : index
    %c0_20 = arith.constant 0 : index
    %21 = vector.load %arg8[%c0_18, %c0_19, %c0_20] : memref<2x8x128xf32, #tpu.memory_space<vmem>>, vector<1x8x128xf32>
    %22 = vector.shape_cast %21 : vector<1x8x128xf32> to vector<8x128xf32>
    %c1_21 = arith.constant 1 : index
    %c0_22 = arith.constant 0 : index
    %c0_23 = arith.constant 0 : index
    %23 = vector.load %arg8[%c1_21, %c0_22, %c0_23] : memref<2x8x128xf32, #tpu.memory_space<vmem>>, vector<1x8x128xf32>
    %24 = vector.shape_cast %23 : vector<1x8x128xf32> to vector<8x128xf32>
    %c1_i32 = arith.constant 1 : i32
    %25 = arith.addi %16, %c1_i32 : i32
    %c0_i32_24 = arith.constant 0 : i32
    %26 = arith.subi %25, %c0_i32_24 : i32
    %27 = arith.addi %c0_i32_24, %26 : i32
    %c1_i32_25 = arith.constant 1 : i32
    %28:4 = scf.for %arg10 = %c0_i32_24 to %27 step %c1_i32_25 iter_args(%arg11 = %18, %arg12 = %20, %arg13 = %22, %arg14 = %24) -> (vector<8x128xf32>, vector<8x128xf32>, vector<8x128xf32>, vector<8x128xf32>)  : i32 {
      %c0_i32_38 = arith.constant 0 : i32
      %41 = arith.subi %arg10, %c0_i32_38 : i32
      %c0_i32_39 = arith.constant 0 : i32
      %c7_i32 = arith.constant 7 : i32
      %42 = arith.maxsi %c0_i32_39, %41 : i32
      %43 = arith.minsi %c7_i32, %42 : i32
      %c8_i32_40 = arith.constant 8 : i32
      %44 = arith.muli %43, %c8_i32_40 : i32
      %45 = tpu.assume_multiple %44, 8 : i32
      %46 = arith.index_cast %45 : i32 to index
      %c0_41 = arith.constant 0 : index
      %47 = vector.load %arg9[%46, %c0_41] : memref<64x512xf32, #tpu.memory_space<vmem>>, vector<8x512xf32>
      %48 = arith.truncf %arg11 : vector<8x128xf32> to vector<8x128xbf16>
      %c0_42 = arith.constant 0 : index
      %c0_43 = arith.constant 0 : index
      %c0_44 = arith.constant 0 : index
      %49 = vector.load %arg4[%c0_42, %c0_43, %c0_44] : memref<2x128x512xbf16, #tpu.memory_space<vmem>>, vector<1x128x512xbf16>
      %50 = vector.shape_cast %49 : vector<1x128x512xbf16> to vector<128x512xbf16>
      %cst_45 = arith.constant dense<0.000000e+00> : vector<8x512xf32>
      %51 = tpu.matmul %48, %50, %cst_45 {dimension_numbers = #tpu.dot_dimension_numbers<[1], [0], [0], [1], [0, 0, 1, 1], [], []>} : vector<8x128xbf16>, vector<128x512xbf16>, vector<8x512xf32> -> vector<8x512xf32>
      %52 = arith.addf %47, %51 : vector<8x512xf32>
      %53 = vector.extract_strided_slice %52 {offsets = [0, 0], sizes = [8, 128], strides = [1, 1]} : vector<8x512xf32> to vector<8x128xf32>
      %cst_46 = arith.constant 5.000000e-01 : f32
      %54 = vector.broadcast %cst_46 : f32 to vector<8x128xf32>
      %55 = arith.mulf %54, %53 : vector<8x128xf32>
      %56 = math.tanh %55 : vector<8x128xf32>
      %cst_47 = arith.constant 5.000000e-01 : f32
      %57 = vector.broadcast %cst_47 : f32 to vector<8x128xf32>
      %58 = arith.mulf %57, %56 : vector<8x128xf32>
      %cst_48 = arith.constant 5.000000e-01 : f32
      %59 = vector.broadcast %cst_48 : f32 to vector<8x128xf32>
      %60 = arith.addf %58, %59 : vector<8x128xf32>
      %61 = vector.extract_strided_slice %52 {offsets = [0, 128], sizes = [8, 128], strides = [1, 1]} : vector<8x512xf32> to vector<8x128xf32>
      %cst_49 = arith.constant 5.000000e-01 : f32
      %62 = vector.broadcast %cst_49 : f32 to vector<8x128xf32>
      %63 = arith.mulf %62, %61 : vector<8x128xf32>
      %64 = math.tanh %63 : vector<8x128xf32>
      %cst_50 = arith.constant 5.000000e-01 : f32
      %65 = vector.broadcast %cst_50 : f32 to vector<8x128xf32>
      %66 = arith.mulf %65, %64 : vector<8x128xf32>
      %cst_51 = arith.constant 5.000000e-01 : f32
      %67 = vector.broadcast %cst_51 : f32 to vector<8x128xf32>
      %68 = arith.addf %66, %67 : vector<8x128xf32>
      %69 = vector.extract_strided_slice %52 {offsets = [0, 256], sizes = [8, 128], strides = [1, 1]} : vector<8x512xf32> to vector<8x128xf32>
      %70 = math.tanh %69 : vector<8x128xf32>
      %71 = vector.extract_strided_slice %52 {offsets = [0, 384], sizes = [8, 128], strides = [1, 1]} : vector<8x512xf32> to vector<8x128xf32>
      %cst_52 = arith.constant 5.000000e-01 : f32
      %72 = vector.broadcast %cst_52 : f32 to vector<8x128xf32>
      %73 = arith.mulf %72, %71 : vector<8x128xf32>
      %74 = math.tanh %73 : vector<8x128xf32>
      %cst_53 = arith.constant 5.000000e-01 : f32
      %75 = vector.broadcast %cst_53 : f32 to vector<8x128xf32>
      %76 = arith.mulf %75, %74 : vector<8x128xf32>
      %cst_54 = arith.constant 5.000000e-01 : f32
      %77 = vector.broadcast %cst_54 : f32 to vector<8x128xf32>
      %78 = arith.addf %76, %77 : vector<8x128xf32>
      %79 = arith.mulf %68, %arg13 : vector<8x128xf32>
      %80 = arith.mulf %60, %70 : vector<8x128xf32>
      %81 = arith.addf %79, %80 : vector<8x128xf32>
      %82 = math.tanh %81 : vector<8x128xf32>
      %83 = arith.mulf %78, %82 : vector<8x128xf32>
      %c0_i32_55 = arith.constant 0 : i32
      %84 = arith.cmpi sge, %41, %c0_i32_55 : i32
      %85 = arith.cmpi slt, %41, %16 : i32
      %86 = arith.andi %84, %85 : i1
      %87 = arith.extui %86 : i1 to i32
      %88 = arith.sitofp %87 : i32 to f32
      %89 = vector.broadcast %88 : f32 to vector<8x128xf32>
      %90 = arith.mulf %89, %83 : vector<8x128xf32>
      %cst_56 = arith.constant 1.000000e+00 : f32
      %91 = arith.subf %cst_56, %88 : f32
      %92 = vector.broadcast %91 : f32 to vector<8x128xf32>
      %93 = arith.mulf %92, %arg11 : vector<8x128xf32>
      %94 = arith.addf %90, %93 : vector<8x128xf32>
      %95 = vector.broadcast %88 : f32 to vector<8x128xf32>
      %96 = arith.mulf %95, %81 : vector<8x128xf32>
      %cst_57 = arith.constant 1.000000e+00 : f32
      %97 = arith.subf %cst_57, %88 : f32
      %98 = vector.broadcast %97 : f32 to vector<8x128xf32>
      %99 = arith.mulf %98, %arg13 : vector<8x128xf32>
      %100 = arith.addf %96, %99 : vector<8x128xf32>
      %c1_i32_58 = arith.constant 1 : i32
      %101 = arith.subi %arg10, %c1_i32_58 : i32
      %c0_i32_59 = arith.constant 0 : i32
      %c7_i32_60 = arith.constant 7 : i32
      %102 = arith.maxsi %c0_i32_59, %101 : i32
      %103 = arith.minsi %c7_i32_60, %102 : i32
      %104 = arith.truncf %arg11 : vector<8x128xf32> to vector<8x128xbf16>
      %c1_61 = arith.constant 1 : index
      %c0_62 = arith.constant 0 : index
      %c0_63 = arith.constant 0 : index
      %105 = vector.load %arg3[%c1_61, %c0_62, %c0_63] : memref<2x128x512xbf16, #tpu.memory_space<vmem>>, vector<1x128x512xbf16>
      %106 = vector.shape_cast %105 : vector<1x128x512xbf16> to vector<128x512xbf16>
      %cst_64 = arith.constant dense<0.000000e+00> : vector<8x512xf32>
      %107 = tpu.matmul %104, %106, %cst_64 {dimension_numbers = #tpu.dot_dimension_numbers<[1], [0], [0], [1], [0, 0, 1, 1], [], []>} : vector<8x128xbf16>, vector<128x512xbf16>, vector<8x512xf32> -> vector<8x512xf32>
      %c1_65 = arith.constant 1 : index
      %c0_66 = arith.constant 0 : index
      %c0_67 = arith.constant 0 : index
      %108 = vector.load %arg5[%c1_65, %c0_66, %c0_67] : memref<2x1x512xf32, #tpu.memory_space<vmem>>, vector<1x1x512xf32>
      %109 = vector.shape_cast %108 : vector<1x1x512xf32> to vector<1x512xf32>
      %110 = vector.broadcast %109 : vector<1x512xf32> to vector<8x512xf32>
      %111 = arith.addf %107, %110 : vector<8x512xf32>
      %112 = arith.truncf %arg12 : vector<8x128xf32> to vector<8x128xbf16>
      %c1_68 = arith.constant 1 : index
      %c0_69 = arith.constant 0 : index
      %c0_70 = arith.constant 0 : index
      %113 = vector.load %arg4[%c1_68, %c0_69, %c0_70] : memref<2x128x512xbf16, #tpu.memory_space<vmem>>, vector<1x128x512xbf16>
      %114 = vector.shape_cast %113 : vector<1x128x512xbf16> to vector<128x512xbf16>
      %cst_71 = arith.constant dense<0.000000e+00> : vector<8x512xf32>
      %115 = tpu.matmul %112, %114, %cst_71 {dimension_numbers = #tpu.dot_dimension_numbers<[1], [0], [0], [1], [0, 0, 1, 1], [], []>} : vector<8x128xbf16>, vector<128x512xbf16>, vector<8x512xf32> -> vector<8x512xf32>
      %116 = arith.addf %111, %115 : vector<8x512xf32>
      %117 = vector.extract_strided_slice %116 {offsets = [0, 0], sizes = [8, 128], strides = [1, 1]} : vector<8x512xf32> to vector<8x128xf32>
      %cst_72 = arith.constant 5.000000e-01 : f32
      %118 = vector.broadcast %cst_72 : f32 to vector<8x128xf32>
      %119 = arith.mulf %118, %117 : vector<8x128xf32>
      %120 = math.tanh %119 : vector<8x128xf32>
      %cst_73 = arith.constant 5.000000e-01 : f32
      %121 = vector.broadcast %cst_73 : f32 to vector<8x128xf32>
      %122 = arith.mulf %121, %120 : vector<8x128xf32>
      %cst_74 = arith.constant 5.000000e-01 : f32
      %123 = vector.broadcast %cst_74 : f32 to vector<8x128xf32>
      %124 = arith.addf %122, %123 : vector<8x128xf32>
      %125 = vector.extract_strided_slice %116 {offsets = [0, 128], sizes = [8, 128], strides = [1, 1]} : vector<8x512xf32> to vector<8x128xf32>
      %cst_75 = arith.constant 5.000000e-01 : f32
      %126 = vector.broadcast %cst_75 : f32 to vector<8x128xf32>
      %127 = arith.mulf %126, %125 : vector<8x128xf32>
      %128 = math.tanh %127 : vector<8x128xf32>
      %cst_76 = arith.constant 5.000000e-01 : f32
      %129 = vector.broadcast %cst_76 : f32 to vector<8x128xf32>
      %130 = arith.mulf %129, %128 : vector<8x128xf32>
      %cst_77 = arith.constant 5.000000e-01 : f32
      %131 = vector.broadcast %cst_77 : f32 to vector<8x128xf32>
      %132 = arith.addf %130, %131 : vector<8x128xf32>
      %133 = vector.extract_strided_slice %116 {offsets = [0, 256], sizes = [8, 128], strides = [1, 1]} : vector<8x512xf32> to vector<8x128xf32>
      %134 = math.tanh %133 : vector<8x128xf32>
      %135 = vector.extract_strided_slice %116 {offsets = [0, 384], sizes = [8, 128], strides = [1, 1]} : vector<8x512xf32> to vector<8x128xf32>
      %cst_78 = arith.constant 5.000000e-01 : f32
      %136 = vector.broadcast %cst_78 : f32 to vector<8x128xf32>
      %137 = arith.mulf %136, %135 : vector<8x128xf32>
      %138 = math.tanh %137 : vector<8x128xf32>
      %cst_79 = arith.constant 5.000000e-01 : f32
      %139 = vector.broadcast %cst_79 : f32 to vector<8x128xf32>
      %140 = arith.mulf %139, %138 : vector<8x128xf32>
      %cst_80 = arith.constant 5.000000e-01 : f32
      %141 = vector.broadcast %cst_80 : f32 to vector<8x128xf32>
      %142 = arith.addf %140, %141 : vector<8x128xf32>
      %143 = arith.mulf %132, %arg14 : vector<8x128xf32>
      %144 = arith.mulf %124, %134 : vector<8x128xf32>
      %145 = arith.addf %143, %144 : vector<8x128xf32>
      %146 = math.tanh %145 : vector<8x128xf32>
      %147 = arith.mulf %142, %146 : vector<8x128xf32>
      %148 = arith.index_cast %103 : i32 to index
      %c0_81 = arith.constant 0 : index
      %c0_82 = arith.constant 0 : index
      %149 = vector.load %arg2[%148, %c0_81, %c0_82] : memref<8x8x128xf32, #tpu.memory_space<vmem>>, vector<1x8x128xf32>
      %150 = vector.shape_cast %149 : vector<1x8x128xf32> to vector<8x128xf32>
      %151 = arith.addf %147, %150 : vector<8x128xf32>
      %152 = arith.index_cast %103 : i32 to index
      %c0_83 = arith.constant 0 : index
      %c0_84 = arith.constant 0 : index
      %153 = vector.load %arg6[%152, %c0_83, %c0_84] : memref<8x8x128xf32, #tpu.memory_space<vmem>>, vector<1x8x128xf32>
      %154 = vector.shape_cast %153 : vector<1x8x128xf32> to vector<8x128xf32>
      %155 = vector.shape_cast %151 : vector<8x128xf32> to vector<1x8x128xf32>
      tpu.vector_store %arg6[%152, %c0_83, %c0_84], %155 {strides = array<i32>} : memref<8x8x128xf32, #tpu.memory_space<vmem>>, vector<1x8x128xf32>,
      %c0_i32_85 = arith.constant 0 : i32
      %156 = arith.cmpi sge, %101, %c0_i32_85 : i32
      %157 = arith.cmpi slt, %101, %16 : i32
      %158 = arith.andi %156, %157 : i1
      %159 = arith.extui %158 : i1 to i32
      %160 = arith.sitofp %159 : i32 to f32
      %161 = vector.broadcast %160 : f32 to vector<8x128xf32>
      %162 = arith.mulf %161, %147 : vector<8x128xf32>
      %cst_86 = arith.constant 1.000000e+00 : f32
      %163 = arith.subf %cst_86, %160 : f32
      %164 = vector.broadcast %163 : f32 to vector<8x128xf32>
      %165 = arith.mulf %164, %arg12 : vector<8x128xf32>
      %166 = arith.addf %162, %165 : vector<8x128xf32>
      %167 = vector.broadcast %160 : f32 to vector<8x128xf32>
      %168 = arith.mulf %167, %145 : vector<8x128xf32>
      %cst_87 = arith.constant 1.000000e+00 : f32
      %169 = arith.subf %cst_87, %160 : f32
      %170 = vector.broadcast %169 : f32 to vector<8x128xf32>
      %171 = arith.mulf %170, %arg14 : vector<8x128xf32>
      %172 = arith.addf %168, %171 : vector<8x128xf32>
      scf.yield %94, %166, %100, %172 : vector<8x128xf32>, vector<8x128xf32>, vector<8x128xf32>, vector<8x128xf32>
    }
    %c0_26 = arith.constant 0 : index
    %c0_27 = arith.constant 0 : index
    %c0_28 = arith.constant 0 : index
    %29 = vector.load %arg7[%c0_26, %c0_27, %c0_28] : memref<2x8x128xf32, #tpu.memory_space<vmem>>, vector<1x8x128xf32>
    %30 = vector.shape_cast %29 : vector<1x8x128xf32> to vector<8x128xf32>
    %31 = vector.shape_cast %28#0 : vector<8x128xf32> to vector<1x8x128xf32>
    tpu.vector_store %arg7[%c0_26, %c0_27, %c0_28], %31 {strides = array<i32>} : memref<2x8x128xf32, #tpu.memory_space<vmem>>, vector<1x8x128xf32>,
    %c0_29 = arith.constant 0 : index
    %c0_30 = arith.constant 0 : index
    %c0_31 = arith.constant 0 : index
    %32 = vector.load %arg8[%c0_29, %c0_30, %c0_31] : memref<2x8x128xf32, #tpu.memory_space<vmem>>, vector<1x8x128xf32>
    %33 = vector.shape_cast %32 : vector<1x8x128xf32> to vector<8x128xf32>
    %34 = vector.shape_cast %28#2 : vector<8x128xf32> to vector<1x8x128xf32>
    tpu.vector_store %arg8[%c0_29, %c0_30, %c0_31], %34 {strides = array<i32>} : memref<2x8x128xf32, #tpu.memory_space<vmem>>, vector<1x8x128xf32>,
    %c1_32 = arith.constant 1 : index
    %c0_33 = arith.constant 0 : index
    %c0_34 = arith.constant 0 : index
    %35 = vector.load %arg7[%c1_32, %c0_33, %c0_34] : memref<2x8x128xf32, #tpu.memory_space<vmem>>, vector<1x8x128xf32>
    %36 = vector.shape_cast %35 : vector<1x8x128xf32> to vector<8x128xf32>
    %37 = vector.shape_cast %28#1 : vector<8x128xf32> to vector<1x8x128xf32>
    tpu.vector_store %arg7[%c1_32, %c0_33, %c0_34], %37 {strides = array<i32>} : memref<2x8x128xf32, #tpu.memory_space<vmem>>, vector<1x8x128xf32>,
    %c1_35 = arith.constant 1 : index
    %c0_36 = arith.constant 0 : index
    %c0_37 = arith.constant 0 : index
    %38 = vector.load %arg8[%c1_35, %c0_36, %c0_37] : memref<2x8x128xf32, #tpu.memory_space<vmem>>, vector<1x8x128xf32>
    %39 = vector.shape_cast %38 : vector<1x8x128xf32> to vector<8x128xf32>
    %40 = vector.shape_cast %28#3 : vector<8x128xf32> to vector<1x8x128xf32>
    tpu.vector_store %arg8[%c1_35, %c0_36, %c0_37], %40 {strides = array<i32>} : memref<2x8x128xf32, #tpu.memory_space<vmem>>, vector<1x8x128xf32>,
    return
  }
  func.func @transform_0(%arg0: i32, %arg1: i32) -> (i32, i32, i32) {
    %c0_i32 = arith.constant 0 : i32
    %c0_i32_0 = arith.constant 0 : i32
    return %arg1, %arg0, %c0_i32 : i32, i32, i32
  }
  func.func @transform_1(%arg0: i32, %arg1: i32) -> (i32, i32, i32) {
    %c0_i32 = arith.constant 0 : i32
    %c0_i32_0 = arith.constant 0 : i32
    %c0_i32_1 = arith.constant 0 : i32
    %c0_i32_2 = arith.constant 0 : i32
    return %c0_i32, %c0_i32_0, %c0_i32_1 : i32, i32, i32
  }
  func.func @transform_2(%arg0: i32, %arg1: i32) -> (i32, i32, i32) {
    %c0_i32 = arith.constant 0 : i32
    %c0_i32_0 = arith.constant 0 : i32
    %c0_i32_1 = arith.constant 0 : i32
    %c0_i32_2 = arith.constant 0 : i32
    return %c0_i32, %c0_i32_0, %c0_i32_1 : i32, i32, i32
  }
  func.func @transform_3(%arg0: i32, %arg1: i32) -> (i32, i32, i32) {
    %c0_i32 = arith.constant 0 : i32
    %c0_i32_0 = arith.constant 0 : i32
    %c0_i32_1 = arith.constant 0 : i32
    %c0_i32_2 = arith.constant 0 : i32
    return %c0_i32, %c0_i32_0, %c0_i32_1 : i32, i32, i32
  }
  func.func @transform_4(%arg0: i32, %arg1: i32) -> (i32, i32, i32) {
    %c0_i32 = arith.constant 0 : i32
    %c0_i32_0 = arith.constant 0 : i32
    return %arg1, %arg0, %c0_i32 : i32, i32, i32
  }
}

</mosaic_0001>

<llo_original>
// kernel: tpu_custom_call.1
$region0: #{tpu_custom_call.1}
  #allocation0 [shape = 'u32[]', space=smem, size = 0x4, offset = 0x4, fixed_abs, tag = 'smem constant byte address 0x4 - core index']
  #allocation1 [shape = 'u32[144,128]{1,0:T(1,128)}', space=vmem, size = 0x12000, scoped, tag = 'internal scratch']
  #allocation2 [shape = 'f32[2,8,128]{2,1,0:T(8,128)}', space=vmem, size = 0x2000, scoped, tag = 'scratch operand']
  #allocation3 [shape = 'f32[2,8,128]{2,1,0:T(8,128)}', space=vmem, size = 0x2000, scoped, tag = 'scratch operand']
  #allocation4 [shape = 'f32[64,512]{1,0:T(8,128)}', space=vmem, size = 0x20000, scoped, tag = 'scratch operand']
  %s0 = inlined_call_operand.hbm [shape: f32[8,8,128], index: 0, kind: input, shape index: {}]
  %s1 = inlined_call_operand.hbm [shape: bf16[2,128,512], index: 1, kind: input, shape index: {}]
  %s2 = inlined_call_operand.hbm [shape: bf16[2,128,512], index: 2, kind: input, shape index: {}]
  %s3 = inlined_call_operand.vmem [shape: f32[2,1,512], index: 3, kind: input, shape index: {}]
  %s4 = inlined_call_operand.hbm [shape: f32[8,8,128], index: 4, kind: output, shape index: {}]
  %s5 = sld [smem:[#allocation0]]
  $region49: #{tpu_custom_call.1} parent=0
    _
  %s7 = ssub.s32 1, %s5
  %s8 = scalar_select 0, %s7, %s5
  $region1: #{tpu_custom_call.1} parent=0
    #allocation5 [shape = 'u8[32768]{0}', space=vmem, size = 0x8000, scoped, tag = 'input window, operand 0, single buffered']
    #allocation6 [shape = 's32[1]{0}', space=sflag, size = 0x4, scoped, tag = 'scoped memory for tpu_custom_call.1']
    #allocation7 [shape = 's32[1]{0}', space=sflag, size = 0x4, scoped, tag = 'scoped memory for tpu_custom_call.1']
    #allocation8 [shape = 'u8[262144]{0}', space=vmem, size = 0x40000, scoped, tag = 'input window, operand 1, single buffered']
    #allocation9 [shape = 's32[1]{0}', space=sflag, size = 0x4, scoped, tag = 'scoped memory for tpu_custom_call.1']
    #allocation10 [shape = 'u8[262144]{0}', space=vmem, size = 0x40000, scoped, tag = 'input window, operand 2, single buffered']
    #allocation11 [shape = 'u8[32768]{0}', space=vmem, size = 0x8000, scoped, tag = 'output window, operand 0, single buffered']
    %9 = vsyncpa [#allocation6], 0
    %10 = vsyncpa [#allocation9], 0
    %11 = vsyncpa [#allocation7], 0
    // Predicated region
    $region2: #{tpu_custom_call.1} parent=1 // pred_check
      _
    $region3: #{tpu_custom_call.1} parent=1 // pred_check_branch
      %13 = sbr.rel (0) target = $region5
    $region4: #{tpu_custom_call.1} parent=1 // pred_region
      %s15 = ssub.s32 1024, 1024
      %16 = vsyncadd [#allocation6], %s15
      %s17 = sshll.u32 [#allocation5], 4
      %s18 = int_to_ptr.vmem [resolvable:$true] %s17
      %23 = dma.hbm_to_vmem [thread:$0]  %s0, 1024, %s18, [#allocation6], 128, 128, 8
    $region5: #{tpu_custom_call.1} parent=1 // pred_fallthru
      _
    // Predicated region
    $region6: #{tpu_custom_call.1} parent=1 // pred_check
      _
    $region7: #{tpu_custom_call.1} parent=1 // pred_check_branch
      %25 = sbr.rel (0) target = $region9
    $region8: #{tpu_custom_call.1} parent=1 // pred_region
      %s27 = ssub.s32 8192, 8192
      %28 = vsyncadd [#allocation9], %s27
      %s29 = sshll.u32 [#allocation8], 4
      %s30 = int_to_ptr.vmem [resolvable:$true] %s29
      %35 = dma.hbm_to_vmem [thread:$0]  %s1, 8192, %s30, [#allocation9], 256, 256, 16
    $region9: #{tpu_custom_call.1} parent=1 // pred_fallthru
      _
    // Predicated region
    $region10: #{tpu_custom_call.1} parent=1 // pred_check
      _
    $region11: #{tpu_custom_call.1} parent=1 // pred_check_branch
      %37 = sbr.rel (0) target = $region13
    $region12: #{tpu_custom_call.1} parent=1 // pred_region
      %s39 = ssub.s32 8192, 8192
      %40 = vsyncadd [#allocation9], %s39
      %s41 = sshll.u32 [#allocation10], 4
      %s42 = int_to_ptr.vmem [resolvable:$true] %s41
      %47 = dma.hbm_to_vmem [thread:$0]  %s2, 8192, %s42, [#allocation9], 256, 256, 16
    $region13: #{tpu_custom_call.1} parent=1 // pred_fallthru
      _
    // Predicated region
    $region14: #{tpu_custom_call.1} parent=1 // pred_check
      _
    $region15: #{tpu_custom_call.1} parent=1 // pred_check_branch
      %49 = sbr.rel (0) target = $region17
    $region16: #{tpu_custom_call.1} parent=1 // pred_region
      _
    $region17: #{tpu_custom_call.1} parent=1 // pred_fallthru
      _
    // Predicated region
    $region18: #{tpu_custom_call.1} parent=1 // pred_check
      _
    $region19: #{tpu_custom_call.1} parent=1 // pred_check_branch
      %51 = sbr.rel (0) target = $region21
    $region20: #{tpu_custom_call.1} parent=1 // pred_region
      %52 = dma.done [#allocation6], 1024
    $region21: #{tpu_custom_call.1} parent=1 // pred_fallthru
      _
    // Predicated region
    $region22: #{tpu_custom_call.1} parent=1 // pred_check
      _
    $region23: #{tpu_custom_call.1} parent=1 // pred_check_branch
      %54 = sbr.rel (0) target = $region25
    $region24: #{tpu_custom_call.1} parent=1 // pred_region
      %55 = dma.done [#allocation9], 8192
    $region25: #{tpu_custom_call.1} parent=1 // pred_fallthru
      _
    // Predicated region
    $region26: #{tpu_custom_call.1} parent=1 // pred_check
      _
    $region27: #{tpu_custom_call.1} parent=1 // pred_check_branch
      %57 = sbr.rel (0) target = $region29
    $region28: #{tpu_custom_call.1} parent=1 // pred_region
      %58 = dma.done [#allocation9], 8192
    $region29: #{tpu_custom_call.1} parent=1 // pred_fallthru
      _
    %p60 = scmp.eq.s32.totalorder 0, 0
    // Predicated region
    $region30: #{tpu_custom_call.1} parent=1 // pred_check
      %p61 = pneg %p60
    $region31: #{tpu_custom_call.1} parent=1 // pred_check_branch
      %63 = sbr.rel (%p61) target = $region33
    $region32: #{tpu_custom_call.1} parent=1 // pred_region
      %64 = vst [vmem:[#allocation2] sm:$0xff] 0.0
      %65 = vst [vmem:[#allocation2 + $0x8] sm:$0xff] 0.0
      %66 = vst [vmem:[#allocation3] sm:$0xff] 0.0
      %67 = vst [vmem:[#allocation3 + $0x8] sm:$0xff] 0.0
    $region33: #{tpu_custom_call.1} parent=1 // pred_fallthru
      _
    %v68 = vld [vmem:[#allocation5] sm:$0xff]
    %v69 = vld [vmem:[#allocation5 + $0x8] sm:$0xff]
    %v70 = vld [vmem:[#allocation5 + $0x10] sm:$0xff]
    %v71 = vld [vmem:[#allocation5 + $0x18] sm:$0xff]
    %v72 = vld [vmem:[#allocation5 + $0x20] sm:$0xff]
    %v73 = vld [vmem:[#allocation5 + $0x28] sm:$0xff]
    %v74 = vld [vmem:[#allocation5 + $0x30] sm:$0xff]
    %v75 = vld [vmem:[#allocation5 + $0x38] sm:$0xff]
    %v76 = vpack.c.bf16 %v69, %v68
    %v77 = vpack.c.bf16 %v71, %v70
    %v78 = vpack.c.bf16 %v73, %v72
    %v79 = vpack.c.bf16 %v75, %v74
    %v80 = vld [vmem:[#allocation8] sm:$0xff]
    %v81 = vld [vmem:[#allocation8 + $0x8] sm:$0xff]
    %v82 = vld [vmem:[#allocation8 + $0x10] sm:$0xff]
    %v83 = vld [vmem:[#allocation8 + $0x18] sm:$0xff]
    %v84 = vld [vmem:[#allocation8 + $0x20] sm:$0xff]
    %v85 = vld [vmem:[#allocation8 + $0x28] sm:$0xff]
    %v86 = vld [vmem:[#allocation8 + $0x30] sm:$0xff]
    %v87 = vld [vmem:[#allocation8 + $0x38] sm:$0xff]
    %v88 = vld [vmem:[#allocation8 + $0x40] sm:$0xff]
    %v89 = vld [vmem:[#allocation8 + $0x48] sm:$0xff]
    %v90 = vld [vmem:[#allocation8 + $0x50] sm:$0xff]
    %v91 = vld [vmem:[#allocation8 + $0x58] sm:$0xff]
    %v92 = vld [vmem:[#allocation8 + $0x60] sm:$0xff]
    %v93 = vld [vmem:[#allocation8 + $0x68] sm:$0xff]
    %v94 = vld [vmem:[#allocation8 + $0x70] sm:$0xff]
    %v95 = vld [vmem:[#allocation8 + $0x78] sm:$0xff]
    %v96 = vld [vmem:[#allocation8 + $0x80] sm:$0xff]
    %v97 = vld [vmem:[#allocation8 + $0x88] sm:$0xff]
    %v98 = vld [vmem:[#allocation8 + $0x90] sm:$0xff]
    %v99 = vld [vmem:[#allocation8 + $0x98] sm:$0xff]
    %v100 = vld [vmem:[#allocation8 + $0xa0] sm:$0xff]
    %v101 = vld [vmem:[#allocation8 + $0xa8] sm:$0xff]
    %v102 = vld [vmem:[#allocation8 + $0xb0] sm:$0xff]
    %v103 = vld [vmem:[#allocation8 + $0xb8] sm:$0xff]
    %v104 = vld [vmem:[#allocation8 + $0xc0] sm:$0xff]
    %v105 = vld [vmem:[#allocation8 + $0xc8] sm:$0xff]
    %v106 = vld [vmem:[#allocation8 + $0xd0] sm:$0xff]
    %v107 = vld [vmem:[#allocation8 + $0xd8] sm:$0xff]
    %v108 = vld [vmem:[#allocation8 + $0xe0] sm:$0xff]
    %v109 = vld [vmem:[#allocation8 + $0xe8] sm:$0xff]
    %v110 = vld [vmem:[#allocation8 + $0xf0] sm:$0xff]
    %v111 = vld [vmem:[#allocation8 + $0xf8] sm:$0xff]
    %v112 = vld [vmem:[%s3] sm:$0xf]
    %v114 = vlaneseq
    %v115 = vshrl.u32 %v114, 7
    %v116 = vsub.s32 0, %v115
    %v117 = vrot.slane %v112, %v116
    %v118 = vlaneseq
    %v119 = vshrl.u32 %v118, 7
    %v120 = vsub.s32 1, %v119
    %v121 = vrot.slane %v112, %v120
    %v122 = vlaneseq
    %v123 = vshrl.u32 %v122, 7
    %v124 = vsub.s32 2, %v123
    %v125 = vrot.slane %v112, %v124
    %v126 = vlaneseq
    %v127 = vshrl.u32 %v126, 7
    %v128 = vsub.s32 3, %v127
    %v129 = vrot.slane %v112, %v128
    %v166 = vunpack.c.l.b16 %v80
    %v167 = vunpack.c.h.b16 %v80
    %v168 = vunpack.c.l.b16 %v81
    %v169 = vunpack.c.h.b16 %v81
    %v170 = vunpack.c.l.b16 %v82
    %v171 = vunpack.c.h.b16 %v82
    %v172 = vunpack.c.l.b16 %v83
    %v173 = vunpack.c.h.b16 %v83
    %v174 = vunpack.c.l.b16 %v84
    %v175 = vunpack.c.h.b16 %v84
    %v176 = vunpack.c.l.b16 %v85
    %v177 = vunpack.c.h.b16 %v85
    %v178 = vunpack.c.l.b16 %v86
    %v179 = vunpack.c.h.b16 %v86
    %v180 = vunpack.c.l.b16 %v87
    %v181 = vunpack.c.h.b16 %v87
    %v182 = vunpack.c.l.b16 %v88
    %v183 = vunpack.c.h.b16 %v88
    %v184 = vunpack.c.l.b16 %v89
    %v185 = vunpack.c.h.b16 %v89
    %v186 = vunpack.c.l.b16 %v90
    %v187 = vunpack.c.h.b16 %v90
    %v188 = vunpack.c.l.b16 %v91
    %v189 = vunpack.c.h.b16 %v91
    %v190 = vunpack.c.l.b16 %v92
    %v191 = vunpack.c.h.b16 %v92
    %v192 = vunpack.c.l.b16 %v93
    %v193 = vunpack.c.h.b16 %v93
    %v194 = vunpack.c.l.b16 %v94
    %v195 = vunpack.c.h.b16 %v94
    %v196 = vunpack.c.l.b16 %v95
    %v197 = vunpack.c.h.b16 %v95
    %v198 = vunpack.c.l.b16 %v96
    %v199 = vunpack.c.h.b16 %v96
    %v200 = vunpack.c.l.b16 %v97
    %v201 = vunpack.c.h.b16 %v97
    %v202 = vunpack.c.l.b16 %v98
    %v203 = vunpack.c.h.b16 %v98
    %v204 = vunpack.c.l.b16 %v99
    %v205 = vunpack.c.h.b16 %v99
    %v206 = vunpack.c.l.b16 %v100
    %v207 = vunpack.c.h.b16 %v100
    %v208 = vunpack.c.l.b16 %v101
    %v209 = vunpack.c.h.b16 %v101
    %v210 = vunpack.c.l.b16 %v102
    %v211 = vunpack.c.h.b16 %v102
    %v212 = vunpack.c.l.b16 %v103
    %v213 = vunpack.c.h.b16 %v103
    %v214 = vunpack.c.l.b16 %v104
    %v215 = vunpack.c.h.b16 %v104
    %v216 = vunpack.c.l.b16 %v105
    %v217 = vunpack.c.h.b16 %v105
    %v218 = vunpack.c.l.b16 %v106
    %v219 = vunpack.c.h.b16 %v106
    %v220 = vunpack.c.l.b16 %v107
    %v221 = vunpack.c.h.b16 %v107
    %v222 = vunpack.c.l.b16 %v108
    %v223 = vunpack.c.h.b16 %v108
    %v224 = vunpack.c.l.b16 %v109
    %v225 = vunpack.c.h.b16 %v109
    %v226 = vunpack.c.l.b16 %v110
    %v227 = vunpack.c.h.b16 %v110
    %v228 = vunpack.c.l.b16 %v111
    %v229 = vunpack.c.h.b16 %v111
    %v230 = vpack.c.b16 %v170, %v166
    %v231 = vpack.c.b16 %v171, %v167
    %v232 = vpack.c.b16 %v172, %v168
    %v233 = vpack.c.b16 %v173, %v169
    %v234 = vpack.c.b16 %v178, %v174
    %v235 = vpack.c.b16 %v179, %v175
    %v236 = vpack.c.b16 %v180, %v176
    %v237 = vpack.c.b16 %v181, %v177
    %v238 = vpack.c.b16 %v186, %v182
    %v239 = vpack.c.b16 %v187, %v183
    %v240 = vpack.c.b16 %v188, %v184
    %v241 = vpack.c.b16 %v189, %v185
    %v242 = vpack.c.b16 %v194, %v190
    %v243 = vpack.c.b16 %v195, %v191
    %v244 = vpack.c.b16 %v196, %v192
    %v245 = vpack.c.b16 %v197, %v193
    %v246 = vpack.c.b16 %v202, %v198
    %v247 = vpack.c.b16 %v203, %v199
    %v248 = vpack.c.b16 %v204, %v200
    %v249 = vpack.c.b16 %v205, %v201
    %v250 = vpack.c.b16 %v210, %v206
    %v251 = vpack.c.b16 %v211, %v207
    %v252 = vpack.c.b16 %v212, %v208
    %v253 = vpack.c.b16 %v213, %v209
    %v254 = vpack.c.b16 %v218, %v214
    %v255 = vpack.c.b16 %v219, %v215
    %v256 = vpack.c.b16 %v220, %v216
    %v257 = vpack.c.b16 %v221, %v217
    %v258 = vpack.c.b16 %v226, %v222
    %v259 = vpack.c.b16 %v227, %v223
    %v260 = vpack.c.b16 %v228, %v224
    %v261 = vpack.c.b16 %v229, %v225
    %294 = vmatprep.subr.bf16.mxu0 %v231
    %295 = vmatpush1.bf16.msra.mxu0 %v230
    %296 = vmatprep.subr.bf16.mxu0 %v235
    %297 = vmatpush1.bf16.msra.mxu0 %v234
    %298 = vmatprep.subr.bf16.mxu0 %v239
    %299 = vmatpush1.bf16.msra.mxu0 %v238
    %300 = vmatprep.subr.bf16.mxu0 %v243
    %301 = vmatpush1.bf16.msra.mxu0 %v242
    %302 = vmatprep.subr.bf16.mxu0 %v247
    %303 = vmatpush1.bf16.msra.mxu0 %v246
    %304 = vmatprep.subr.bf16.mxu0 %v251
    %305 = vmatpush1.bf16.msra.mxu0 %v250
    %306 = vmatprep.subr.bf16.mxu0 %v255
    %307 = vmatpush1.bf16.msra.mxu0 %v254
    %308 = vmatprep.subr.bf16.mxu0 %v259
    %309 = vmatpush1.bf16.msra.mxu0 %v258
    %310 = vmatprep.subr.bf16.mxu0 0
    %311 = vmatpush1.bf16.msra.mxu0 0
    %312 = vmatprep.subr.bf16.mxu0 0
    %313 = vmatpush1.bf16.msra.mxu0 0
    %314 = vmatprep.subr.bf16.mxu0 0
    %315 = vmatpush1.bf16.msra.mxu0 0
    %316 = vmatprep.subr.bf16.mxu0 0
    %317 = vmatpush1.bf16.msra.mxu0 0
    %318 = vmatprep.subr.bf16.mxu0 0
    %319 = vmatpush1.bf16.msra.mxu0 0
    %320 = vmatprep.subr.bf16.mxu0 0
    %321 = vmatpush1.bf16.msra.mxu0 0
    %322 = vmatprep.subr.bf16.mxu0 0
    %323 = vmatpush1.bf16.msra.mxu0 0
    %324 = vmatprep.subr.bf16.mxu0 0
    %325 = vmatpush1.bf16.msra.mxu0 0
    %326 = vmatprep.mubr.bf16.mxu0 0
    %327 = vmatmul.mubr.bf16.gmra.mrb[0].mxu0 %v76
    %v328 = vpop.f32.mrb[0].mxu0
    %v329 = vadd.f32 %v117, %v328
    %v330 = vpop.f32.mrb[0].mxu0
    %v331 = vadd.f32 %v121, %v330
    %v332 = vpop.f32.mrb[0].mxu0
    %v333 = vadd.f32 %v117, %v332
    %v334 = vpop.f32.mrb[0].mxu0
    %v335 = vadd.f32 %v121, %v334
    %336 = vmatprep.mubr.bf16.mxu0 0
    %337 = vmatmul.mubr.bf16.gmra.mrb[0].mxu0 %v77
    %v338 = vpop.f32.mrb[0].mxu0
    %v339 = vadd.f32 %v117, %v338
    %v340 = vpop.f32.mrb[0].mxu0
    %v341 = vadd.f32 %v121, %v340
    %v342 = vpop.f32.mrb[0].mxu0
    %v343 = vadd.f32 %v117, %v342
    %v344 = vpop.f32.mrb[0].mxu0
    %v345 = vadd.f32 %v121, %v344
    %346 = vmatprep.mubr.bf16.mxu0 0
    %347 = vmatmul.mubr.bf16.gmra.mrb[0].mxu0 %v78
    %v348 = vpop.f32.mrb[0].mxu0
    %v349 = vadd.f32 %v117, %v348
    %v350 = vpop.f32.mrb[0].mxu0
    %v351 = vadd.f32 %v121, %v350
    %v352 = vpop.f32.mrb[0].mxu0
    %v353 = vadd.f32 %v117, %v352
    %v354 = vpop.f32.mrb[0].mxu0
    %v355 = vadd.f32 %v121, %v354
    %356 = vmatprep.mubr.bf16.mxu0 0
    %357 = vmatmul.mubr.bf16.gmra.mrb[0].mxu0 %v79
    %v358 = vpop.f32.mrb[0].mxu0
    %v359 = vadd.f32 %v117, %v358
    %v360 = vpop.f32.mrb[0].mxu0
    %v361 = vadd.f32 %v121, %v360
    %v362 = vpop.f32.mrb[0].mxu0
    %v363 = vadd.f32 %v117, %v362
    %v364 = vpop.f32.mrb[0].mxu0
    %v365 = vadd.f32 %v121, %v364
    %366 = vdwg.mxu0
    %367 = vmatprep.subr.bf16.mxu0 %v233
    %368 = vmatpush1.bf16.msra.mxu0 %v232
    %369 = vmatprep.subr.bf16.mxu0 %v237
    %370 = vmatpush1.bf16.msra.mxu0 %v236
    %371 = vmatprep.subr.bf16.mxu0 %v241
    %372 = vmatpush1.bf16.msra.mxu0 %v240
    %373 = vmatprep.subr.bf16.mxu0 %v245
    %374 = vmatpush1.bf16.msra.mxu0 %v244
    %375 = vmatprep.subr.bf16.mxu0 %v249
    %376 = vmatpush1.bf16.msra.mxu0 %v248
    %377 = vmatprep.subr.bf16.mxu0 %v253
    %378 = vmatpush1.bf16.msra.mxu0 %v252
    %379 = vmatprep.subr.bf16.mxu0 %v257
    %380 = vmatpush1.bf16.msra.mxu0 %v256
    %381 = vmatprep.subr.bf16.mxu0 %v261
    %382 = vmatpush1.bf16.msra.mxu0 %v260
    %383 = vmatprep.subr.bf16.mxu0 0
    %384 = vmatpush1.bf16.msra.mxu0 0
    %385 = vmatprep.subr.bf16.mxu0 0
    %386 = vmatpush1.bf16.msra.mxu0 0
    %387 = vmatprep.subr.bf16.mxu0 0
    %388 = vmatpush1.bf16.msra.mxu0 0
    %389 = vmatprep.subr.bf16.mxu0 0
    %390 = vmatpush1.bf16.msra.mxu0 0
    %391 = vmatprep.subr.bf16.mxu0 0
    %392 = vmatpush1.bf16.msra.mxu0 0
    %393 = vmatprep.subr.bf16.mxu0 0
    %394 = vmatpush1.bf16.msra.mxu0 0
    %395 = vmatprep.subr.bf16.mxu0 0
    %396 = vmatpush1.bf16.msra.mxu0 0
    %397 = vmatprep.subr.bf16.mxu0 0
    %398 = vmatpush1.bf16.msra.mxu0 0
    %399 = vmatprep.mubr.bf16.mxu0 0
    %400 = vmatmul.mubr.bf16.gmra.mrb[0].mxu0 %v76
    %v401 = vpop.f32.mrb[0].mxu0
    %v402 = vadd.f32 %v125, %v401
    %v403 = vpop.f32.mrb[0].mxu0
    %v404 = vadd.f32 %v129, %v403
    %v405 = vpop.f32.mrb[0].mxu0
    %v406 = vadd.f32 %v125, %v405
    %v407 = vpop.f32.mrb[0].mxu0
    %v408 = vadd.f32 %v129, %v407
    %409 = vmatprep.mubr.bf16.mxu0 0
    %410 = vmatmul.mubr.bf16.gmra.mrb[0].mxu0 %v77
    %v411 = vpop.f32.mrb[0].mxu0
    %v412 = vadd.f32 %v125, %v411
    %v413 = vpop.f32.mrb[0].mxu0
    %v414 = vadd.f32 %v129, %v413
    %v415 = vpop.f32.mrb[0].mxu0
    %v416 = vadd.f32 %v125, %v415
    %v417 = vpop.f32.mrb[0].mxu0
    %v418 = vadd.f32 %v129, %v417
    %419 = vmatprep.mubr.bf16.mxu0 0
    %420 = vmatmul.mubr.bf16.gmra.mrb[0].mxu0 %v78
    %v421 = vpop.f32.mrb[0].mxu0
    %v422 = vadd.f32 %v125, %v421
    %v423 = vpop.f32.mrb[0].mxu0
    %v424 = vadd.f32 %v129, %v423
    %v425 = vpop.f32.mrb[0].mxu0
    %v426 = vadd.f32 %v125, %v425
    %v427 = vpop.f32.mrb[0].mxu0
    %v428 = vadd.f32 %v129, %v427
    %429 = vmatprep.mubr.bf16.mxu0 0
    %430 = vmatmul.mubr.bf16.gmra.mrb[0].mxu0 %v79
    %v431 = vpop.f32.mrb[0].mxu0
    %v432 = vadd.f32 %v125, %v431
    %v433 = vpop.f32.mrb[0].mxu0
    %v434 = vadd.f32 %v129, %v433
    %v435 = vpop.f32.mrb[0].mxu0
    %v436 = vadd.f32 %v125, %v435
    %v437 = vpop.f32.mrb[0].mxu0
    %v438 = vadd.f32 %v129, %v437
    %439 = vdwg.mxu0
    %440 = vst [vmem:[#allocation4] sm:$0xff] %v329
    %441 = vst [vmem:[#allocation4 + $0x8] sm:$0xff] %v331
    %442 = vst [vmem:[#allocation4 + $0x10] sm:$0xff] %v402
    %443 = vst [vmem:[#allocation4 + $0x18] sm:$0xff] %v404
    %444 = vst [vmem:[#allocation4 + $0x20] sm:$0xff] %v333
    %445 = vst [vmem:[#allocation4 + $0x28] sm:$0xff] %v335
    %446 = vst [vmem:[#allocation4 + $0x30] sm:$0xff] %v406
    %447 = vst [vmem:[#allocation4 + $0x38] sm:$0xff] %v408
    %448 = vst [vmem:[#allocation4 + $0x40] sm:$0xff] %v339
    %449 = vst [vmem:[#allocation4 + $0x48] sm:$0xff] %v341
    %450 = vst [vmem:[#allocation4 + $0x50] sm:$0xff] %v412
    %451 = vst [vmem:[#allocation4 + $0x58] sm:$0xff] %v414
    %452 = vst [vmem:[#allocation4 + $0x60] sm:$0xff] %v343
    %453 = vst [vmem:[#allocation4 + $0x68] sm:$0xff] %v345
    %454 = vst [vmem:[#allocation4 + $0x70] sm:$0xff] %v416
    %455 = vst [vmem:[#allocation4 + $0x78] sm:$0xff] %v418
    %456 = vst [vmem:[#allocation4 + $0x80] sm:$0xff] %v349
    %457 = vst [vmem:[#allocation4 + $0x88] sm:$0xff] %v351
    %458 = vst [vmem:[#allocation4 + $0x90] sm:$0xff] %v422
    %459 = vst [vmem:[#allocation4 + $0x98] sm:$0xff] %v424
    %460 = vst [vmem:[#allocation4 + $0xa0] sm:$0xff] %v353
    %461 = vst [vmem:[#allocation4 + $0xa8] sm:$0xff] %v355
    %462 = vst [vmem:[#allocation4 + $0xb0] sm:$0xff] %v426
    %463 = vst [vmem:[#allocation4 + $0xb8] sm:$0xff] %v428
    %464 = vst [vmem:[#allocation4 + $0xc0] sm:$0xff] %v359
    %465 = vst [vmem:[#allocation4 + $0xc8] sm:$0xff] %v361
    %466 = vst [vmem:[#allocation4 + $0xd0] sm:$0xff] %v432
    %467 = vst [vmem:[#allocation4 + $0xd8] sm:$0xff] %v434
    %468 = vst [vmem:[#allocation4 + $0xe0] sm:$0xff] %v363
    %469 = vst [vmem:[#allocation4 + $0xe8] sm:$0xff] %v365
    %470 = vst [vmem:[#allocation4 + $0xf0] sm:$0xff] %v436
    %471 = vst [vmem:[#allocation4 + $0xf8] sm:$0xff] %v438
    %s472 = smul.u32 0, 8
    %s473 = ssub.s32 8, %s472
    %p474 = scmp.lt.s32.totalorder %s473, 8
    %s475 = scalar_select %p474, %s473, 8
    %v476 = vld [vmem:[#allocation2] sm:$0xff]
    %s477 = scalar_lea.vmem [#allocation2], 8
    %v478 = vld [vmem:[%s477] sm:$0xff]
    %v479 = vld [vmem:[#allocation3] sm:$0xff]
    %s480 = scalar_lea.vmem [#allocation3], 8
    %v481 = vld [vmem:[%s480] sm:$0xff]
    %s482 = sadd.s32 %s475, 1
    // While loop
    $region34: #{tpu_custom_call.1} parent=1 // loop_pre_header
      _
    $region35: #{tpu_custom_call.1} parent=1 // loop_header
      %s484 = sphi 0, %s486
      %p485 = scmp.ge.s32.totalorder %s484, %s482
      %v489 = vphi %v476, %v815
      %v490 = vphi %v478, %v1437
      %v491 = vphi %v479, %v818
      %v492 = vphi %v481, %v1440
    $region36: #{tpu_custom_call.1} parent=1 // loop_header_branch
      %488 = sbr.rel (%p485) target = $region40
    $region37: #{tpu_custom_call.1} parent=1 // loop_body
      %p493 = scmp.gt.s32.totalorder %s484, 0
      %s494 = scalar_select %p493, %s484, 0
      %p495 = scmp.lt.s32.totalorder %s494, 7
      %s496 = scalar_select %p495, %s494, 7
      %s497 = smul.u32 %s496, 8
      %s498 = sshra.s32 %s497, 3
      %s499 = sand.u32 %s497, 7
      %s500 = smul.u32 %s498, 4
      %s501 = smul.addr %s500, 8
      %s502 = scalar_lea.vmem [#allocation4], %s501
      %v503 = vld [vmem:[%s502] sm:$0xff]
      %v504 = vld [vmem:[%s502 + $0x8] sm:$0xff]
      %v505 = vld [vmem:[%s502 + $0x10] sm:$0xff]
      %v506 = vld [vmem:[%s502 + $0x18] sm:$0xff]
      %v507 = vpack.c.bf16 %v489, %v489
      %v508 = vld [vmem:[#allocation10] sm:$0xff]
      %v509 = vld [vmem:[#allocation10 + $0x8] sm:$0xff]
      %v510 = vld [vmem:[#allocation10 + $0x10] sm:$0xff]
      %v511 = vld [vmem:[#allocation10 + $0x18] sm:$0xff]
      %v512 = vld [vmem:[#allocation10 + $0x20] sm:$0xff]
      %v513 = vld [vmem:[#allocation10 + $0x28] sm:$0xff]
      %v514 = vld [vmem:[#allocation10 + $0x30] sm:$0xff]
      %v515 = vld [vmem:[#allocation10 + $0x38] sm:$0xff]
      %v516 = vld [vmem:[#allocation10 + $0x40] sm:$0xff]
      %v517 = vld [vmem:[#allocation10 + $0x48] sm:$0xff]
      %v518 = vld [vmem:[#allocation10 + $0x50] sm:$0xff]
      %v519 = vld [vmem:[#allocation10 + $0x58] sm:$0xff]
      %v520 = vld [vmem:[#allocation10 + $0x60] sm:$0xff]
      %v521 = vld [vmem:[#allocation10 + $0x68] sm:$0xff]
      %v522 = vld [vmem:[#allocation10 + $0x70] sm:$0xff]
      %v523 = vld [vmem:[#allocation10 + $0x78] sm:$0xff]
      %v524 = vld [vmem:[#allocation10 + $0x80] sm:$0xff]
      %v525 = vld [vmem:[#allocation10 + $0x88] sm:$0xff]
      %v526 = vld [vmem:[#allocation10 + $0x90] sm:$0xff]
      %v527 = vld [vmem:[#allocation10 + $0x98] sm:$0xff]
      %v528 = vld [vmem:[#allocation10 + $0xa0] sm:$0xff]
      %v529 = vld [vmem:[#allocation10 + $0xa8] sm:$0xff]
      %v530 = vld [vmem:[#allocation10 + $0xb0] sm:$0xff]
      %v531 = vld [vmem:[#allocation10 + $0xb8] sm:$0xff]
      %v532 = vld [vmem:[#allocation10 + $0xc0] sm:$0xff]
      %v533 = vld [vmem:[#allocation10 + $0xc8] sm:$0xff]
      %v534 = vld [vmem:[#allocation10 + $0xd0] sm:$0xff]
      %v535 = vld [vmem:[#allocation10 + $0xd8] sm:$0xff]
      %v536 = vld [vmem:[#allocation10 + $0xe0] sm:$0xff]
      %v537 = vld [vmem:[#allocation10 + $0xe8] sm:$0xff]
      %v538 = vld [vmem:[#allocation10 + $0xf0] sm:$0xff]
      %v539 = vld [vmem:[#allocation10 + $0xf8] sm:$0xff]
      %v572 = vunpack.c.l.b16 %v508
      %v573 = vunpack.c.h.b16 %v508
      %v574 = vunpack.c.l.b16 %v509
      %v575 = vunpack.c.h.b16 %v509
      %v576 = vunpack.c.l.b16 %v510
      %v577 = vunpack.c.h.b16 %v510
      %v578 = vunpack.c.l.b16 %v511
      %v579 = vunpack.c.h.b16 %v511
      %v580 = vunpack.c.l.b16 %v512
      %v581 = vunpack.c.h.b16 %v512
      %v582 = vunpack.c.l.b16 %v513
      %v583 = vunpack.c.h.b16 %v513
      %v584 = vunpack.c.l.b16 %v514
      %v585 = vunpack.c.h.b16 %v514
      %v586 = vunpack.c.l.b16 %v515
      %v587 = vunpack.c.h.b16 %v515
      %v588 = vunpack.c.l.b16 %v516
      %v589 = vunpack.c.h.b16 %v516
      %v590 = vunpack.c.l.b16 %v517
      %v591 = vunpack.c.h.b16 %v517
      %v592 = vunpack.c.l.b16 %v518
      %v593 = vunpack.c.h.b16 %v518
      %v594 = vunpack.c.l.b16 %v519
      %v595 = vunpack.c.h.b16 %v519
      %v596 = vunpack.c.l.b16 %v520
      %v597 = vunpack.c.h.b16 %v520
      %v598 = vunpack.c.l.b16 %v521
      %v599 = vunpack.c.h.b16 %v521
      %v600 = vunpack.c.l.b16 %v522
      %v601 = vunpack.c.h.b16 %v522
      %v602 = vunpack.c.l.b16 %v523
      %v603 = vunpack.c.h.b16 %v523
      %v604 = vunpack.c.l.b16 %v524
      %v605 = vunpack.c.h.b16 %v524
      %v606 = vunpack.c.l.b16 %v525
      %v607 = vunpack.c.h.b16 %v525
      %v608 = vunpack.c.l.b16 %v526
      %v609 = vunpack.c.h.b16 %v526
      %v610 = vunpack.c.l.b16 %v527
      %v611 = vunpack.c.h.b16 %v527
      %v612 = vunpack.c.l.b16 %v528
      %v613 = vunpack.c.h.b16 %v528
      %v614 = vunpack.c.l.b16 %v529
      %v615 = vunpack.c.h.b16 %v529
      %v616 = vunpack.c.l.b16 %v530
      %v617 = vunpack.c.h.b16 %v530
      %v618 = vunpack.c.l.b16 %v531
      %v619 = vunpack.c.h.b16 %v531
      %v620 = vunpack.c.l.b16 %v532
      %v621 = vunpack.c.h.b16 %v532
      %v622 = vunpack.c.l.b16 %v533
      %v623 = vunpack.c.h.b16 %v533
      %v624 = vunpack.c.l.b16 %v534
      %v625 = vunpack.c.h.b16 %v534
      %v626 = vunpack.c.l.b16 %v535
      %v627 = vunpack.c.h.b16 %v535
      %v628 = vunpack.c.l.b16 %v536
      %v629 = vunpack.c.h.b16 %v536
      %v630 = vunpack.c.l.b16 %v537
      %v631 = vunpack.c.h.b16 %v537
      %v632 = vunpack.c.l.b16 %v538
      %v633 = vunpack.c.h.b16 %v538
      %v634 = vunpack.c.l.b16 %v539
      %v635 = vunpack.c.h.b16 %v539
      %v636 = vpack.c.b16 %v576, %v572
      %v637 = vpack.c.b16 %v577, %v573
      %v638 = vpack.c.b16 %v578, %v574
      %v639 = vpack.c.b16 %v579, %v575
      %v640 = vpack.c.b16 %v584, %v580
      %v641 = vpack.c.b16 %v585, %v581
      %v642 = vpack.c.b16 %v586, %v582
      %v643 = vpack.c.b16 %v587, %v583
      %v644 = vpack.c.b16 %v592, %v588
      %v645 = vpack.c.b16 %v593, %v589
      %v646 = vpack.c.b16 %v594, %v590
      %v647 = vpack.c.b16 %v595, %v591
      %v648 = vpack.c.b16 %v600, %v596
      %v649 = vpack.c.b16 %v601, %v597
      %v650 = vpack.c.b16 %v602, %v598
      %v651 = vpack.c.b16 %v603, %v599
      %v652 = vpack.c.b16 %v608, %v604
      %v653 = vpack.c.b16 %v609, %v605
      %v654 = vpack.c.b16 %v610, %v606
      %v655 = vpack.c.b16 %v611, %v607
      %v656 = vpack.c.b16 %v616, %v612
      %v657 = vpack.c.b16 %v617, %v613
      %v658 = vpack.c.b16 %v618, %v614
      %v659 = vpack.c.b16 %v619, %v615
      %v660 = vpack.c.b16 %v624, %v620
      %v661 = vpack.c.b16 %v625, %v621
      %v662 = vpack.c.b16 %v626, %v622
      %v663 = vpack.c.b16 %v627, %v623
      %v664 = vpack.c.b16 %v632, %v628
      %v665 = vpack.c.b16 %v633, %v629
      %v666 = vpack.c.b16 %v634, %v630
      %v667 = vpack.c.b16 %v635, %v631
      %700 = vmatprep.subr.bf16.mxu0 %v637
      %701 = vmatpush1.bf16.msra.mxu0 %v636
      %702 = vmatprep.subr.bf16.mxu0 %v641
      %703 = vmatpush1.bf16.msra.mxu0 %v640
      %704 = vmatprep.subr.bf16.mxu0 %v645
      %705 = vmatpush1.bf16.msra.mxu0 %v644
      %706 = vmatprep.subr.bf16.mxu0 %v649
      %707 = vmatpush1.bf16.msra.mxu0 %v648
      %708 = vmatprep.subr.bf16.mxu0 %v653
      %709 = vmatpush1.bf16.msra.mxu0 %v652
      %710 = vmatprep.subr.bf16.mxu0 %v657
      %711 = vmatpush1.bf16.msra.mxu0 %v656
      %712 = vmatprep.subr.bf16.mxu0 %v661
      %713 = vmatpush1.bf16.msra.mxu0 %v660
      %714 = vmatprep.subr.bf16.mxu0 %v665
      %715 = vmatpush1.bf16.msra.mxu0 %v664
      %716 = vmatprep.subr.bf16.mxu0 0
      %717 = vmatpush1.bf16.msra.mxu0 0
      %718 = vmatprep.subr.bf16.mxu0 0
      %719 = vmatpush1.bf16.msra.mxu0 0
      %720 = vmatprep.subr.bf16.mxu0 0
      %721 = vmatpush1.bf16.msra.mxu0 0
      %722 = vmatprep.subr.bf16.mxu0 0
      %723 = vmatpush1.bf16.msra.mxu0 0
      %724 = vmatprep.subr.bf16.mxu0 0
      %725 = vmatpush1.bf16.msra.mxu0 0
      %726 = vmatprep.subr.bf16.mxu0 0
      %727 = vmatpush1.bf16.msra.mxu0 0
      %728 = vmatprep.subr.bf16.mxu0 0
      %729 = vmatpush1.bf16.msra.mxu0 0
      %730 = vmatprep.subr.bf16.mxu0 0
      %731 = vmatpush1.bf16.msra.mxu0 0
      %732 = vmatprep.mubr.bf16.mxu0 0
      %733 = vmatmul.mubr.bf16.gmra.mrb[0].mxu0 %v507
      %v734 = vpop.f32.mrb[0].mxu0
      %v735 = vadd.f32 0.0, %v734
      %v736 = vpop.f32.mrb[0].mxu0
      %v737 = vadd.f32 0.0, %v736
      %v738 = vpop.f32.mrb[0].mxu0
      %v739 = vpop.f32.mrb[0].mxu0
      %740 = vdwg.mxu0
      %741 = vmatprep.subr.bf16.mxu0 %v639
      %742 = vmatpush1.bf16.msra.mxu0 %v638
      %743 = vmatprep.subr.bf16.mxu0 %v643
      %744 = vmatpush1.bf16.msra.mxu0 %v642
      %745 = vmatprep.subr.bf16.mxu0 %v647
      %746 = vmatpush1.bf16.msra.mxu0 %v646
      %747 = vmatprep.subr.bf16.mxu0 %v651
      %748 = vmatpush1.bf16.msra.mxu0 %v650
      %749 = vmatprep.subr.bf16.mxu0 %v655
      %750 = vmatpush1.bf16.msra.mxu0 %v654
      %751 = vmatprep.subr.bf16.mxu0 %v659
      %752 = vmatpush1.bf16.msra.mxu0 %v658
      %753 = vmatprep.subr.bf16.mxu0 %v663
      %754 = vmatpush1.bf16.msra.mxu0 %v662
      %755 = vmatprep.subr.bf16.mxu0 %v667
      %756 = vmatpush1.bf16.msra.mxu0 %v666
      %757 = vmatprep.subr.bf16.mxu0 0
      %758 = vmatpush1.bf16.msra.mxu0 0
      %759 = vmatprep.subr.bf16.mxu0 0
      %760 = vmatpush1.bf16.msra.mxu0 0
      %761 = vmatprep.subr.bf16.mxu0 0
      %762 = vmatpush1.bf16.msra.mxu0 0
      %763 = vmatprep.subr.bf16.mxu0 0
      %764 = vmatpush1.bf16.msra.mxu0 0
      %765 = vmatprep.subr.bf16.mxu0 0
      %766 = vmatpush1.bf16.msra.mxu0 0
      %767 = vmatprep.subr.bf16.mxu0 0
      %768 = vmatpush1.bf16.msra.mxu0 0
      %769 = vmatprep.subr.bf16.mxu0 0
      %770 = vmatpush1.bf16.msra.mxu0 0
      %771 = vmatprep.subr.bf16.mxu0 0
      %772 = vmatpush1.bf16.msra.mxu0 0
      %773 = vmatprep.mubr.bf16.mxu0 0
      %774 = vmatmul.mubr.bf16.gmra.mrb[0].mxu0 %v507
      %v775 = vpop.f32.mrb[0].mxu0
      %v776 = vadd.f32 0.0, %v775
      %v777 = vpop.f32.mrb[0].mxu0
      %v778 = vadd.f32 0.0, %v777
      %v779 = vpop.f32.mrb[0].mxu0
      %v780 = vpop.f32.mrb[0].mxu0
      %781 = vdwg.mxu0
      %v782 = vadd.f32 %v503, %v735
      %v783 = vadd.f32 %v504, %v737
      %v784 = vadd.f32 %v505, %v776
      %v785 = vadd.f32 %v506, %v778
      %v786 = vmul.f32 %v782, 0.5
      %v787 = vtanh.pop %v786
      %v788 = vmul.f32 %v787, 0.5
      %v789 = vadd.f32 %v788, 0.5
      %v790 = vmul.f32 %v783, 0.5
      %v791 = vtanh.pop %v790
      %v792 = vmul.f32 %v791, 0.5
      %v793 = vadd.f32 %v792, 0.5
      %v794 = vtanh.pop %v784
      %v795 = vmul.f32 %v785, 0.5
      %v796 = vtanh.pop %v795
      %v797 = vmul.f32 %v796, 0.5
      %v798 = vadd.f32 %v797, 0.5
      %v799 = vmul.f32 %v793, %v491
      %v800 = vmul.f32 %v789, %v794
      %v801 = vadd.f32 %v799, %v800
      %v802 = vtanh.pop %v801
      %v803 = vmul.f32 %v798, %v802
      %p804 = scmp.ge.s32.totalorder %s484, 0
      %p805 = scmp.lt.s32.totalorder %s484, %s475
      %p806 = pnand %p804, %p805
      %p807 = pneg %p806
      %s808 = scalar_select %p807, 1, 0
      %s809 = scvt.s32.f32 %s808
      %v810 = vstv %s809
      %v811 = vmul.f32 %v810, %v803
      %s812 = ssub.f32 1.0, %s809
      %v813 = vstv %s812
      %v814 = vmul.f32 %v813, %v489
      %v815 = vadd.f32 %v811, %v814
      %v816 = vmul.f32 %v810, %v801
      %v817 = vmul.f32 %v813, %v491
      %v818 = vadd.f32 %v816, %v817
      %s819 = ssub.s32 %s484, 1
      %p820 = scmp.gt.s32.totalorder %s819, 0
      %s821 = scalar_select %p820, %s819, 0
      %p822 = scmp.lt.s32.totalorder %s821, 7
      %s823 = scalar_select %p822, %s821, 7
      %s824 = scalar_lea.vmem [#allocation8], 256
      %v825 = vld [vmem:[%s824] sm:$0xff]
      %v826 = vld [vmem:[%s824 + $0x8] sm:$0xff]
      %v827 = vld [vmem:[%s824 + $0x10] sm:$0xff]
      %v828 = vld [vmem:[%s824 + $0x18] sm:$0xff]
      %v829 = vld [vmem:[%s824 + $0x20] sm:$0xff]
      %v830 = vld [vmem:[%s824 + $0x28] sm:$0xff]
      %v831 = vld [vmem:[%s824 + $0x30] sm:$0xff]
      %v832 = vld [vmem:[%s824 + $0x38] sm:$0xff]
      %v833 = vld [vmem:[%s824 + $0x40] sm:$0xff]
      %v834 = vld [vmem:[%s824 + $0x48] sm:$0xff]
      %v835 = vld [vmem:[%s824 + $0x50] sm:$0xff]
      %v836 = vld [vmem:[%s824 + $0x58] sm:$0xff]
      %v837 = vld [vmem:[%s824 + $0x60] sm:$0xff]
      %v838 = vld [vmem:[%s824 + $0x68] sm:$0xff]
      %v839 = vld [vmem:[%s824 + $0x70] sm:$0xff]
      %v840 = vld [vmem:[%s824 + $0x78] sm:$0xff]
      %v841 = vld [vmem:[%s824 + $0x80] sm:$0xff]
      %v842 = vld [vmem:[%s824 + $0x88] sm:$0xff]
      %v843 = vld [vmem:[%s824 + $0x90] sm:$0xff]
      %v844 = vld [vmem:[%s824 + $0x98] sm:$0xff]
      %v845 = vld [vmem:[%s824 + $0xa0] sm:$0xff]
      %v846 = vld [vmem:[%s824 + $0xa8] sm:$0xff]
      %v847 = vld [vmem:[%s824 + $0xb0] sm:$0xff]
      %v848 = vld [vmem:[%s824 + $0xb8] sm:$0xff]
      %v849 = vld [vmem:[%s824 + $0xc0] sm:$0xff]
      %v850 = vld [vmem:[%s824 + $0xc8] sm:$0xff]
      %v851 = vld [vmem:[%s824 + $0xd0] sm:$0xff]
      %v852 = vld [vmem:[%s824 + $0xd8] sm:$0xff]
      %v853 = vld [vmem:[%s824 + $0xe0] sm:$0xff]
      %v854 = vld [vmem:[%s824 + $0xe8] sm:$0xff]
      %v855 = vld [vmem:[%s824 + $0xf0] sm:$0xff]
      %v856 = vld [vmem:[%s824 + $0xf8] sm:$0xff]
      %s857 = scalar_lea.vmem %s3, 4
      %v858 = vld [vmem:[%s857] sm:$0xf]
      %v860 = vlaneseq
      %v861 = vshrl.u32 %v860, 7
      %v862 = vsub.s32 0, %v861
      %v863 = vrot.slane %v858, %v862
      %v864 = vlaneseq
      %v865 = vshrl.u32 %v864, 7
      %v866 = vsub.s32 1, %v865
      %v867 = vrot.slane %v858, %v866
      %v868 = vlaneseq
      %v869 = vshrl.u32 %v868, 7
      %v870 = vsub.s32 2, %v869
      %v871 = vrot.slane %v858, %v870
      %v872 = vlaneseq
      %v873 = vshrl.u32 %v872, 7
      %v874 = vsub.s32 3, %v873
      %v875 = vrot.slane %v858, %v874
      %v912 = vunpack.c.l.b16 %v825
      %v913 = vunpack.c.h.b16 %v825
      %v914 = vunpack.c.l.b16 %v826
      %v915 = vunpack.c.h.b16 %v826
      %v916 = vunpack.c.l.b16 %v827
      %v917 = vunpack.c.h.b16 %v827
      %v918 = vunpack.c.l.b16 %v828
      %v919 = vunpack.c.h.b16 %v828
      %v920 = vunpack.c.l.b16 %v829
      %v921 = vunpack.c.h.b16 %v829
      %v922 = vunpack.c.l.b16 %v830
      %v923 = vunpack.c.h.b16 %v830
      %v924 = vunpack.c.l.b16 %v831
      %v925 = vunpack.c.h.b16 %v831
      %v926 = vunpack.c.l.b16 %v832
      %v927 = vunpack.c.h.b16 %v832
      %v928 = vunpack.c.l.b16 %v833
      %v929 = vunpack.c.h.b16 %v833
      %v930 = vunpack.c.l.b16 %v834
      %v931 = vunpack.c.h.b16 %v834
      %v932 = vunpack.c.l.b16 %v835
      %v933 = vunpack.c.h.b16 %v835
      %v934 = vunpack.c.l.b16 %v836
      %v935 = vunpack.c.h.b16 %v836
      %v936 = vunpack.c.l.b16 %v837
      %v937 = vunpack.c.h.b16 %v837
      %v938 = vunpack.c.l.b16 %v838
      %v939 = vunpack.c.h.b16 %v838
      %v940 = vunpack.c.l.b16 %v839
      %v941 = vunpack.c.h.b16 %v839
      %v942 = vunpack.c.l.b16 %v840
      %v943 = vunpack.c.h.b16 %v840
      %v944 = vunpack.c.l.b16 %v841
      %v945 = vunpack.c.h.b16 %v841
      %v946 = vunpack.c.l.b16 %v842
      %v947 = vunpack.c.h.b16 %v842
      %v948 = vunpack.c.l.b16 %v843
      %v949 = vunpack.c.h.b16 %v843
      %v950 = vunpack.c.l.b16 %v844
      %v951 = vunpack.c.h.b16 %v844
      %v952 = vunpack.c.l.b16 %v845
      %v953 = vunpack.c.h.b16 %v845
      %v954 = vunpack.c.l.b16 %v846
      %v955 = vunpack.c.h.b16 %v846
      %v956 = vunpack.c.l.b16 %v847
      %v957 = vunpack.c.h.b16 %v847
      %v958 = vunpack.c.l.b16 %v848
      %v959 = vunpack.c.h.b16 %v848
      %v960 = vunpack.c.l.b16 %v849
      %v961 = vunpack.c.h.b16 %v849
      %v962 = vunpack.c.l.b16 %v850
      %v963 = vunpack.c.h.b16 %v850
      %v964 = vunpack.c.l.b16 %v851
      %v965 = vunpack.c.h.b16 %v851
      %v966 = vunpack.c.l.b16 %v852
      %v967 = vunpack.c.h.b16 %v852
      %v968 = vunpack.c.l.b16 %v853
      %v969 = vunpack.c.h.b16 %v853
      %v970 = vunpack.c.l.b16 %v854
      %v971 = vunpack.c.h.b16 %v854
      %v972 = vunpack.c.l.b16 %v855
      %v973 = vunpack.c.h.b16 %v855
      %v974 = vunpack.c.l.b16 %v856
      %v975 = vunpack.c.h.b16 %v856
      %v976 = vpack.c.b16 %v916, %v912
      %v977 = vpack.c.b16 %v917, %v913
      %v978 = vpack.c.b16 %v918, %v914
      %v979 = vpack.c.b16 %v919, %v915
      %v980 = vpack.c.b16 %v924, %v920
      %v981 = vpack.c.b16 %v925, %v921
      %v982 = vpack.c.b16 %v926, %v922
      %v983 = vpack.c.b16 %v927, %v923
      %v984 = vpack.c.b16 %v932, %v928
      %v985 = vpack.c.b16 %v933, %v929
      %v986 = vpack.c.b16 %v934, %v930
      %v987 = vpack.c.b16 %v935, %v931
      %v988 = vpack.c.b16 %v940, %v936
      %v989 = vpack.c.b16 %v941, %v937
      %v990 = vpack.c.b16 %v942, %v938
      %v991 = vpack.c.b16 %v943, %v939
      %v992 = vpack.c.b16 %v948, %v944
      %v993 = vpack.c.b16 %v949, %v945
      %v994 = vpack.c.b16 %v950, %v946
      %v995 = vpack.c.b16 %v951, %v947
      %v996 = vpack.c.b16 %v956, %v952
      %v997 = vpack.c.b16 %v957, %v953
      %v998 = vpack.c.b16 %v958, %v954
      %v999 = vpack.c.b16 %v959, %v955
      %v1000 = vpack.c.b16 %v964, %v960
      %v1001 = vpack.c.b16 %v965, %v961
      %v1002 = vpack.c.b16 %v966, %v962
      %v1003 = vpack.c.b16 %v967, %v963
      %v1004 = vpack.c.b16 %v972, %v968
      %v1005 = vpack.c.b16 %v973, %v969
      %v1006 = vpack.c.b16 %v974, %v970
      %v1007 = vpack.c.b16 %v975, %v971
      %1040 = vmatprep.subr.bf16.mxu0 %v977
      %1041 = vmatpush1.bf16.msra.mxu0 %v976
      %1042 = vmatprep.subr.bf16.mxu0 %v981
      %1043 = vmatpush1.bf16.msra.mxu0 %v980
      %1044 = vmatprep.subr.bf16.mxu0 %v985
      %1045 = vmatpush1.bf16.msra.mxu0 %v984
      %1046 = vmatprep.subr.bf16.mxu0 %v989
      %1047 = vmatpush1.bf16.msra.mxu0 %v988
      %1048 = vmatprep.subr.bf16.mxu0 %v993
      %1049 = vmatpush1.bf16.msra.mxu0 %v992
      %1050 = vmatprep.subr.bf16.mxu0 %v997
      %1051 = vmatpush1.bf16.msra.mxu0 %v996
      %1052 = vmatprep.subr.bf16.mxu0 %v1001
      %1053 = vmatpush1.bf16.msra.mxu0 %v1000
      %1054 = vmatprep.subr.bf16.mxu0 %v1005
      %1055 = vmatpush1.bf16.msra.mxu0 %v1004
      %1056 = vmatprep.subr.bf16.mxu0 0
      %1057 = vmatpush1.bf16.msra.mxu0 0
      %1058 = vmatprep.subr.bf16.mxu0 0
      %1059 = vmatpush1.bf16.msra.mxu0 0
      %1060 = vmatprep.subr.bf16.mxu0 0
      %1061 = vmatpush1.bf16.msra.mxu0 0
      %1062 = vmatprep.subr.bf16.mxu0 0
      %1063 = vmatpush1.bf16.msra.mxu0 0
      %1064 = vmatprep.subr.bf16.mxu0 0
      %1065 = vmatpush1.bf16.msra.mxu0 0
      %1066 = vmatprep.subr.bf16.mxu0 0
      %1067 = vmatpush1.bf16.msra.mxu0 0
      %1068 = vmatprep.subr.bf16.mxu0 0
      %1069 = vmatpush1.bf16.msra.mxu0 0
      %1070 = vmatprep.subr.bf16.mxu0 0
      %1071 = vmatpush1.bf16.msra.mxu0 0
      %1072 = vmatprep.mubr.bf16.mxu0 0
      %1073 = vmatmul.mubr.bf16.gmra.mrb[0].mxu0 %v507
      %v1074 = vpop.f32.mrb[0].mxu0
      %v1075 = vadd.f32 %v863, %v1074
      %v1076 = vpop.f32.mrb[0].mxu0
      %v1077 = vadd.f32 %v867, %v1076
      %v1078 = vpop.f32.mrb[0].mxu0
      %v1079 = vpop.f32.mrb[0].mxu0
      %1080 = vdwg.mxu0
      %1081 = vmatprep.subr.bf16.mxu0 %v979
      %1082 = vmatpush1.bf16.msra.mxu0 %v978
      %1083 = vmatprep.subr.bf16.mxu0 %v983
      %1084 = vmatpush1.bf16.msra.mxu0 %v982
      %1085 = vmatprep.subr.bf16.mxu0 %v987
      %1086 = vmatpush1.bf16.msra.mxu0 %v986
      %1087 = vmatprep.subr.bf16.mxu0 %v991
      %1088 = vmatpush1.bf16.msra.mxu0 %v990
      %1089 = vmatprep.subr.bf16.mxu0 %v995
      %1090 = vmatpush1.bf16.msra.mxu0 %v994
      %1091 = vmatprep.subr.bf16.mxu0 %v999
      %1092 = vmatpush1.bf16.msra.mxu0 %v998
      %1093 = vmatprep.subr.bf16.mxu0 %v1003
      %1094 = vmatpush1.bf16.msra.mxu0 %v1002
      %1095 = vmatprep.subr.bf16.mxu0 %v1007
      %1096 = vmatpush1.bf16.msra.mxu0 %v1006
      %1097 = vmatprep.subr.bf16.mxu0 0
      %1098 = vmatpush1.bf16.msra.mxu0 0
      %1099 = vmatprep.subr.bf16.mxu0 0
      %1100 = vmatpush1.bf16.msra.mxu0 0
      %1101 = vmatprep.subr.bf16.mxu0 0
      %1102 = vmatpush1.bf16.msra.mxu0 0
      %1103 = vmatprep.subr.bf16.mxu0 0
      %1104 = vmatpush1.bf16.msra.mxu0 0
      %1105 = vmatprep.subr.bf16.mxu0 0
      %1106 = vmatpush1.bf16.msra.mxu0 0
      %1107 = vmatprep.subr.bf16.mxu0 0
      %1108 = vmatpush1.bf16.msra.mxu0 0
      %1109 = vmatprep.subr.bf16.mxu0 0
      %1110 = vmatpush1.bf16.msra.mxu0 0
      %1111 = vmatprep.subr.bf16.mxu0 0
      %1112 = vmatpush1.bf16.msra.mxu0 0
      %1113 = vmatprep.mubr.bf16.mxu0 0
      %1114 = vmatmul.mubr.bf16.gmra.mrb[0].mxu0 %v507
      %v1115 = vpop.f32.mrb[0].mxu0
      %v1116 = vadd.f32 %v871, %v1115
      %v1117 = vpop.f32.mrb[0].mxu0
      %v1118 = vadd.f32 %v875, %v1117
      %v1119 = vpop.f32.mrb[0].mxu0
      %v1120 = vpop.f32.mrb[0].mxu0
      %1121 = vdwg.mxu0
      %v1122 = vpack.c.bf16 %v490, %v490
      %s1123 = scalar_lea.vmem [#allocation10], 256
      %v1124 = vld [vmem:[%s1123] sm:$0xff]
      %v1125 = vld [vmem:[%s1123 + $0x8] sm:$0xff]
      %v1126 = vld [vmem:[%s1123 + $0x10] sm:$0xff]
      %v1127 = vld [vmem:[%s1123 + $0x18] sm:$0xff]
      %v1128 = vld [vmem:[%s1123 + $0x20] sm:$0xff]
      %v1129 = vld [vmem:[%s1123 + $0x28] sm:$0xff]
      %v1130 = vld [vmem:[%s1123 + $0x30] sm:$0xff]
      %v1131 = vld [vmem:[%s1123 + $0x38] sm:$0xff]
      %v1132 = vld [vmem:[%s1123 + $0x40] sm:$0xff]
      %v1133 = vld [vmem:[%s1123 + $0x48] sm:$0xff]
      %v1134 = vld [vmem:[%s1123 + $0x50] sm:$0xff]
      %v1135 = vld [vmem:[%s1123 + $0x58] sm:$0xff]
      %v1136 = vld [vmem:[%s1123 + $0x60] sm:$0xff]
      %v1137 = vld [vmem:[%s1123 + $0x68] sm:$0xff]
      %v1138 = vld [vmem:[%s1123 + $0x70] sm:$0xff]
      %v1139 = vld [vmem:[%s1123 + $0x78] sm:$0xff]
      %v1140 = vld [vmem:[%s1123 + $0x80] sm:$0xff]
      %v1141 = vld [vmem:[%s1123 + $0x88] sm:$0xff]
      %v1142 = vld [vmem:[%s1123 + $0x90] sm:$0xff]
      %v1143 = vld [vmem:[%s1123 + $0x98] sm:$0xff]
      %v1144 = vld [vmem:[%s1123 + $0xa0] sm:$0xff]
      %v1145 = vld [vmem:[%s1123 + $0xa8] sm:$0xff]
      %v1146 = vld [vmem:[%s1123 + $0xb0] sm:$0xff]
      %v1147 = vld [vmem:[%s1123 + $0xb8] sm:$0xff]
      %v1148 = vld [vmem:[%s1123 + $0xc0] sm:$0xff]
      %v1149 = vld [vmem:[%s1123 + $0xc8] sm:$0xff]
      %v1150 = vld [vmem:[%s1123 + $0xd0] sm:$0xff]
      %v1151 = vld [vmem:[%s1123 + $0xd8] sm:$0xff]
      %v1152 = vld [vmem:[%s1123 + $0xe0] sm:$0xff]
      %v1153 = vld [vmem:[%s1123 + $0xe8] sm:$0xff]
      %v1154 = vld [vmem:[%s1123 + $0xf0] sm:$0xff]
      %v1155 = vld [vmem:[%s1123 + $0xf8] sm:$0xff]
      %v1188 = vunpack.c.l.b16 %v1124
      %v1189 = vunpack.c.h.b16 %v1124
      %v1190 = vunpack.c.l.b16 %v1125
      %v1191 = vunpack.c.h.b16 %v1125
      %v1192 = vunpack.c.l.b16 %v1126
      %v1193 = vunpack.c.h.b16 %v1126
      %v1194 = vunpack.c.l.b16 %v1127
      %v1195 = vunpack.c.h.b16 %v1127
      %v1196 = vunpack.c.l.b16 %v1128
      %v1197 = vunpack.c.h.b16 %v1128
      %v1198 = vunpack.c.l.b16 %v1129
      %v1199 = vunpack.c.h.b16 %v1129
      %v1200 = vunpack.c.l.b16 %v1130
      %v1201 = vunpack.c.h.b16 %v1130
      %v1202 = vunpack.c.l.b16 %v1131
      %v1203 = vunpack.c.h.b16 %v1131
      %v1204 = vunpack.c.l.b16 %v1132
      %v1205 = vunpack.c.h.b16 %v1132
      %v1206 = vunpack.c.l.b16 %v1133
      %v1207 = vunpack.c.h.b16 %v1133
      %v1208 = vunpack.c.l.b16 %v1134
      %v1209 = vunpack.c.h.b16 %v1134
      %v1210 = vunpack.c.l.b16 %v1135
      %v1211 = vunpack.c.h.b16 %v1135
      %v1212 = vunpack.c.l.b16 %v1136
      %v1213 = vunpack.c.h.b16 %v1136
      %v1214 = vunpack.c.l.b16 %v1137
      %v1215 = vunpack.c.h.b16 %v1137
      %v1216 = vunpack.c.l.b16 %v1138
      %v1217 = vunpack.c.h.b16 %v1138
      %v1218 = vunpack.c.l.b16 %v1139
      %v1219 = vunpack.c.h.b16 %v1139
      %v1220 = vunpack.c.l.b16 %v1140
      %v1221 = vunpack.c.h.b16 %v1140
      %v1222 = vunpack.c.l.b16 %v1141
      %v1223 = vunpack.c.h.b16 %v1141
      %v1224 = vunpack.c.l.b16 %v1142
      %v1225 = vunpack.c.h.b16 %v1142
      %v1226 = vunpack.c.l.b16 %v1143
      %v1227 = vunpack.c.h.b16 %v1143
      %v1228 = vunpack.c.l.b16 %v1144
      %v1229 = vunpack.c.h.b16 %v1144
      %v1230 = vunpack.c.l.b16 %v1145
      %v1231 = vunpack.c.h.b16 %v1145
      %v1232 = vunpack.c.l.b16 %v1146
      %v1233 = vunpack.c.h.b16 %v1146
      %v1234 = vunpack.c.l.b16 %v1147
      %v1235 = vunpack.c.h.b16 %v1147
      %v1236 = vunpack.c.l.b16 %v1148
      %v1237 = vunpack.c.h.b16 %v1148
      %v1238 = vunpack.c.l.b16 %v1149
      %v1239 = vunpack.c.h.b16 %v1149
      %v1240 = vunpack.c.l.b16 %v1150
      %v1241 = vunpack.c.h.b16 %v1150
      %v1242 = vunpack.c.l.b16 %v1151
      %v1243 = vunpack.c.h.b16 %v1151
      %v1244 = vunpack.c.l.b16 %v1152
      %v1245 = vunpack.c.h.b16 %v1152
      %v1246 = vunpack.c.l.b16 %v1153
      %v1247 = vunpack.c.h.b16 %v1153
      %v1248 = vunpack.c.l.b16 %v1154
      %v1249 = vunpack.c.h.b16 %v1154
      %v1250 = vunpack.c.l.b16 %v1155
      %v1251 = vunpack.c.h.b16 %v1155
      %v1252 = vpack.c.b16 %v1192, %v1188
      %v1253 = vpack.c.b16 %v1193, %v1189
      %v1254 = vpack.c.b16 %v1194, %v1190
      %v1255 = vpack.c.b16 %v1195, %v1191
      %v1256 = vpack.c.b16 %v1200, %v1196
      %v1257 = vpack.c.b16 %v1201, %v1197
      %v1258 = vpack.c.b16 %v1202, %v1198
      %v1259 = vpack.c.b16 %v1203, %v1199
      %v1260 = vpack.c.b16 %v1208, %v1204
      %v1261 = vpack.c.b16 %v1209, %v1205
      %v1262 = vpack.c.b16 %v1210, %v1206
      %v1263 = vpack.c.b16 %v1211, %v1207
      %v1264 = vpack.c.b16 %v1216, %v1212
      %v1265 = vpack.c.b16 %v1217, %v1213
      %v1266 = vpack.c.b16 %v1218, %v1214
      %v1267 = vpack.c.b16 %v1219, %v1215
      %v1268 = vpack.c.b16 %v1224, %v1220
      %v1269 = vpack.c.b16 %v1225, %v1221
      %v1270 = vpack.c.b16 %v1226, %v1222
      %v1271 = vpack.c.b16 %v1227, %v1223
      %v1272 = vpack.c.b16 %v1232, %v1228
      %v1273 = vpack.c.b16 %v1233, %v1229
      %v1274 = vpack.c.b16 %v1234, %v1230
      %v1275 = vpack.c.b16 %v1235, %v1231
      %v1276 = vpack.c.b16 %v1240, %v1236
      %v1277 = vpack.c.b16 %v1241, %v1237
      %v1278 = vpack.c.b16 %v1242, %v1238
      %v1279 = vpack.c.b16 %v1243, %v1239
      %v1280 = vpack.c.b16 %v1248, %v1244
      %v1281 = vpack.c.b16 %v1249, %v1245
      %v1282 = vpack.c.b16 %v1250, %v1246
      %v1283 = vpack.c.b16 %v1251, %v1247
      %1316 = vmatprep.subr.bf16.mxu0 %v1253
      %1317 = vmatpush1.bf16.msra.mxu0 %v1252
      %1318 = vmatprep.subr.bf16.mxu0 %v1257
      %1319 = vmatpush1.bf16.msra.mxu0 %v1256
      %1320 = vmatprep.subr.bf16.mxu0 %v1261
      %1321 = vmatpush1.bf16.msra.mxu0 %v1260
      %1322 = vmatprep.subr.bf16.mxu0 %v1265
      %1323 = vmatpush1.bf16.msra.mxu0 %v1264
      %1324 = vmatprep.subr.bf16.mxu0 %v1269
      %1325 = vmatpush1.bf16.msra.mxu0 %v1268
      %1326 = vmatprep.subr.bf16.mxu0 %v1273
      %1327 = vmatpush1.bf16.msra.mxu0 %v1272
      %1328 = vmatprep.subr.bf16.mxu0 %v1277
      %1329 = vmatpush1.bf16.msra.mxu0 %v1276
      %1330 = vmatprep.subr.bf16.mxu0 %v1281
      %1331 = vmatpush1.bf16.msra.mxu0 %v1280
      %1332 = vmatprep.subr.bf16.mxu0 0
      %1333 = vmatpush1.bf16.msra.mxu0 0
      %1334 = vmatprep.subr.bf16.mxu0 0
      %1335 = vmatpush1.bf16.msra.mxu0 0
      %1336 = vmatprep.subr.bf16.mxu0 0
      %1337 = vmatpush1.bf16.msra.mxu0 0
      %1338 = vmatprep.subr.bf16.mxu0 0
      %1339 = vmatpush1.bf16.msra.mxu0 0
      %1340 = vmatprep.subr.bf16.mxu0 0
      %1341 = vmatpush1.bf16.msra.mxu0 0
      %1342 = vmatprep.subr.bf16.mxu0 0
      %1343 = vmatpush1.bf16.msra.mxu0 0
      %1344 = vmatprep.subr.bf16.mxu0 0
      %1345 = vmatpush1.bf16.msra.mxu0 0
      %1346 = vmatprep.subr.bf16.mxu0 0
      %1347 = vmatpush1.bf16.msra.mxu0 0
      %1348 = vmatprep.mubr.bf16.mxu0 0
      %1349 = vmatmul.mubr.bf16.gmra.mrb[0].mxu0 %v1122
      %v1350 = vpop.f32.mrb[0].mxu0
      %v1351 = vadd.f32 0.0, %v1350
      %v1352 = vpop.f32.mrb[0].mxu0
      %v1353 = vadd.f32 0.0, %v1352
      %v1354 = vpop.f32.mrb[0].mxu0
      %v1355 = vpop.f32.mrb[0].mxu0
      %1356 = vdwg.mxu0
      %1357 = vmatprep.subr.bf16.mxu0 %v1255
      %1358 = vmatpush1.bf16.msra.mxu0 %v1254
      %1359 = vmatprep.subr.bf16.mxu0 %v1259
      %1360 = vmatpush1.bf16.msra.mxu0 %v1258
      %1361 = vmatprep.subr.bf16.mxu0 %v1263
      %1362 = vmatpush1.bf16.msra.mxu0 %v1262
      %1363 = vmatprep.subr.bf16.mxu0 %v1267
      %1364 = vmatpush1.bf16.msra.mxu0 %v1266
      %1365 = vmatprep.subr.bf16.mxu0 %v1271
      %1366 = vmatpush1.bf16.msra.mxu0 %v1270
      %1367 = vmatprep.subr.bf16.mxu0 %v1275
      %1368 = vmatpush1.bf16.msra.mxu0 %v1274
      %1369 = vmatprep.subr.bf16.mxu0 %v1279
      %1370 = vmatpush1.bf16.msra.mxu0 %v1278
      %1371 = vmatprep.subr.bf16.mxu0 %v1283
      %1372 = vmatpush1.bf16.msra.mxu0 %v1282
      %1373 = vmatprep.subr.bf16.mxu0 0
      %1374 = vmatpush1.bf16.msra.mxu0 0
      %1375 = vmatprep.subr.bf16.mxu0 0
      %1376 = vmatpush1.bf16.msra.mxu0 0
      %1377 = vmatprep.subr.bf16.mxu0 0
      %1378 = vmatpush1.bf16.msra.mxu0 0
      %1379 = vmatprep.subr.bf16.mxu0 0
      %1380 = vmatpush1.bf16.msra.mxu0 0
      %1381 = vmatprep.subr.bf16.mxu0 0
      %1382 = vmatpush1.bf16.msra.mxu0 0
      %1383 = vmatprep.subr.bf16.mxu0 0
      %1384 = vmatpush1.bf16.msra.mxu0 0
      %1385 = vmatprep.subr.bf16.mxu0 0
      %1386 = vmatpush1.bf16.msra.mxu0 0
      %1387 = vmatprep.subr.bf16.mxu0 0
      %1388 = vmatpush1.bf16.msra.mxu0 0
      %1389 = vmatprep.mubr.bf16.mxu0 0
      %1390 = vmatmul.mubr.bf16.gmra.mrb[0].mxu0 %v1122
      %v1391 = vpop.f32.mrb[0].mxu0
      %v1392 = vadd.f32 0.0, %v1391
      %v1393 = vpop.f32.mrb[0].mxu0
      %v1394 = vadd.f32 0.0, %v1393
      %v1395 = vpop.f32.mrb[0].mxu0
      %v1396 = vpop.f32.mrb[0].mxu0
      %1397 = vdwg.mxu0
      %v1398 = vadd.f32 %v1075, %v1351
      %v1399 = vadd.f32 %v1077, %v1353
      %v1400 = vadd.f32 %v1116, %v1392
      %v1401 = vadd.f32 %v1118, %v1394
      %v1402 = vmul.f32 %v1398, 0.5
      %v1403 = vtanh.pop %v1402
      %v1404 = vmul.f32 %v1403, 0.5
      %v1405 = vadd.f32 %v1404, 0.5
      %v1406 = vmul.f32 %v1399, 0.5
      %v1407 = vtanh.pop %v1406
      %v1408 = vmul.f32 %v1407, 0.5
      %v1409 = vadd.f32 %v1408, 0.5
      %v1410 = vtanh.pop %v1400
      %v1411 = vmul.f32 %v1401, 0.5
      %v1412 = vtanh.pop %v1411
      %v1413 = vmul.f32 %v1412, 0.5
      %v1414 = vadd.f32 %v1413, 0.5
      %v1415 = vmul.f32 %v1409, %v492
      %v1416 = vmul.f32 %v1405, %v1410
      %v1417 = vadd.f32 %v1415, %v1416
      %v1418 = vtanh.pop %v1417
      %v1419 = vmul.f32 %v1414, %v1418
      %s1420 = smul.u32 %s823, 8
      %s1421 = scalar_lea.vmem [#allocation5], %s1420
      %v1422 = vld [vmem:[%s1421] sm:$0xff]
      %v1423 = vadd.f32 %v1419, %v1422
      %s1424 = scalar_lea.vmem [#allocation11], %s1420
      %1425 = vst [vmem:[%s1424] sm:$0xff] %v1423
      %p1426 = scmp.ge.s32.totalorder %s819, 0
      %p1427 = scmp.lt.s32.totalorder %s819, %s475
      %p1428 = pnand %p1426, %p1427
      %p1429 = pneg %p1428
      %s1430 = scalar_select %p1429, 1, 0
      %s1431 = scvt.s32.f32 %s1430
      %v1432 = vstv %s1431
      %v1433 = vmul.f32 %v1432, %v1419
      %s1434 = ssub.f32 1.0, %s1431
      %v1435 = vstv %s1434
      %v1436 = vmul.f32 %v1435, %v490
      %v1437 = vadd.f32 %v1433, %v1436
      %v1438 = vmul.f32 %v1432, %v1417
      %v1439 = vmul.f32 %v1435, %v492
      %v1440 = vadd.f32 %v1438, %v1439
    $region38: #{tpu_custom_call.1} parent=1 // loop_footer
      %s486 = sadd.s32 %s484, 1
    $region39: #{tpu_custom_call.1} parent=1 // loop_footer_branch
      %483 = sbr.rel target = $region35
    $region40: #{tpu_custom_call.1} parent=1 // loop_exit
      _
    %1441 = vst [vmem:[#allocation2] sm:$0xff] %v489
    %1442 = vst [vmem:[#allocation3] sm:$0xff] %v491
    %1443 = vst [vmem:[%s477] sm:$0xff] %v490
    %1444 = vst [vmem:[%s480] sm:$0xff] %v492
    // Predicated region
    $region41: #{tpu_custom_call.1} parent=1 // pred_check
      _
    $region42: #{tpu_custom_call.1} parent=1 // pred_check_branch
      %1446 = sbr.rel (0) target = $region44
    $region43: #{tpu_custom_call.1} parent=1 // pred_region
      %s1448 = ssub.s32 1024, 1024
      %1449 = vsyncadd [#allocation7], %s1448
      %s1450 = sshll.u32 [#allocation11], 4
      %s1451 = int_to_ptr.vmem [resolvable:$true] %s1450
      %1456 = dma.vmem_to_hbm [thread:$0]  %s1451, 1024, %s4, [#allocation7], 128, 128, 8
    $region44: #{tpu_custom_call.1} parent=1 // pred_fallthru
      _
    // Predicated region
    $region45: #{tpu_custom_call.1} parent=1 // pred_check
      _
    $region46: #{tpu_custom_call.1} parent=1 // pred_check_branch
      %1458 = sbr.rel (0) target = $region48
    $region47: #{tpu_custom_call.1} parent=1 // pred_region
      %1459 = dma.done [#allocation7], 1024
    $region48: #{tpu_custom_call.1} parent=1 // pred_fallthru
      _
    %1460 = vsyncpa [#allocation6], 1
    %1461 = vsyncpa [#allocation9], 1
    %1462 = vsyncpa [#allocation7], 1

// kernel: tpu_custom_call.1
$region0: #{tpu_custom_call.1}
  #allocation0 [shape = 'u32[]', space=smem, size = 0x4, offset = 0x4, fixed_abs, tag = 'smem constant byte address 0x4 - core index']
  #allocation1 [shape = 'u32[144,128]{1,0:T(1,128)}', space=vmem, size = 0x12000, scoped, tag = 'internal scratch']
  #allocation2 [shape = 'f32[2,8,128]{2,1,0:T(8,128)}', space=vmem, size = 0x2000, scoped, tag = 'scratch operand']
  #allocation3 [shape = 'f32[2,8,128]{2,1,0:T(8,128)}', space=vmem, size = 0x2000, scoped, tag = 'scratch operand']
  #allocation4 [shape = 'f32[64,512]{1,0:T(8,128)}', space=vmem, size = 0x20000, scoped, tag = 'scratch operand']
  %s0 = inlined_call_operand.hbm [shape: f32[8,8,128], index: 0, kind: input, shape index: {}]
  %s1 = inlined_call_operand.hbm [shape: bf16[2,128,512], index: 1, kind: input, shape index: {}]
  %s2 = inlined_call_operand.hbm [shape: bf16[2,128,512], index: 2, kind: input, shape index: {}]
  %s3 = inlined_call_operand.vmem [shape: f32[2,1,512], index: 3, kind: input, shape index: {}]
  %s4 = inlined_call_operand.hbm [shape: f32[8,8,128], index: 4, kind: output, shape index: {}]
  %s5 = sld [smem:[#allocation0]]
  $region49: #{tpu_custom_call.1} parent=0
    _
  %s7 = ssub.s32 1, %s5
  %s8 = scalar_select 0, %s7, %s5
  $region1: #{tpu_custom_call.1} parent=0
    #allocation5 [shape = 'u8[32768]{0}', space=vmem, size = 0x8000, scoped, tag = 'input window, operand 0, single buffered']
    #allocation6 [shape = 's32[1]{0}', space=sflag, size = 0x4, scoped, tag = 'scoped memory for tpu_custom_call.1']
    #allocation7 [shape = 's32[1]{0}', space=sflag, size = 0x4, scoped, tag = 'scoped memory for tpu_custom_call.1']
    #allocation8 [shape = 'u8[262144]{0}', space=vmem, size = 0x40000, scoped, tag = 'input window, operand 1, single buffered']
    #allocation9 [shape = 's32[1]{0}', space=sflag, size = 0x4, scoped, tag = 'scoped memory for tpu_custom_call.1']
    #allocation10 [shape = 'u8[262144]{0}', space=vmem, size = 0x40000, scoped, tag = 'input window, operand 2, single buffered']
    #allocation11 [shape = 'u8[32768]{0}', space=vmem, size = 0x8000, scoped, tag = 'output window, operand 0, single buffered']
    %9 = vsyncpa [#allocation6], 0
    %10 = vsyncpa [#allocation9], 0
    %11 = vsyncpa [#allocation7], 0
    // Predicated region
    $region2: #{tpu_custom_call.1} parent=1 // pred_check
      _
    $region3: #{tpu_custom_call.1} parent=1 // pred_check_branch
      %13 = sbr.rel (0) target = $region5
    $region4: #{tpu_custom_call.1} parent=1 // pred_region
      %s15 = ssub.s32 1024, 1024
      %16 = vsyncadd [#allocation6], %s15
      %s17 = sshll.u32 [#allocation5], 4
      %s18 = int_to_ptr.vmem [resolvable:$true] %s17
      %23 = dma.hbm_to_vmem [thread:$0]  %s0, 1024, %s18, [#allocation6], 128, 128, 8
    $region5: #{tpu_custom_call.1} parent=1 // pred_fallthru
      _
    // Predicated region
    $region6: #{tpu_custom_call.1} parent=1 // pred_check
      _
    $region7: #{tpu_custom_call.1} parent=1 // pred_check_branch
      %25 = sbr.rel (0) target = $region9
    $region8: #{tpu_custom_call.1} parent=1 // pred_region
      %s27 = ssub.s32 8192, 8192
      %28 = vsyncadd [#allocation9], %s27
      %s29 = sshll.u32 [#allocation8], 4
      %s30 = int_to_ptr.vmem [resolvable:$true] %s29
      %35 = dma.hbm_to_vmem [thread:$0]  %s1, 8192, %s30, [#allocation9], 256, 256, 16
    $region9: #{tpu_custom_call.1} parent=1 // pred_fallthru
      _
    // Predicated region
    $region10: #{tpu_custom_call.1} parent=1 // pred_check
      _
    $region11: #{tpu_custom_call.1} parent=1 // pred_check_branch
      %37 = sbr.rel (0) target = $region13
    $region12: #{tpu_custom_call.1} parent=1 // pred_region
      %s39 = ssub.s32 8192, 8192
      %40 = vsyncadd [#allocation9], %s39
      %s41 = sshll.u32 [#allocation10], 4
      %s42 = int_to_ptr.vmem [resolvable:$true] %s41
      %47 = dma.hbm_to_vmem [thread:$0]  %s2, 8192, %s42, [#allocation9], 256, 256, 16
    $region13: #{tpu_custom_call.1} parent=1 // pred_fallthru
      _
    // Predicated region
    $region14: #{tpu_custom_call.1} parent=1 // pred_check
      _
    $region15: #{tpu_custom_call.1} parent=1 // pred_check_branch
      %49 = sbr.rel (0) target = $region17
    $region16: #{tpu_custom_call.1} parent=1 // pred_region
      _
    $region17: #{tpu_custom_call.1} parent=1 // pred_fallthru
      _
    // Predicated region
    $region18: #{tpu_custom_call.1} parent=1 // pred_check
      _
    $region19: #{tpu_custom_call.1} parent=1 // pred_check_branch
      %51 = sbr.rel (0) target = $region21
    $region20: #{tpu_custom_call.1} parent=1 // pred_region
      %52 = dma.done [#allocation6], 1024
    $region21: #{tpu_custom_call.1} parent=1 // pred_fallthru
      _
    // Predicated region
    $region22: #{tpu_custom_call.1} parent=1 // pred_check
      _
    $region23: #{tpu_custom_call.1} parent=1 // pred_check_branch
      %54 = sbr.rel (0) target = $region25
    $region24: #{tpu_custom_call.1} parent=1 // pred_region
      %55 = dma.done [#allocation9], 8192
    $region25: #{tpu_custom_call.1} parent=1 // pred_fallthru
      _
    // Predicated region
    $region26: #{tpu_custom_call.1} parent=1 // pred_check
      _
    $region27: #{tpu_custom_call.1} parent=1 // pred_check_branch
      %57 = sbr.rel (0) target = $region29
    $region28: #{tpu_custom_call.1} parent=1 // pred_region
      %58 = dma.done [#allocation9], 8192
    $region29: #{tpu_custom_call.1} parent=1 // pred_fallthru
      _
    %p60 = scmp.eq.s32.totalorder 0, 0
    // Predicated region
    $region30: #{tpu_custom_call.1} parent=1 // pred_check
      %p61 = pneg %p60
    $region31: #{tpu_custom_call.1} parent=1 // pred_check_branch
      %63 = sbr.rel (%p61) target = $region33
    $region32: #{tpu_custom_call.1} parent=1 // pred_region
      %64 = vst [vmem:[#allocation2] sm:$0xff] 0.0
      %65 = vst [vmem:[#allocation2 + $0x8] sm:$0xff] 0.0
      %66 = vst [vmem:[#allocation3] sm:$0xff] 0.0
      %67 = vst [vmem:[#allocation3 + $0x8] sm:$0xff] 0.0
    $region33: #{tpu_custom_call.1} parent=1 // pred_fallthru
      _
    %v68 = vld [vmem:[#allocation5] sm:$0xff]
    %v69 = vld [vmem:[#allocation5 + $0x8] sm:$0xff]
    %v70 = vld [vmem:[#allocation5 + $0x10] sm:$0xff]
    %v71 = vld [vmem:[#allocation5 + $0x18] sm:$0xff]
    %v72 = vld [vmem:[#allocation5 + $0x20] sm:$0xff]
    %v73 = vld [vmem:[#allocation5 + $0x28] sm:$0xff]
    %v74 = vld [vmem:[#allocation5 + $0x30] sm:$0xff]
    %v75 = vld [vmem:[#allocation5 + $0x38] sm:$0xff]
    %v76 = vpack.c.bf16 %v69, %v68
    %v77 = vpack.c.bf16 %v71, %v70
    %v78 = vpack.c.bf16 %v73, %v72
    %v79 = vpack.c.bf16 %v75, %v74
    %v80 = vld [vmem:[#allocation8] sm:$0xff]
    %v81 = vld [vmem:[#allocation8 + $0x8] sm:$0xff]
    %v82 = vld [vmem:[#allocation8 + $0x10] sm:$0xff]
    %v83 = vld [vmem:[#allocation8 + $0x18] sm:$0xff]
    %v84 = vld [vmem:[#allocation8 + $0x20] sm:$0xff]
    %v85 = vld [vmem:[#allocation8 + $0x28] sm:$0xff]
    %v86 = vld [vmem:[#allocation8 + $0x30] sm:$0xff]
    %v87 = vld [vmem:[#allocation8 + $0x38] sm:$0xff]
    %v88 = vld [vmem:[#allocation8 + $0x40] sm:$0xff]
    %v89 = vld [vmem:[#allocation8 + $0x48] sm:$0xff]
    %v90 = vld [vmem:[#allocation8 + $0x50] sm:$0xff]
    %v91 = vld [vmem:[#allocation8 + $0x58] sm:$0xff]
    %v92 = vld [vmem:[#allocation8 + $0x60] sm:$0xff]
    %v93 = vld [vmem:[#allocation8 + $0x68] sm:$0xff]
    %v94 = vld [vmem:[#allocation8 + $0x70] sm:$0xff]
    %v95 = vld [vmem:[#allocation8 + $0x78] sm:$0xff]
    %v96 = vld [vmem:[#allocation8 + $0x80] sm:$0xff]
    %v97 = vld [vmem:[#allocation8 + $0x88] sm:$0xff]
    %v98 = vld [vmem:[#allocation8 + $0x90] sm:$0xff]
    %v99 = vld [vmem:[#allocation8 + $0x98] sm:$0xff]
    %v100 = vld [vmem:[#allocation8 + $0xa0] sm:$0xff]
    %v101 = vld [vmem:[#allocation8 + $0xa8] sm:$0xff]
    %v102 = vld [vmem:[#allocation8 + $0xb0] sm:$0xff]
    %v103 = vld [vmem:[#allocation8 + $0xb8] sm:$0xff]
    %v104 = vld [vmem:[#allocation8 + $0xc0] sm:$0xff]
    %v105 = vld [vmem:[#allocation8 + $0xc8] sm:$0xff]
    %v106 = vld [vmem:[#allocation8 + $0xd0] sm:$0xff]
    %v107 = vld [vmem:[#allocation8 + $0xd8] sm:$0xff]
    %v108 = vld [vmem:[#allocation8 + $0xe0] sm:$0xff]
    %v109 = vld [vmem:[#allocation8 + $0xe8] sm:$0xff]
    %v110 = vld [vmem:[#allocation8 + $0xf0] sm:$0xff]
    %v111 = vld [vmem:[#allocation8 + $0xf8] sm:$0xff]
    %v112 = vld [vmem:[%s3] sm:$0xf]
    %v114 = vlaneseq
    %v115 = vshrl.u32 %v114, 7
    %v116 = vsub.s32 0, %v115
    %v117 = vrot.slane %v112, %v116
    %v118 = vlaneseq
    %v119 = vshrl.u32 %v118, 7
    %v120 = vsub.s32 1, %v119
    %v121 = vrot.slane %v112, %v120
    %v122 = vlaneseq
    %v123 = vshrl.u32 %v122, 7
    %v124 = vsub.s32 2, %v123
    %v125 = vrot.slane %v112, %v124
    %v126 = vlaneseq
    %v127 = vshrl.u32 %v126, 7
    %v128 = vsub.s32 3, %v127
    %v129 = vrot.slane %v112, %v128
    %v166 = vunpack.c.l.b16 %v80
    %v167 = vunpack.c.h.b16 %v80
    %v168 = vunpack.c.l.b16 %v81
    %v169 = vunpack.c.h.b16 %v81
    %v170 = vunpack.c.l.b16 %v82
    %v171 = vunpack.c.h.b16 %v82
    %v172 = vunpack.c.l.b16 %v83
    %v173 = vunpack.c.h.b16 %v83
    %v174 = vunpack.c.l.b16 %v84
    %v175 = vunpack.c.h.b16 %v84
    %v176 = vunpack.c.l.b16 %v85
    %v177 = vunpack.c.h.b16 %v85
    %v178 = vunpack.c.l.b16 %v86
    %v179 = vunpack.c.h.b16 %v86
    %v180 = vunpack.c.l.b16 %v87
    %v181 = vunpack.c.h.b16 %v87
    %v182 = vunpack.c.l.b16 %v88
    %v183 = vunpack.c.h.b16 %v88
    %v184 = vunpack.c.l.b16 %v89
    %v185 = vunpack.c.h.b16 %v89
    %v186 = vunpack.c.l.b16 %v90
    %v187 = vunpack.c.h.b16 %v90
    %v188 = vunpack.c.l.b16 %v91
    %v189 = vunpack.c.h.b16 %v91
    %v190 = vunpack.c.l.b16 %v92
    %v191 = vunpack.c.h.b16 %v92
    %v192 = vunpack.c.l.b16 %v93
    %v193 = vunpack.c.h.b16 %v93
    %v194 = vunpack.c.l.b16 %v94
    %v195 = vunpack.c.h.b16 %v94
    %v196 = vunpack.c.l.b16 %v95
    %v197 = vunpack.c.h.b16 %v95
    %v198 = vunpack.c.l.b16 %v96
    %v199 = vunpack.c.h.b16 %v96
    %v200 = vunpack.c.l.b16 %v97
    %v201 = vunpack.c.h.b16 %v97
    %v202 = vunpack.c.l.b16 %v98
    %v203 = vunpack.c.h.b16 %v98
    %v204 = vunpack.c.l.b16 %v99
    %v205 = vunpack.c.h.b16 %v99
    %v206 = vunpack.c.l.b16 %v100
    %v207 = vunpack.c.h.b16 %v100
    %v208 = vunpack.c.l.b16 %v101
    %v209 = vunpack.c.h.b16 %v101
    %v210 = vunpack.c.l.b16 %v102
    %v211 = vunpack.c.h.b16 %v102
    %v212 = vunpack.c.l.b16 %v103
    %v213 = vunpack.c.h.b16 %v103
    %v214 = vunpack.c.l.b16 %v104
    %v215 = vunpack.c.h.b16 %v104
    %v216 = vunpack.c.l.b16 %v105
    %v217 = vunpack.c.h.b16 %v105
    %v218 = vunpack.c.l.b16 %v106
    %v219 = vunpack.c.h.b16 %v106
    %v220 = vunpack.c.l.b16 %v107
    %v221 = vunpack.c.h.b16 %v107
    %v222 = vunpack.c.l.b16 %v108
    %v223 = vunpack.c.h.b16 %v108
    %v224 = vunpack.c.l.b16 %v109
    %v225 = vunpack.c.h.b16 %v109
    %v226 = vunpack.c.l.b16 %v110
    %v227 = vunpack.c.h.b16 %v110
    %v228 = vunpack.c.l.b16 %v111
    %v229 = vunpack.c.h.b16 %v111
    %v230 = vpack.c.b16 %v170, %v166
    %v231 = vpack.c.b16 %v171, %v167
    %v232 = vpack.c.b16 %v172, %v168
    %v233 = vpack.c.b16 %v173, %v169
    %v234 = vpack.c.b16 %v178, %v174
    %v235 = vpack.c.b16 %v179, %v175
    %v236 = vpack.c.b16 %v180, %v176
    %v237 = vpack.c.b16 %v181, %v177
    %v238 = vpack.c.b16 %v186, %v182
    %v239 = vpack.c.b16 %v187, %v183
    %v240 = vpack.c.b16 %v188, %v184
    %v241 = vpack.c.b16 %v189, %v185
    %v242 = vpack.c.b16 %v194, %v190
    %v243 = vpack.c.b16 %v195, %v191
    %v244 = vpack.c.b16 %v196, %v192
    %v245 = vpack.c.b16 %v197, %v193
    %v246 = vpack.c.b16 %v202, %v198
    %v247 = vpack.c.b16 %v203, %v199
    %v248 = vpack.c.b16 %v204, %v200
    %v249 = vpack.c.b16 %v205, %v201
    %v250 = vpack.c.b16 %v210, %v206
    %v251 = vpack.c.b16 %v211, %v207
    %v252 = vpack.c.b16 %v212, %v208
    %v253 = vpack.c.b16 %v213, %v209
    %v254 = vpack.c.b16 %v218, %v214
    %v255 = vpack.c.b16 %v219, %v215
    %v256 = vpack.c.b16 %v220, %v216
    %v257 = vpack.c.b16 %v221, %v217
    %v258 = vpack.c.b16 %v226, %v222
    %v259 = vpack.c.b16 %v227, %v223
    %v260 = vpack.c.b16 %v228, %v224
    %v261 = vpack.c.b16 %v229, %v225
    %294 = vmatprep.subr.bf16.mxu0 %v231
    %295 = vmatpush1.bf16.msra.mxu0 %v230
    %296 = vmatprep.subr.bf16.mxu0 %v235
    %297 = vmatpush1.bf16.msra.mxu0 %v234
    %298 = vmatprep.subr.bf16.mxu0 %v239
    %299 = vmatpush1.bf16.msra.mxu0 %v238
    %300 = vmatprep.subr.bf16.mxu0 %v243
    %301 = vmatpush1.bf16.msra.mxu0 %v242
    %302 = vmatprep.subr.bf16.mxu0 %v247
    %303 = vmatpush1.bf16.msra.mxu0 %v246
    %304 = vmatprep.subr.bf16.mxu0 %v251
    %305 = vmatpush1.bf16.msra.mxu0 %v250
    %306 = vmatprep.subr.bf16.mxu0 %v255
    %307 = vmatpush1.bf16.msra.mxu0 %v254
    %308 = vmatprep.subr.bf16.mxu0 %v259
    %309 = vmatpush1.bf16.msra.mxu0 %v258
    %310 = vmatprep.subr.bf16.mxu0 0
    %311 = vmatpush1.bf16.msra.mxu0 0
    %312 = vmatprep.subr.bf16.mxu0 0
    %313 = vmatpush1.bf16.msra.mxu0 0
    %314 = vmatprep.subr.bf16.mxu0 0
    %315 = vmatpush1.bf16.msra.mxu0 0
    %316 = vmatprep.subr.bf16.mxu0 0
    %317 = vmatpush1.bf16.msra.mxu0 0
    %318 = vmatprep.subr.bf16.mxu0 0
    %319 = vmatpush1.bf16.msra.mxu0 0
    %320 = vmatprep.subr.bf16.mxu0 0
    %321 = vmatpush1.bf16.msra.mxu0 0
    %322 = vmatprep.subr.bf16.mxu0 0
    %323 = vmatpush1.bf16.msra.mxu0 0
    %324 = vmatprep.subr.bf16.mxu0 0
    %325 = vmatpush1.bf16.msra.mxu0 0
    %326 = vmatprep.mubr.bf16.mxu0 0
    %327 = vmatmul.mubr.bf16.gmra.mrb[0].mxu0 %v76
    %v328 = vpop.f32.mrb[0].mxu0
    %v329 = vadd.f32 %v117, %v328
    %v330 = vpop.f32.mrb[0].mxu0
    %v331 = vadd.f32 %v121, %v330
    %v332 = vpop.f32.mrb[0].mxu0
    %v333 = vadd.f32 %v117, %v332
    %v334 = vpop.f32.mrb[0].mxu0
    %v335 = vadd.f32 %v121, %v334
    %336 = vmatprep.mubr.bf16.mxu0 0
    %337 = vmatmul.mubr.bf16.gmra.mrb[0].mxu0 %v77
    %v338 = vpop.f32.mrb[0].mxu0
    %v339 = vadd.f32 %v117, %v338
    %v340 = vpop.f32.mrb[0].mxu0
    %v341 = vadd.f32 %v121, %v340
    %v342 = vpop.f32.mrb[0].mxu0
    %v343 = vadd.f32 %v117, %v342
    %v344 = vpop.f32.mrb[0].mxu0
    %v345 = vadd.f32 %v121, %v344
    %346 = vmatprep.mubr.bf16.mxu0 0
    %347 = vmatmul.mubr.bf16.gmra.mrb[0].mxu0 %v78
    %v348 = vpop.f32.mrb[0].mxu0
    %v349 = vadd.f32 %v117, %v348
    %v350 = vpop.f32.mrb[0].mxu0
    %v351 = vadd.f32 %v121, %v350
    %v352 = vpop.f32.mrb[0].mxu0
    %v353 = vadd.f32 %v117, %v352
    %v354 = vpop.f32.mrb[0].mxu0
    %v355 = vadd.f32 %v121, %v354
    %356 = vmatprep.mubr.bf16.mxu0 0
    %357 = vmatmul.mubr.bf16.gmra.mrb[0].mxu0 %v79
    %v358 = vpop.f32.mrb[0].mxu0
    %v359 = vadd.f32 %v117, %v358
    %v360 = vpop.f32.mrb[0].mxu0
    %v361 = vadd.f32 %v121, %v360
    %v362 = vpop.f32.mrb[0].mxu0
    %v363 = vadd.f32 %v117, %v362
    %v364 = vpop.f32.mrb[0].mxu0
    %v365 = vadd.f32 %v121, %v364
    %366 = vdwg.mxu0
    %367 = vmatprep.subr.bf16.mxu0 %v233
    %368 = vmatpush1.bf16.msra.mxu0 %v232
    %369 = vmatprep.subr.bf16.mxu0 %v237
    %370 = vmatpush1.bf16.msra.mxu0 %v236
    %371 = vmatprep.subr.bf16.mxu0 %v241
    %372 = vmatpush1.bf16.msra.mxu0 %v240
    %373 = vmatprep.subr.bf16.mxu0 %v245
    %374 = vmatpush1.bf16.msra.mxu0 %v244
    %375 = vmatprep.subr.bf16.mxu0 %v249
    %376 = vmatpush1.bf16.msra.mxu0 %v248
    %377 = vmatprep.subr.bf16.mxu0 %v253
    %378 = vmatpush1.bf16.msra.mxu0 %v252
    %379 = vmatprep.subr.bf16.mxu0 %v257
    %380 = vmatpush1.bf16.msra.mxu0 %v256
    %381 = vmatprep.subr.bf16.mxu0 %v261
    %382 = vmatpush1.bf16.msra.mxu0 %v260
    %383 = vmatprep.subr.bf16.mxu0 0
    %384 = vmatpush1.bf16.msra.mxu0 0
    %385 = vmatprep.subr.bf16.mxu0 0
    %386 = vmatpush1.bf16.msra.mxu0 0
    %387 = vmatprep.subr.bf16.mxu0 0
    %388 = vmatpush1.bf16.msra.mxu0 0
    %389 = vmatprep.subr.bf16.mxu0 0
    %390 = vmatpush1.bf16.msra.mxu0 0
    %391 = vmatprep.subr.bf16.mxu0 0
    %392 = vmatpush1.bf16.msra.mxu0 0
    %393 = vmatprep.subr.bf16.mxu0 0
    %394 = vmatpush1.bf16.msra.mxu0 0
    %395 = vmatprep.subr.bf16.mxu0 0
    %396 = vmatpush1.bf16.msra.mxu0 0
    %397 = vmatprep.subr.bf16.mxu0 0
    %398 = vmatpush1.bf16.msra.mxu0 0
    %399 = vmatprep.mubr.bf16.mxu0 0
    %400 = vmatmul.mubr.bf16.gmra.mrb[0].mxu0 %v76
    %v401 = vpop.f32.mrb[0].mxu0
    %v402 = vadd.f32 %v125, %v401
    %v403 = vpop.f32.mrb[0].mxu0
    %v404 = vadd.f32 %v129, %v403
    %v405 = vpop.f32.mrb[0].mxu0
    %v406 = vadd.f32 %v125, %v405
    %v407 = vpop.f32.mrb[0].mxu0
    %v408 = vadd.f32 %v129, %v407
    %409 = vmatprep.mubr.bf16.mxu0 0
    %410 = vmatmul.mubr.bf16.gmra.mrb[0].mxu0 %v77
    %v411 = vpop.f32.mrb[0].mxu0
    %v412 = vadd.f32 %v125, %v411
    %v413 = vpop.f32.mrb[0].mxu0
    %v414 = vadd.f32 %v129, %v413
    %v415 = vpop.f32.mrb[0].mxu0
    %v416 = vadd.f32 %v125, %v415
    %v417 = vpop.f32.mrb[0].mxu0
    %v418 = vadd.f32 %v129, %v417
    %419 = vmatprep.mubr.bf16.mxu0 0
    %420 = vmatmul.mubr.bf16.gmra.mrb[0].mxu0 %v78
    %v421 = vpop.f32.mrb[0].mxu0
    %v422 = vadd.f32 %v125, %v421
    %v423 = vpop.f32.mrb[0].mxu0
    %v424 = vadd.f32 %v129, %v423
    %v425 = vpop.f32.mrb[0].mxu0
    %v426 = vadd.f32 %v125, %v425
    %v427 = vpop.f32.mrb[0].mxu0
    %v428 = vadd.f32 %v129, %v427
    %429 = vmatprep.mubr.bf16.mxu0 0
    %430 = vmatmul.mubr.bf16.gmra.mrb[0].mxu0 %v79
    %v431 = vpop.f32.mrb[0].mxu0
    %v432 = vadd.f32 %v125, %v431
    %v433 = vpop.f32.mrb[0].mxu0
    %v434 = vadd.f32 %v129, %v433
    %v435 = vpop.f32.mrb[0].mxu0
    %v436 = vadd.f32 %v125, %v435
    %v437 = vpop.f32.mrb[0].mxu0
    %v438 = vadd.f32 %v129, %v437
    %439 = vdwg.mxu0
    %440 = vst [vmem:[#allocation4] sm:$0xff] %v329
    %441 = vst [vmem:[#allocation4 + $0x8] sm:$0xff] %v331
    %442 = vst [vmem:[#allocation4 + $0x10] sm:$0xff] %v402
    %443 = vst [vmem:[#allocation4 + $0x18] sm:$0xff] %v404
    %444 = vst [vmem:[#allocation4 + $0x20] sm:$0xff] %v333
    %445 = vst [vmem:[#allocation4 + $0x28] sm:$0xff] %v335
    %446 = vst [vmem:[#allocation4 + $0x30] sm:$0xff] %v406
    %447 = vst [vmem:[#allocation4 + $0x38] sm:$0xff] %v408
    %448 = vst [vmem:[#allocation4 + $0x40] sm:$0xff] %v339
    %449 = vst [vmem:[#allocation4 + $0x48] sm:$0xff] %v341
    %450 = vst [vmem:[#allocation4 + $0x50] sm:$0xff] %v412
    %451 = vst [vmem:[#allocation4 + $0x58] sm:$0xff] %v414
    %452 = vst [vmem:[#allocation4 + $0x60] sm:$0xff] %v343
    %453 = vst [vmem:[#allocation4 + $0x68] sm:$0xff] %v345
    %454 = vst [vmem:[#allocation4 + $0x70] sm:$0xff] %v416
    %455 = vst [vmem:[#allocation4 + $0x78] sm:$0xff] %v418
    %456 = vst [vmem:[#allocation4 + $0x80] sm:$0xff] %v349
    %457 = vst [vmem:[#allocation4 + $0x88] sm:$0xff] %v351
    %458 = vst [vmem:[#allocation4 + $0x90] sm:$0xff] %v422
    %459 = vst [vmem:[#allocation4 + $0x98] sm:$0xff] %v424
    %460 = vst [vmem:[#allocation4 + $0xa0] sm:$0xff] %v353
    %461 = vst [vmem:[#allocation4 + $0xa8] sm:$0xff] %v355
    %462 = vst [vmem:[#allocation4 + $0xb0] sm:$0xff] %v426
    %463 = vst [vmem:[#allocation4 + $0xb8] sm:$0xff] %v428
    %464 = vst [vmem:[#allocation4 + $0xc0] sm:$0xff] %v359
    %465 = vst [vmem:[#allocation4 + $0xc8] sm:$0xff] %v361
    %466 = vst [vmem:[#allocation4 + $0xd0] sm:$0xff] %v432
    %467 = vst [vmem:[#allocation4 + $0xd8] sm:$0xff] %v434
    %468 = vst [vmem:[#allocation4 + $0xe0] sm:$0xff] %v363
    %469 = vst [vmem:[#allocation4 + $0xe8] sm:$0xff] %v365
    %470 = vst [vmem:[#allocation4 + $0xf0] sm:$0xff] %v436
    %471 = vst [vmem:[#allocation4 + $0xf8] sm:$0xff] %v438
    %s472 = smul.u32 0, 8
    %s473 = ssub.s32 8, %s472
    %p474 = scmp.lt.s32.totalorder %s473, 8
    %s475 = scalar_select %p474, %s473, 8
    %v476 = vld [vmem:[#allocation2] sm:$0xff]
    %s477 = scalar_lea.vmem [#allocation2], 8
    %v478 = vld [vmem:[%s477] sm:$0xff]
    %v479 = vld [vmem:[#allocation3] sm:$0xff]
    %s480 = scalar_lea.vmem [#allocation3], 8
    %v481 = vld [vmem:[%s480] sm:$0xff]
    %s482 = sadd.s32 %s475, 1
    // While loop
    $region34: #{tpu_custom_call.1} parent=1 // loop_pre_header
      _
    $region35: #{tpu_custom_call.1} parent=1 // loop_header
      %s484 = sphi 0, %s486
      %p485 = scmp.ge.s32.totalorder %s484, %s482
      %v489 = vphi %v476, %v815
      %v490 = vphi %v478, %v1437
      %v491 = vphi %v479, %v818
      %v492 = vphi %v481, %v1440
    $region36: #{tpu_custom_call.1} parent=1 // loop_header_branch
      %488 = sbr.rel (%p485) target = $region40
    $region37: #{tpu_custom_call.1} parent=1 // loop_body
      %p493 = scmp.gt.s32.totalorder %s484, 0
      %s494 = scalar_select %p493, %s484, 0
      %p495 = scmp.lt.s32.totalorder %s494, 7
      %s496 = scalar_select %p495, %s494, 7
      %s497 = smul.u32 %s496, 8
      %s498 = sshra.s32 %s497, 3
      %s499 = sand.u32 %s497, 7
      %s500 = smul.u32 %s498, 4
      %s501 = smul.addr %s500, 8
      %s502 = scalar_lea.vmem [#allocation4], %s501
      %v503 = vld [vmem:[%s502] sm:$0xff]
      %v504 = vld [vmem:[%s502 + $0x8] sm:$0xff]
      %v505 = vld [vmem:[%s502 + $0x10] sm:$0xff]
      %v506 = vld [vmem:[%s502 + $0x18] sm:$0xff]
      %v507 = vpack.c.bf16 %v489, %v489
      %v508 = vld [vmem:[#allocation10] sm:$0xff]
      %v509 = vld [vmem:[#allocation10 + $0x8] sm:$0xff]
      %v510 = vld [vmem:[#allocation10 + $0x10] sm:$0xff]
      %v511 = vld [vmem:[#allocation10 + $0x18] sm:$0xff]
      %v512 = vld [vmem:[#allocation10 + $0x20] sm:$0xff]
      %v513 = vld [vmem:[#allocation10 + $0x28] sm:$0xff]
      %v514 = vld [vmem:[#allocation10 + $0x30] sm:$0xff]
      %v515 = vld [vmem:[#allocation10 + $0x38] sm:$0xff]
      %v516 = vld [vmem:[#allocation10 + $0x40] sm:$0xff]
      %v517 = vld [vmem:[#allocation10 + $0x48] sm:$0xff]
      %v518 = vld [vmem:[#allocation10 + $0x50] sm:$0xff]
      %v519 = vld [vmem:[#allocation10 + $0x58] sm:$0xff]
      %v520 = vld [vmem:[#allocation10 + $0x60] sm:$0xff]
      %v521 = vld [vmem:[#allocation10 + $0x68] sm:$0xff]
      %v522 = vld [vmem:[#allocation10 + $0x70] sm:$0xff]
      %v523 = vld [vmem:[#allocation10 + $0x78] sm:$0xff]
      %v524 = vld [vmem:[#allocation10 + $0x80] sm:$0xff]
      %v525 = vld [vmem:[#allocation10 + $0x88] sm:$0xff]
      %v526 = vld [vmem:[#allocation10 + $0x90] sm:$0xff]
      %v527 = vld [vmem:[#allocation10 + $0x98] sm:$0xff]
      %v528 = vld [vmem:[#allocation10 + $0xa0] sm:$0xff]
      %v529 = vld [vmem:[#allocation10 + $0xa8] sm:$0xff]
      %v530 = vld [vmem:[#allocation10 + $0xb0] sm:$0xff]
      %v531 = vld [vmem:[#allocation10 + $0xb8] sm:$0xff]
      %v532 = vld [vmem:[#allocation10 + $0xc0] sm:$0xff]
      %v533 = vld [vmem:[#allocation10 + $0xc8] sm:$0xff]
      %v534 = vld [vmem:[#allocation10 + $0xd0] sm:$0xff]
      %v535 = vld [vmem:[#allocation10 + $0xd8] sm:$0xff]
      %v536 = vld [vmem:[#allocation10 + $0xe0] sm:$0xff]
      %v537 = vld [vmem:[#allocation10 + $0xe8] sm:$0xff]
      %v538 = vld [vmem:[#allocation10 + $0xf0] sm:$0xff]
      %v539 = vld [vmem:[#allocation10 + $0xf8] sm:$0xff]
      %v572 = vunpack.c.l.b16 %v508
      %v573 = vunpack.c.h.b16 %v508
      %v574 = vunpack.c.l.b16 %v509
      %v575 = vunpack.c.h.b16 %v509
      %v576 = vunpack.c.l.b16 %v510
      %v577 = vunpack.c.h.b16 %v510
      %v578 = vunpack.c.l.b16 %v511
      %v579 = vunpack.c.h.b16 %v511
      %v580 = vunpack.c.l.b16 %v512
      %v581 = vunpack.c.h.b16 %v512
      %v582 = vunpack.c.l.b16 %v513
      %v583 = vunpack.c.h.b16 %v513
      %v584 = vunpack.c.l.b16 %v514
      %v585 = vunpack.c.h.b16 %v514
      %v586 = vunpack.c.l.b16 %v515
      %v587 = vunpack.c.h.b16 %v515
      %v588 = vunpack.c.l.b16 %v516
      %v589 = vunpack.c.h.b16 %v516
      %v590 = vunpack.c.l.b16 %v517
      %v591 = vunpack.c.h.b16 %v517
      %v592 = vunpack.c.l.b16 %v518
      %v593 = vunpack.c.h.b16 %v518
      %v594 = vunpack.c.l.b16 %v519
      %v595 = vunpack.c.h.b16 %v519
      %v596 = vunpack.c.l.b16 %v520
      %v597 = vunpack.c.h.b16 %v520
      %v598 = vunpack.c.l.b16 %v521
      %v599 = vunpack.c.h.b16 %v521
      %v600 = vunpack.c.l.b16 %v522
      %v601 = vunpack.c.h.b16 %v522
      %v602 = vunpack.c.l.b16 %v523
      %v603 = vunpack.c.h.b16 %v523
      %v604 = vunpack.c.l.b16 %v524
      %v605 = vunpack.c.h.b16 %v524
      %v606 = vunpack.c.l.b16 %v525
      %v607 = vunpack.c.h.b16 %v525
      %v608 = vunpack.c.l.b16 %v526
      %v609 = vunpack.c.h.b16 %v526
      %v610 = vunpack.c.l.b16 %v527
      %v611 = vunpack.c.h.b16 %v527
      %v612 = vunpack.c.l.b16 %v528
      %v613 = vunpack.c.h.b16 %v528
      %v614 = vunpack.c.l.b16 %v529
      %v615 = vunpack.c.h.b16 %v529
      %v616 = vunpack.c.l.b16 %v530
      %v617 = vunpack.c.h.b16 %v530
      %v618 = vunpack.c.l.b16 %v531
      %v619 = vunpack.c.h.b16 %v531
      %v620 = vunpack.c.l.b16 %v532
      %v621 = vunpack.c.h.b16 %v532
      %v622 = vunpack.c.l.b16 %v533
      %v623 = vunpack.c.h.b16 %v533
      %v624 = vunpack.c.l.b16 %v534
      %v625 = vunpack.c.h.b16 %v534
      %v626 = vunpack.c.l.b16 %v535
      %v627 = vunpack.c.h.b16 %v535
      %v628 = vunpack.c.l.b16 %v536
      %v629 = vunpack.c.h.b16 %v536
      %v630 = vunpack.c.l.b16 %v537
      %v631 = vunpack.c.h.b16 %v537
      %v632 = vunpack.c.l.b16 %v538
      %v633 = vunpack.c.h.b16 %v538
      %v634 = vunpack.c.l.b16 %v539
      %v635 = vunpack.c.h.b16 %v539
      %v636 = vpack.c.b16 %v576, %v572
      %v637 = vpack.c.b16 %v577, %v573
      %v638 = vpack.c.b16 %v578, %v574
      %v639 = vpack.c.b16 %v579, %v575
      %v640 = vpack.c.b16 %v584, %v580
      %v641 = vpack.c.b16 %v585, %v581
      %v642 = vpack.c.b16 %v586, %v582
      %v643 = vpack.c.b16 %v587, %v583
      %v644 = vpack.c.b16 %v592, %v588
      %v645 = vpack.c.b16 %v593, %v589
      %v646 = vpack.c.b16 %v594, %v590
      %v647 = vpack.c.b16 %v595, %v591
      %v648 = vpack.c.b16 %v600, %v596
      %v649 = vpack.c.b16 %v601, %v597
      %v650 = vpack.c.b16 %v602, %v598
      %v651 = vpack.c.b16 %v603, %v599
      %v652 = vpack.c.b16 %v608, %v604
      %v653 = vpack.c.b16 %v609, %v605
      %v654 = vpack.c.b16 %v610, %v606
      %v655 = vpack.c.b16 %v611, %v607
      %v656 = vpack.c.b16 %v616, %v612
      %v657 = vpack.c.b16 %v617, %v613
      %v658 = vpack.c.b16 %v618, %v614
      %v659 = vpack.c.b16 %v619, %v615
      %v660 = vpack.c.b16 %v624, %v620
      %v661 = vpack.c.b16 %v625, %v621
      %v662 = vpack.c.b16 %v626, %v622
      %v663 = vpack.c.b16 %v627, %v623
      %v664 = vpack.c.b16 %v632, %v628
      %v665 = vpack.c.b16 %v633, %v629
      %v666 = vpack.c.b16 %v634, %v630
      %v667 = vpack.c.b16 %v635, %v631
      %700 = vmatprep.subr.bf16.mxu0 %v637
      %701 = vmatpush1.bf16.msra.mxu0 %v636
      %702 = vmatprep.subr.bf16.mxu0 %v641
      %703 = vmatpush1.bf16.msra.mxu0 %v640
      %704 = vmatprep.subr.bf16.mxu0 %v645
      %705 = vmatpush1.bf16.msra.mxu0 %v644
      %706 = vmatprep.subr.bf16.mxu0 %v649
      %707 = vmatpush1.bf16.msra.mxu0 %v648
      %708 = vmatprep.subr.bf16.mxu0 %v653
      %709 = vmatpush1.bf16.msra.mxu0 %v652
      %710 = vmatprep.subr.bf16.mxu0 %v657
      %711 = vmatpush1.bf16.msra.mxu0 %v656
      %712 = vmatprep.subr.bf16.mxu0 %v661
      %713 = vmatpush1.bf16.msra.mxu0 %v660
      %714 = vmatprep.subr.bf16.mxu0 %v665
      %715 = vmatpush1.bf16.msra.mxu0 %v664
      %716 = vmatprep.subr.bf16.mxu0 0
      %717 = vmatpush1.bf16.msra.mxu0 0
      %718 = vmatprep.subr.bf16.mxu0 0
      %719 = vmatpush1.bf16.msra.mxu0 0
      %720 = vmatprep.subr.bf16.mxu0 0
      %721 = vmatpush1.bf16.msra.mxu0 0
      %722 = vmatprep.subr.bf16.mxu0 0
      %723 = vmatpush1.bf16.msra.mxu0 0
      %724 = vmatprep.subr.bf16.mxu0 0
      %725 = vmatpush1.bf16.msra.mxu0 0
      %726 = vmatprep.subr.bf16.mxu0 0
      %727 = vmatpush1.bf16.msra.mxu0 0
      %728 = vmatprep.subr.bf16.mxu0 0
      %729 = vmatpush1.bf16.msra.mxu0 0
      %730 = vmatprep.subr.bf16.mxu0 0
      %731 = vmatpush1.bf16.msra.mxu0 0
      %732 = vmatprep.mubr.bf16.mxu0 0
      %733 = vmatmul.mubr.bf16.gmra.mrb[0].mxu0 %v507
      %v734 = vpop.f32.mrb[0].mxu0
      %v735 = vadd.f32 0.0, %v734
      %v736 = vpop.f32.mrb[0].mxu0
      %v737 = vadd.f32 0.0, %v736
      %v738 = vpop.f32.mrb[0].mxu0
      %v739 = vpop.f32.mrb[0].mxu0
      %740 = vdwg.mxu0
      %741 = vmatprep.subr.bf16.mxu0 %v639
      %742 = vmatpush1.bf16.msra.mxu0 %v638
      %743 = vmatprep.subr.bf16.mxu0 %v643
      %744 = vmatpush1.bf16.msra.mxu0 %v642
      %745 = vmatprep.subr.bf16.mxu0 %v647
      %746 = vmatpush1.bf16.msra.mxu0 %v646
      %747 = vmatprep.subr.bf16.mxu0 %v651
      %748 = vmatpush1.bf16.msra.mxu0 %v650
      %749 = vmatprep.subr.bf16.mxu0 %v655
      %750 = vmatpush1.bf16.msra.mxu0 %v654
      %751 = vmatprep.subr.bf16.mxu0 %v659
      %752 = vmatpush1.bf16.msra.mxu0 %v658
      %753 = vmatprep.subr.bf16.mxu0 %v663
      %754 = vmatpush1.bf16.msra.mxu0 %v662
      %755 = vmatprep.subr.bf16.mxu0 %v667
      %756 = vmatpush1.bf16.msra.mxu0 %v666
      %757 = vmatprep.subr.bf16.mxu0 0
      %758 = vmatpush1.bf16.msra.mxu0 0
      %759 = vmatprep.subr.bf16.mxu0 0
      %760 = vmatpush1.bf16.msra.mxu0 0
      %761 = vmatprep.subr.bf16.mxu0 0
      %762 = vmatpush1.bf16.msra.mxu0 0
      %763 = vmatprep.subr.bf16.mxu0 0
      %764 = vmatpush1.bf16.msra.mxu0 0
      %765 = vmatprep.subr.bf16.mxu0 0
      %766 = vmatpush1.bf16.msra.mxu0 0
      %767 = vmatprep.subr.bf16.mxu0 0
      %768 = vmatpush1.bf16.msra.mxu0 0
      %769 = vmatprep.subr.bf16.mxu0 0
      %770 = vmatpush1.bf16.msra.mxu0 0
      %771 = vmatprep.subr.bf16.mxu0 0
      %772 = vmatpush1.bf16.msra.mxu0 0
      %773 = vmatprep.mubr.bf16.mxu0 0
      %774 = vmatmul.mubr.bf16.gmra.mrb[0].mxu0 %v507
      %v775 = vpop.f32.mrb[0].mxu0
      %v776 = vadd.f32 0.0, %v775
      %v777 = vpop.f32.mrb[0].mxu0
      %v778 = vadd.f32 0.0, %v777
      %v779 = vpop.f32.mrb[0].mxu0
      %v780 = vpop.f32.mrb[0].mxu0
      %781 = vdwg.mxu0
      %v782 = vadd.f32 %v503, %v735
      %v783 = vadd.f32 %v504, %v737
      %v784 = vadd.f32 %v505, %v776
      %v785 = vadd.f32 %v506, %v778
      %v786 = vmul.f32 %v782, 0.5
      %v787 = vtanh.pop %v786
      %v788 = vmul.f32 %v787, 0.5
      %v789 = vadd.f32 %v788, 0.5
      %v790 = vmul.f32 %v783, 0.5
      %v791 = vtanh.pop %v790
      %v792 = vmul.f32 %v791, 0.5
      %v793 = vadd.f32 %v792, 0.5
      %v794 = vtanh.pop %v784
      %v795 = vmul.f32 %v785, 0.5
      %v796 = vtanh.pop %v795
      %v797 = vmul.f32 %v796, 0.5
      %v798 = vadd.f32 %v797, 0.5
      %v799 = vmul.f32 %v793, %v491
      %v800 = vmul.f32 %v789, %v794
      %v801 = vadd.f32 %v799, %v800
      %v802 = vtanh.pop %v801
      %v803 = vmul.f32 %v798, %v802
      %p804 = scmp.ge.s32.totalorder %s484, 0
      %p805 = scmp.lt.s32.totalorder %s484, %s475
      %p806 = pnand %p804, %p805
      %p807 = pneg %p806
      %s808 = scalar_select %p807, 1, 0
      %s809 = scvt.s32.f32 %s808
      %v810 = vstv %s809
      %v811 = vmul.f32 %v810, %v803
      %s812 = ssub.f32 1.0, %s809
      %v813 = vstv %s812
      %v814 = vmul.f32 %v813, %v489
      %v815 = vadd.f32 %v811, %v814
      %v816 = vmul.f32 %v810, %v801
      %v817 = vmul.f32 %v813, %v491
      %v818 = vadd.f32 %v816, %v817
      %s819 = ssub.s32 %s484, 1
      %p820 = scmp.gt.s32.totalorder %s819, 0
      %s821 = scalar_select %p820, %s819, 0
      %p822 = scmp.lt.s32.totalorder %s821, 7
      %s823 = scalar_select %p822, %s821, 7
      %s824 = scalar_lea.vmem [#allocation8], 256
      %v825 = vld [vmem:[%s824] sm:$0xff]
      %v826 = vld [vmem:[%s824 + $0x8] sm:$0xff]
      %v827 = vld [vmem:[%s824 + $0x10] sm:$0xff]
      %v828 = vld [vmem:[%s824 + $0x18] sm:$0xff]
      %v829 = vld [vmem:[%s824 + $0x20] sm:$0xff]
      %v830 = vld [vmem:[%s824 + $0x28] sm:$0xff]
      %v831 = vld [vmem:[%s824 + $0x30] sm:$0xff]
      %v832 = vld [vmem:[%s824 + $0x38] sm:$0xff]
      %v833 = vld [vmem:[%s824 + $0x40] sm:$0xff]
      %v834 = vld [vmem:[%s824 + $0x48] sm:$0xff]
      %v835 = vld [vmem:[%s824 + $0x50] sm:$0xff]
      %v836 = vld [vmem:[%s824 + $0x58] sm:$0xff]
      %v837 = vld [vmem:[%s824 + $0x60] sm:$0xff]
      %v838 = vld [vmem:[%s824 + $0x68] sm:$0xff]
      %v839 = vld [vmem:[%s824 + $0x70] sm:$0xff]
      %v840 = vld [vmem:[%s824 + $0x78] sm:$0xff]
      %v841 = vld [vmem:[%s824 + $0x80] sm:$0xff]
      %v842 = vld [vmem:[%s824 + $0x88] sm:$0xff]
      %v843 = vld [vmem:[%s824 + $0x90] sm:$0xff]
      %v844 = vld [vmem:[%s824 + $0x98] sm:$0xff]
      %v845 = vld [vmem:[%s824 + $0xa0] sm:$0xff]
      %v846 = vld [vmem:[%s824 + $0xa8] sm:$0xff]
      %v847 = vld [vmem:[%s824 + $0xb0] sm:$0xff]
      %v848 = vld [vmem:[%s824 + $0xb8] sm:$0xff]
      %v849 = vld [vmem:[%s824 + $0xc0] sm:$0xff]
      %v850 = vld [vmem:[%s824 + $0xc8] sm:$0xff]
      %v851 = vld [vmem:[%s824 + $0xd0] sm:$0xff]
      %v852 = vld [vmem:[%s824 + $0xd8] sm:$0xff]
      %v853 = vld [vmem:[%s824 + $0xe0] sm:$0xff]
      %v854 = vld [vmem:[%s824 + $0xe8] sm:$0xff]
      %v855 = vld [vmem:[%s824 + $0xf0] sm:$0xff]
      %v856 = vld [vmem:[%s824 + $0xf8] sm:$0xff]
      %s857 = scalar_lea.vmem %s3, 4
      %v858 = vld [vmem:[%s857] sm:$0xf]
      %v860 = vlaneseq
      %v861 = vshrl.u32 %v860, 7
      %v862 = vsub.s32 0, %v861
      %v863 = vrot.slane %v858, %v862
      %v864 = vlaneseq
      %v865 = vshrl.u32 %v864, 7
      %v866 = vsub.s32 1, %v865
      %v867 = vrot.slane %v858, %v866
      %v868 = vlaneseq
      %v869 = vshrl.u32 %v868, 7
      %v870 = vsub.s32 2, %v869
      %v871 = vrot.slane %v858, %v870
      %v872 = vlaneseq
      %v873 = vshrl.u32 %v872, 7
      %v874 = vsub.s32 3, %v873
      %v875 = vrot.slane %v858, %v874
      %v912 = vunpack.c.l.b16 %v825
      %v913 = vunpack.c.h.b16 %v825
      %v914 = vunpack.c.l.b16 %v826
      %v915 = vunpack.c.h.b16 %v826
      %v916 = vunpack.c.l.b16 %v827
      %v917 = vunpack.c.h.b16 %v827
      %v918 = vunpack.c.l.b16 %v828
      %v919 = vunpack.c.h.b16 %v828
      %v920 = vunpack.c.l.b16 %v829
      %v921 = vunpack.c.h.b16 %v829
      %v922 = vunpack.c.l.b16 %v830
      %v923 = vunpack.c.h.b16 %v830
      %v924 = vunpack.c.l.b16 %v831
      %v925 = vunpack.c.h.b16 %v831
      %v926 = vunpack.c.l.b16 %v832
      %v927 = vunpack.c.h.b16 %v832
      %v928 = vunpack.c.l.b16 %v833
      %v929 = vunpack.c.h.b16 %v833
      %v930 = vunpack.c.l.b16 %v834
      %v931 = vunpack.c.h.b16 %v834
      %v932 = vunpack.c.l.b16 %v835
      %v933 = vunpack.c.h.b16 %v835
      %v934 = vunpack.c.l.b16 %v836
      %v935 = vunpack.c.h.b16 %v836
      %v936 = vunpack.c.l.b16 %v837
      %v937 = vunpack.c.h.b16 %v837
      %v938 = vunpack.c.l.b16 %v838
      %v939 = vunpack.c.h.b16 %v838
      %v940 = vunpack.c.l.b16 %v839
      %v941 = vunpack.c.h.b16 %v839
      %v942 = vunpack.c.l.b16 %v840
      %v943 = vunpack.c.h.b16 %v840
      %v944 = vunpack.c.l.b16 %v841
      %v945 = vunpack.c.h.b16 %v841
      %v946 = vunpack.c.l.b16 %v842
      %v947 = vunpack.c.h.b16 %v842
      %v948 = vunpack.c.l.b16 %v843
      %v949 = vunpack.c.h.b16 %v843
      %v950 = vunpack.c.l.b16 %v844
      %v951 = vunpack.c.h.b16 %v844
      %v952 = vunpack.c.l.b16 %v845
      %v953 = vunpack.c.h.b16 %v845
      %v954 = vunpack.c.l.b16 %v846
      %v955 = vunpack.c.h.b16 %v846
      %v956 = vunpack.c.l.b16 %v847
      %v957 = vunpack.c.h.b16 %v847
      %v958 = vunpack.c.l.b16 %v848
      %v959 = vunpack.c.h.b16 %v848
      %v960 = vunpack.c.l.b16 %v849
      %v961 = vunpack.c.h.b16 %v849
      %v962 = vunpack.c.l.b16 %v850
      %v963 = vunpack.c.h.b16 %v850
      %v964 = vunpack.c.l.b16 %v851
      %v965 = vunpack.c.h.b16 %v851
      %v966 = vunpack.c.l.b16 %v852
      %v967 = vunpack.c.h.b16 %v852
      %v968 = vunpack.c.l.b16 %v853
      %v969 = vunpack.c.h.b16 %v853
      %v970 = vunpack.c.l.b16 %v854
      %v971 = vunpack.c.h.b16 %v854
      %v972 = vunpack.c.l.b16 %v855
      %v973 = vunpack.c.h.b16 %v855
      %v974 = vunpack.c.l.b16 %v856
      %v975 = vunpack.c.h.b16 %v856
      %v976 = vpack.c.b16 %v916, %v912
      %v977 = vpack.c.b16 %v917, %v913
      %v978 = vpack.c.b16 %v918, %v914
      %v979 = vpack.c.b16 %v919, %v915
      %v980 = vpack.c.b16 %v924, %v920
      %v981 = vpack.c.b16 %v925, %v921
      %v982 = vpack.c.b16 %v926, %v922
      %v983 = vpack.c.b16 %v927, %v923
      %v984 = vpack.c.b16 %v932, %v928
      %v985 = vpack.c.b16 %v933, %v929
      %v986 = vpack.c.b16 %v934, %v930
      %v987 = vpack.c.b16 %v935, %v931
      %v988 = vpack.c.b16 %v940, %v936
      %v989 = vpack.c.b16 %v941, %v937
      %v990 = vpack.c.b16 %v942, %v938
      %v991 = vpack.c.b16 %v943, %v939
      %v992 = vpack.c.b16 %v948, %v944
      %v993 = vpack.c.b16 %v949, %v945
      %v994 = vpack.c.b16 %v950, %v946
      %v995 = vpack.c.b16 %v951, %v947
      %v996 = vpack.c.b16 %v956, %v952
      %v997 = vpack.c.b16 %v957, %v953
      %v998 = vpack.c.b16 %v958, %v954
      %v999 = vpack.c.b16 %v959, %v955
      %v1000 = vpack.c.b16 %v964, %v960
      %v1001 = vpack.c.b16 %v965, %v961
      %v1002 = vpack.c.b16 %v966, %v962
      %v1003 = vpack.c.b16 %v967, %v963
      %v1004 = vpack.c.b16 %v972, %v968
      %v1005 = vpack.c.b16 %v973, %v969
      %v1006 = vpack.c.b16 %v974, %v970
      %v1007 = vpack.c.b16 %v975, %v971
      %1040 = vmatprep.subr.bf16.mxu0 %v977
      %1041 = vmatpush1.bf16.msra.mxu0 %v976
      %1042 = vmatprep.subr.bf16.mxu0 %v981
      %1043 = vmatpush1.bf16.msra.mxu0 %v980
      %1044 = vmatprep.subr.bf16.mxu0 %v985
      %1045 = vmatpush1.bf16.msra.mxu0 %v984
      %1046 = vmatprep.subr.bf16.mxu0 %v989
      %1047 = vmatpush1.bf16.msra.mxu0 %v988
      %1048 = vmatprep.subr.bf16.mxu0 %v993
      %1049 = vmatpush1.bf16.msra.mxu0 %v992
      %1050 = vmatprep.subr.bf16.mxu0 %v997
      %1051 = vmatpush1.bf16.msra.mxu0 %v996
      %1052 = vmatprep.subr.bf16.mxu0 %v1001
      %1053 = vmatpush1.bf16.msra.mxu0 %v1000
      %1054 = vmatprep.subr.bf16.mxu0 %v1005
      %1055 = vmatpush1.bf16.msra.mxu0 %v1004
      %1056 = vmatprep.subr.bf16.mxu0 0
      %1057 = vmatpush1.bf16.msra.mxu0 0
      %1058 = vmatprep.subr.bf16.mxu0 0
      %1059 = vmatpush1.bf16.msra.mxu0 0
      %1060 = vmatprep.subr.bf16.mxu0 0
      %1061 = vmatpush1.bf16.msra.mxu0 0
      %1062 = vmatprep.subr.bf16.mxu0 0
      %1063 = vmatpush1.bf16.msra.mxu0 0
      %1064 = vmatprep.subr.bf16.mxu0 0
      %1065 = vmatpush1.bf16.msra.mxu0 0
      %1066 = vmatprep.subr.bf16.mxu0 0
      %1067 = vmatpush1.bf16.msra.mxu0 0
      %1068 = vmatprep.subr.bf16.mxu0 0
      %1069 = vmatpush1.bf16.msra.mxu0 0
      %1070 = vmatprep.subr.bf16.mxu0 0
      %1071 = vmatpush1.bf16.msra.mxu0 0
      %1072 = vmatprep.mubr.bf16.mxu0 0
      %1073 = vmatmul.mubr.bf16.gmra.mrb[0].mxu0 %v507
      %v1074 = vpop.f32.mrb[0].mxu0
      %v1075 = vadd.f32 %v863, %v1074
      %v1076 = vpop.f32.mrb[0].mxu0
      %v1077 = vadd.f32 %v867, %v1076
      %v1078 = vpop.f32.mrb[0].mxu0
      %v1079 = vpop.f32.mrb[0].mxu0
      %1080 = vdwg.mxu0
      %1081 = vmatprep.subr.bf16.mxu0 %v979
      %1082 = vmatpush1.bf16.msra.mxu0 %v978
      %1083 = vmatprep.subr.bf16.mxu0 %v983
      %1084 = vmatpush1.bf16.msra.mxu0 %v982
      %1085 = vmatprep.subr.bf16.mxu0 %v987
      %1086 = vmatpush1.bf16.msra.mxu0 %v986
      %1087 = vmatprep.subr.bf16.mxu0 %v991
      %1088 = vmatpush1.bf16.msra.mxu0 %v990
      %1089 = vmatprep.subr.bf16.mxu0 %v995
      %1090 = vmatpush1.bf16.msra.mxu0 %v994
      %1091 = vmatprep.subr.bf16.mxu0 %v999
      %1092 = vmatpush1.bf16.msra.mxu0 %v998
      %1093 = vmatprep.subr.bf16.mxu0 %v1003
      %1094 = vmatpush1.bf16.msra.mxu0 %v1002
      %1095 = vmatprep.subr.bf16.mxu0 %v1007
      %1096 = vmatpush1.bf16.msra.mxu0 %v1006
      %1097 = vmatprep.subr.bf16.mxu0 0
      %1098 = vmatpush1.bf16.msra.mxu0 0
      %1099 = vmatprep.subr.bf16.mxu0 0
      %1100 = vmatpush1.bf16.msra.mxu0 0
      %1101 = vmatprep.subr.bf16.mxu0 0
      %1102 = vmatpush1.bf16.msra.mxu0 0
      %1103 = vmatprep.subr.bf16.mxu0 0
      %1104 = vmatpush1.bf16.msra.mxu0 0
      %1105 = vmatprep.subr.bf16.mxu0 0
      %1106 = vmatpush1.bf16.msra.mxu0 0
      %1107 = vmatprep.subr.bf16.mxu0 0
      %1108 = vmatpush1.bf16.msra.mxu0 0
      %1109 = vmatprep.subr.bf16.mxu0 0
      %1110 = vmatpush1.bf16.msra.mxu0 0
      %1111 = vmatprep.subr.bf16.mxu0 0
      %1112 = vmatpush1.bf16.msra.mxu0 0
      %1113 = vmatprep.mubr.bf16.mxu0 0
      %1114 = vmatmul.mubr.bf16.gmra.mrb[0].mxu0 %v507
      %v1115 = vpop.f32.mrb[0].mxu0
      %v1116 = vadd.f32 %v871, %v1115
      %v1117 = vpop.f32.mrb[0].mxu0
      %v1118 = vadd.f32 %v875, %v1117
      %v1119 = vpop.f32.mrb[0].mxu0
      %v1120 = vpop.f32.mrb[0].mxu0
      %1121 = vdwg.mxu0
      %v1122 = vpack.c.bf16 %v490, %v490
      %s1123 = scalar_lea.vmem [#allocation10], 256
      %v1124 = vld [vmem:[%s1123] sm:$0xff]
      %v1125 = vld [vmem:[%s1123 + $0x8] sm:$0xff]
      %v1126 = vld [vmem:[%s1123 + $0x10] sm:$0xff]
      %v1127 = vld [vmem:[%s1123 + $0x18] sm:$0xff]
      %v1128 = vld [vmem:[%s1123 + $0x20] sm:$0xff]
      %v1129 = vld [vmem:[%s1123 + $0x28] sm:$0xff]
      %v1130 = vld [vmem:[%s1123 + $0x30] sm:$0xff]
      %v1131 = vld [vmem:[%s1123 + $0x38] sm:$0xff]
      %v1132 = vld [vmem:[%s1123 + $0x40] sm:$0xff]
      %v1133 = vld [vmem:[%s1123 + $0x48] sm:$0xff]
      %v1134 = vld [vmem:[%s1123 + $0x50] sm:$0xff]
      %v1135 = vld [vmem:[%s1123 + $0x58] sm:$0xff]
      %v1136 = vld [vmem:[%s1123 + $0x60] sm:$0xff]
      %v1137 = vld [vmem:[%s1123 + $0x68] sm:$0xff]
      %v1138 = vld [vmem:[%s1123 + $0x70] sm:$0xff]
      %v1139 = vld [vmem:[%s1123 + $0x78] sm:$0xff]
      %v1140 = vld [vmem:[%s1123 + $0x80] sm:$0xff]
      %v1141 = vld [vmem:[%s1123 + $0x88] sm:$0xff]
      %v1142 = vld [vmem:[%s1123 + $0x90] sm:$0xff]
      %v1143 = vld [vmem:[%s1123 + $0x98] sm:$0xff]
      %v1144 = vld [vmem:[%s1123 + $0xa0] sm:$0xff]
      %v1145 = vld [vmem:[%s1123 + $0xa8] sm:$0xff]
      %v1146 = vld [vmem:[%s1123 + $0xb0] sm:$0xff]
      %v1147 = vld [vmem:[%s1123 + $0xb8] sm:$0xff]
      %v1148 = vld [vmem:[%s1123 + $0xc0] sm:$0xff]
      %v1149 = vld [vmem:[%s1123 + $0xc8] sm:$0xff]
      %v1150 = vld [vmem:[%s1123 + $0xd0] sm:$0xff]
      %v1151 = vld [vmem:[%s1123 + $0xd8] sm:$0xff]
      %v1152 = vld [vmem:[%s1123 + $0xe0] sm:$0xff]
      %v1153 = vld [vmem:[%s1123 + $0xe8] sm:$0xff]
      %v1154 = vld [vmem:[%s1123 + $0xf0] sm:$0xff]
      %v1155 = vld [vmem:[%s1123 + $0xf8] sm:$0xff]
      %v1188 = vunpack.c.l.b16 %v1124
      %v1189 = vunpack.c.h.b16 %v1124
      %v1190 = vunpack.c.l.b16 %v1125
      %v1191 = vunpack.c.h.b16 %v1125
      %v1192 = vunpack.c.l.b16 %v1126
      %v1193 = vunpack.c.h.b16 %v1126
      %v1194 = vunpack.c.l.b16 %v1127
      %v1195 = vunpack.c.h.b16 %v1127
      %v1196 = vunpack.c.l.b16 %v1128
      %v1197 = vunpack.c.h.b16 %v1128
      %v1198 = vunpack.c.l.b16 %v1129
      %v1199 = vunpack.c.h.b16 %v1129
      %v1200 = vunpack.c.l.b16 %v1130
      %v1201 = vunpack.c.h.b16 %v1130
      %v1202 = vunpack.c.l.b16 %v1131
      %v1203 = vunpack.c.h.b16 %v1131
      %v1204 = vunpack.c.l.b16 %v1132
      %v1205 = vunpack.c.h.b16 %v1132
      %v1206 = vunpack.c.l.b16 %v1133
      %v1207 = vunpack.c.h.b16 %v1133
      %v1208 = vunpack.c.l.b16 %v1134
      %v1209 = vunpack.c.h.b16 %v1134
      %v1210 = vunpack.c.l.b16 %v1135
      %v1211 = vunpack.c.h.b16 %v1135
      %v1212 = vunpack.c.l.b16 %v1136
      %v1213 = vunpack.c.h.b16 %v1136
      %v1214 = vunpack.c.l.b16 %v1137
      %v1215 = vunpack.c.h.b16 %v1137
      %v1216 = vunpack.c.l.b16 %v1138
      %v1217 = vunpack.c.h.b16 %v1138
      %v1218 = vunpack.c.l.b16 %v1139
      %v1219 = vunpack.c.h.b16 %v1139
      %v1220 = vunpack.c.l.b16 %v1140
      %v1221 = vunpack.c.h.b16 %v1140
      %v1222 = vunpack.c.l.b16 %v1141
      %v1223 = vunpack.c.h.b16 %v1141
      %v1224 = vunpack.c.l.b16 %v1142
      %v1225 = vunpack.c.h.b16 %v1142
      %v1226 = vunpack.c.l.b16 %v1143
      %v1227 = vunpack.c.h.b16 %v1143
      %v1228 = vunpack.c.l.b16 %v1144
      %v1229 = vunpack.c.h.b16 %v1144
      %v1230 = vunpack.c.l.b16 %v1145
      %v1231 = vunpack.c.h.b16 %v1145
      %v1232 = vunpack.c.l.b16 %v1146
      %v1233 = vunpack.c.h.b16 %v1146
      %v1234 = vunpack.c.l.b16 %v1147
      %v1235 = vunpack.c.h.b16 %v1147
      %v1236 = vunpack.c.l.b16 %v1148
      %v1237 = vunpack.c.h.b16 %v1148
      %v1238 = vunpack.c.l.b16 %v1149
      %v1239 = vunpack.c.h.b16 %v1149
      %v1240 = vunpack.c.l.b16 %v1150
      %v1241 = vunpack.c.h.b16 %v1150
      %v1242 = vunpack.c.l.b16 %v1151
      %v1243 = vunpack.c.h.b16 %v1151
      %v1244 = vunpack.c.l.b16 %v1152
      %v1245 = vunpack.c.h.b16 %v1152
      %v1246 = vunpack.c.l.b16 %v1153
      %v1247 = vunpack.c.h.b16 %v1153
      %v1248 = vunpack.c.l.b16 %v1154
      %v1249 = vunpack.c.h.b16 %v1154
      %v1250 = vunpack.c.l.b16 %v1155
      %v1251 = vunpack.c.h.b16 %v1155
      %v1252 = vpack.c.b16 %v1192, %v1188
      %v1253 = vpack.c.b16 %v1193, %v1189
      %v1254 = vpack.c.b16 %v1194, %v1190
      %v1255 = vpack.c.b16 %v1195, %v1191
      %v1256 = vpack.c.b16 %v1200, %v1196
      %v1257 = vpack.c.b16 %v1201, %v1197
      %v1258 = vpack.c.b16 %v1202, %v1198
      %v1259 = vpack.c.b16 %v1203, %v1199
      %v1260 = vpack.c.b16 %v1208, %v1204
      %v1261 = vpack.c.b16 %v1209, %v1205
      %v1262 = vpack.c.b16 %v1210, %v1206
      %v1263 = vpack.c.b16 %v1211, %v1207
      %v1264 = vpack.c.b16 %v1216, %v1212
      %v1265 = vpack.c.b16 %v1217, %v1213
      %v1266 = vpack.c.b16 %v1218, %v1214
      %v1267 = vpack.c.b16 %v1219, %v1215
      %v1268 = vpack.c.b16 %v1224, %v1220
      %v1269 = vpack.c.b16 %v1225, %v1221
      %v1270 = vpack.c.b16 %v1226, %v1222
      %v1271 = vpack.c.b16 %v1227, %v1223
      %v1272 = vpack.c.b16 %v1232, %v1228
      %v1273 = vpack.c.b16 %v1233, %v1229
      %v1274 = vpack.c.b16 %v1234, %v1230
      %v1275 = vpack.c.b16 %v1235, %v1231
      %v1276 = vpack.c.b16 %v1240, %v1236
      %v1277 = vpack.c.b16 %v1241, %v1237
      %v1278 = vpack.c.b16 %v1242, %v1238
      %v1279 = vpack.c.b16 %v1243, %v1239
      %v1280 = vpack.c.b16 %v1248, %v1244
      %v1281 = vpack.c.b16 %v1249, %v1245
      %v1282 = vpack.c.b16 %v1250, %v1246
      %v1283 = vpack.c.b16 %v1251, %v1247
      %1316 = vmatprep.subr.bf16.mxu0 %v1253
      %1317 = vmatpush1.bf16.msra.mxu0 %v1252
      %1318 = vmatprep.subr.bf16.mxu0 %v1257
      %1319 = vmatpush1.bf16.msra.mxu0 %v1256
      %1320 = vmatprep.subr.bf16.mxu0 %v1261
      %1321 = vmatpush1.bf16.msra.mxu0 %v1260
      %1322 = vmatprep.subr.bf16.mxu0 %v1265
      %1323 = vmatpush1.bf16.msra.mxu0 %v1264
      %1324 = vmatprep.subr.bf16.mxu0 %v1269
      %1325 = vmatpush1.bf16.msra.mxu0 %v1268
      %1326 = vmatprep.subr.bf16.mxu0 %v1273
      %1327 = vmatpush1.bf16.msra.mxu0 %v1272
      %1328 = vmatprep.subr.bf16.mxu0 %v1277
      %1329 = vmatpush1.bf16.msra.mxu0 %v1276
      %1330 = vmatprep.subr.bf16.mxu0 %v1281
      %1331 = vmatpush1.bf16.msra.mxu0 %v1280
      %1332 = vmatprep.subr.bf16.mxu0 0
      %1333 = vmatpush1.bf16.msra.mxu0 0
      %1334 = vmatprep.subr.bf16.mxu0 0
      %1335 = vmatpush1.bf16.msra.mxu0 0
      %1336 = vmatprep.subr.bf16.mxu0 0
      %1337 = vmatpush1.bf16.msra.mxu0 0
      %1338 = vmatprep.subr.bf16.mxu0 0
      %1339 = vmatpush1.bf16.msra.mxu0 0
      %1340 = vmatprep.subr.bf16.mxu0 0
      %1341 = vmatpush1.bf16.msra.mxu0 0
      %1342 = vmatprep.subr.bf16.mxu0 0
      %1343 = vmatpush1.bf16.msra.mxu0 0
      %1344 = vmatprep.subr.bf16.mxu0 0
      %1345 = vmatpush1.bf16.msra.mxu0 0
      %1346 = vmatprep.subr.bf16.mxu0 0
      %1347 = vmatpush1.bf16.msra.mxu0 0
      %1348 = vmatprep.mubr.bf16.mxu0 0
      %1349 = vmatmul.mubr.bf16.gmra.mrb[0].mxu0 %v1122
      %v1350 = vpop.f32.mrb[0].mxu0
      %v1351 = vadd.f32 0.0, %v1350
      %v1352 = vpop.f32.mrb[0].mxu0
      %v1353 = vadd.f32 0.0, %v1352
      %v1354 = vpop.f32.mrb[0].mxu0
      %v1355 = vpop.f32.mrb[0].mxu0
      %1356 = vdwg.mxu0
      %1357 = vmatprep.subr.bf16.mxu0 %v1255
      %1358 = vmatpush1.bf16.msra.mxu0 %v1254
      %1359 = vmatprep.subr.bf16.mxu0 %v1259
      %1360 = vmatpush1.bf16.msra.mxu0 %v1258
      %1361 = vmatprep.subr.bf16.mxu0 %v1263
      %1362 = vmatpush1.bf16.msra.mxu0 %v1262
      %1363 = vmatprep.subr.bf16.mxu0 %v1267
      %1364 = vmatpush1.bf16.msra.mxu0 %v1266
      %1365 = vmatprep.subr.bf16.mxu0 %v1271
      %1366 = vmatpush1.bf16.msra.mxu0 %v1270
      %1367 = vmatprep.subr.bf16.mxu0 %v1275
      %1368 = vmatpush1.bf16.msra.mxu0 %v1274
      %1369 = vmatprep.subr.bf16.mxu0 %v1279
      %1370 = vmatpush1.bf16.msra.mxu0 %v1278
      %1371 = vmatprep.subr.bf16.mxu0 %v1283
      %1372 = vmatpush1.bf16.msra.mxu0 %v1282
      %1373 = vmatprep.subr.bf16.mxu0 0
      %1374 = vmatpush1.bf16.msra.mxu0 0
      %1375 = vmatprep.subr.bf16.mxu0 0
      %1376 = vmatpush1.bf16.msra.mxu0 0
      %1377 = vmatprep.subr.bf16.mxu0 0
      %1378 = vmatpush1.bf16.msra.mxu0 0
      %1379 = vmatprep.subr.bf16.mxu0 0
      %1380 = vmatpush1.bf16.msra.mxu0 0
      %1381 = vmatprep.subr.bf16.mxu0 0
      %1382 = vmatpush1.bf16.msra.mxu0 0
      %1383 = vmatprep.subr.bf16.mxu0 0
      %1384 = vmatpush1.bf16.msra.mxu0 0
      %1385 = vmatprep.subr.bf16.mxu0 0
      %1386 = vmatpush1.bf16.msra.mxu0 0
      %1387 = vmatprep.subr.bf16.mxu0 0
      %1388 = vmatpush1.bf16.msra.mxu0 0
      %1389 = vmatprep.mubr.bf16.mxu0 0
      %1390 = vmatmul.mubr.bf16.gmra.mrb[0].mxu0 %v1122
      %v1391 = vpop.f32.mrb[0].mxu0
      %v1392 = vadd.f32 0.0, %v1391
      %v1393 = vpop.f32.mrb[0].mxu0
      %v1394 = vadd.f32 0.0, %v1393
      %v1395 = vpop.f32.mrb[0].mxu0
      %v1396 = vpop.f32.mrb[0].mxu0
      %1397 = vdwg.mxu0
      %v1398 = vadd.f32 %v1075, %v1351
      %v1399 = vadd.f32 %v1077, %v1353
      %v1400 = vadd.f32 %v1116, %v1392
      %v1401 = vadd.f32 %v1118, %v1394
      %v1402 = vmul.f32 %v1398, 0.5
      %v1403 = vtanh.pop %v1402
      %v1404 = vmul.f32 %v1403, 0.5
      %v1405 = vadd.f32 %v1404, 0.5
      %v1406 = vmul.f32 %v1399, 0.5
      %v1407 = vtanh.pop %v1406
      %v1408 = vmul.f32 %v1407, 0.5
      %v1409 = vadd.f32 %v1408, 0.5
      %v1410 = vtanh.pop %v1400
      %v1411 = vmul.f32 %v1401, 0.5
      %v1412 = vtanh.pop %v1411
      %v1413 = vmul.f32 %v1412, 0.5
      %v1414 = vadd.f32 %v1413, 0.5
      %v1415 = vmul.f32 %v1409, %v492
      %v1416 = vmul.f32 %v1405, %v1410
      %v1417 = vadd.f32 %v1415, %v1416
      %v1418 = vtanh.pop %v1417
      %v1419 = vmul.f32 %v1414, %v1418
      %s1420 = smul.u32 %s823, 8
      %s1421 = scalar_lea.vmem [#allocation5], %s1420
      %v1422 = vld [vmem:[%s1421] sm:$0xff]
      %v1423 = vadd.f32 %v1419, %v1422
      %s1424 = scalar_lea.vmem [#allocation11], %s1420
      %1425 = vst [vmem:[%s1424] sm:$0xff] %v1423
      %p1426 = scmp.ge.s32.totalorder %s819, 0
      %p1427 = scmp.lt.s32.totalorder %s819, %s475
      %p1428 = pnand %p1426, %p1427
      %p1429 = pneg %p1428
      %s1430 = scalar_select %p1429, 1, 0
      %s1431 = scvt.s32.f32 %s1430
      %v1432 = vstv %s1431
      %v1433 = vmul.f32 %v1432, %v1419
      %s1434 = ssub.f32 1.0, %s1431
      %v1435 = vstv %s1434
      %v1436 = vmul.f32 %v1435, %v490
      %v1437 = vadd.f32 %v1433, %v1436
      %v1438 = vmul.f32 %v1432, %v1417
      %v1439 = vmul.f32 %v1435, %v492
      %v1440 = vadd.f32 %v1438, %v1439
    $region38: #{tpu_custom_call.1} parent=1 // loop_footer
      %s486 = sadd.s32 %s484, 1
    $region39: #{tpu_custom_call.1} parent=1 // loop_footer_branch
      %483 = sbr.rel target = $region35
    $region40: #{tpu_custom_call.1} parent=1 // loop_exit
      _
    %1441 = vst [vmem:[#allocation2] sm:$0xff] %v489
    %1442 = vst [vmem:[#allocation3] sm:$0xff] %v491
    %1443 = vst [vmem:[%s477] sm:$0xff] %v490
    %1444 = vst [vmem:[%s480] sm:$0xff] %v492
    // Predicated region
    $region41: #{tpu_custom_call.1} parent=1 // pred_check
      _
    $region42: #{tpu_custom_call.1} parent=1 // pred_check_branch
      %1446 = sbr.rel (0) target = $region44
    $region43: #{tpu_custom_call.1} parent=1 // pred_region
      %s1448 = ssub.s32 1024, 1024
      %1449 = vsyncadd [#allocation7], %s1448
      %s1450 = sshll.u32 [#allocation11], 4
      %s1451 = int_to_ptr.vmem [resolvable:$true] %s1450
      %1456 = dma.vmem_to_hbm [thread:$0]  %s1451, 1024, %s4, [#allocation7], 128, 128, 8
    $region44: #{tpu_custom_call.1} parent=1 // pred_fallthru
      _
    // Predicated region
    $region45: #{tpu_custom_call.1} parent=1 // pred_check
      _
    $region46: #{tpu_custom_call.1} parent=1 // pred_check_branch
      %1458 = sbr.rel (0) target = $region48
    $region47: #{tpu_custom_call.1} parent=1 // pred_region
      %1459 = dma.done [#allocation7], 1024
    $region48: #{tpu_custom_call.1} parent=1 // pred_fallthru
      _
    %1460 = vsyncpa [#allocation6], 1
    %1461 = vsyncpa [#allocation9], 1
    %1462 = vsyncpa [#allocation7], 1

</llo_original>
